<compile_context>
chip_gen: v7x
topology: tpu7x:2x2x1
jax: 0.10.0
libtpu: 0.0.40
codegen_flags: <defaults>
</compile_context>

<pallas_src>
import math
from functools import partial

import jax
import jax.numpy as jnp
from jax import lax
from jax.experimental import pallas as pl
from jax.experimental.pallas import tpu as pltpu

MATMUL_DTYPE = jnp.bfloat16          # MXU operand dtype (accumulation is f32)
NEG_INF = -1e30                      # softmax mask value for padded key rows


def _round_up(x, m):
    return ((x + m - 1) // m) * m


def _vmem_limit(nbytes):
    # Request only what is actually needed (callers add their own headroom);
    # never the whole chip.  Cap at 56 MiB so v7x (64 MiB physical VMEM) keeps
    # headroom for compiler-internal scratch; small floor for trivial kernels.
    return int(min(max(nbytes, 4 * 1024 * 1024), 56 * 1024 * 1024))


# ----------------------------------------------------------------------------
# Capability probe: single-buffering of grid-invariant inputs (pl.Buffered(1)).
# Their index_map is constant, so double-buffering only wastes VMEM (matters
# on v7x where ViT-B weights double-buffered would eat ~half the 64 MiB VMEM).
# ----------------------------------------------------------------------------
_BUFFERED1_OK = None


def _probe_kernel(x_ref, o_ref):
    o_ref[...] = x_ref[...] + 1.0


def _supports_buffered1():
    global _BUFFERED1_OK
    if _BUFFERED1_OK is None:
        try:
            spec = pl.BlockSpec((8, 128), lambda i: (0, 0),
                                pipeline_mode=pl.Buffered(1))
            fn = pl.pallas_call(
                _probe_kernel,
                out_shape=jax.ShapeDtypeStruct((16, 128), jnp.float32),
                grid=(2,),
                in_specs=[spec],
                out_specs=pl.BlockSpec((8, 128), lambda i: (i, 0)),
            )
            jax.block_until_ready(fn(jnp.zeros((8, 128), jnp.float32)))
            _BUFFERED1_OK = True
        except Exception:
            _BUFFERED1_OK = False
    return _BUFFERED1_OK


# ----------------------------------------------------------------------------
# In-kernel math helpers (f32)
# ----------------------------------------------------------------------------
def _erf(x):
    # Abramowitz & Stegun 7.1.26 rational approximation (|err| <= 1.5e-7).
    # The divide is routed to the EUP slot via pl.reciprocal(approx=True).
    a1, a2, a3, a4, a5 = 0.254829592, -0.284496736, 1.421413741, -1.453152027, 1.061405429
    pc = 0.3275911
    s = jnp.where(x >= 0.0, 1.0, -1.0)
    ax = jnp.abs(x)
    t = pl.reciprocal(1.0 + pc * ax, approx=True)
    poly = ((((a5 * t + a4) * t + a3) * t + a2) * t + a1) * t
    return s * (1.0 - poly * jnp.exp(-ax * ax))


def _gelu(x):
    # nn.GELU() exact (erf-based) formulation, kept in f32.
    return 0.5 * x * (1.0 + _erf(x * (1.0 / math.sqrt(2.0))))


def _layernorm(x, w, b, eps=1e-5):
    mu = jnp.mean(x, axis=-1, keepdims=True)
    var = jnp.mean((x - mu) ** 2, axis=-1, keepdims=True)
    return (x - mu) / jnp.sqrt(var + eps) * w + b


# ----------------------------------------------------------------------------
# Tiled linear:  y = x @ w + b     (used for the patch embedding)
# ----------------------------------------------------------------------------
def _linear_kernel(x_ref, w_ref, b_ref, o_ref):
    x = x_ref[...].astype(MATMUL_DTYPE)
    w = w_ref[...].astype(MATMUL_DTYPE)
    acc = jnp.dot(x, w, preferred_element_type=jnp.float32) + b_ref[...]
    o_ref[...] = acc.astype(o_ref.dtype)


def pallas_linear(x, w, b, *, tm_max=512):
    """x: (M, K) f32/bf16, w: (K, N) bf16, b: (N,) f32 -> (M, N) f32.

    Tiled & software-pipelined over M (and over N when N is large and
    512-aligned).  tm_max=512 keeps the v7x 64 MiB VMEM budget comfortable;
    on v5e/v6e (128 MiB) tm_max=1024 would amortize per-step overhead further.
    """
    M, K = x.shape
    _, N = w.shape

    tm = min(tm_max, _round_up(M, 8))
    Mp = _round_up(M, tm)
    if Mp != M:
        x = jnp.pad(x, ((0, Mp - M), (0, 0)))
    tn = 512 if (N > 512 and N % 512 == 0) else N

    # double-buffered in/out per pipeline step + ~50% headroom for temporaries
    step_bytes = 2 * (tm * K * x.dtype.itemsize + K * tn * w.dtype.itemsize
                      + tm * tn * 4 + tn * 4)
    ce = pl.CostEstimate(
        flops=int(2 * Mp * K * N), transcendentals=0,
        bytes_accessed=int(Mp * K * x.dtype.itemsize + K * N * w.dtype.itemsize
                           + Mp * N * 4 + N * 4))

    out = pl.pallas_call(
        _linear_kernel,
        out_shape=jax.ShapeDtypeStruct((Mp, N), jnp.float32),
        grid=(Mp // tm, N // tn),
        in_specs=[
            pl.BlockSpec((tm, K), lambda i, j: (i, 0)),
            pl.BlockSpec((K, tn), lambda i, j: (0, j)),
            pl.BlockSpec((1, tn), lambda i, j: (0, j)),
        ],
        out_specs=pl.BlockSpec((tm, tn), lambda i, j: (i, j)),
        compiler_params=pltpu.CompilerParams(
            dimension_semantics=("parallel", "parallel"),
            vmem_limit_bytes=_vmem_limit(step_bytes + step_bytes // 2)),
        cost_estimate=ce,
    )(x, w, b.reshape(1, N))
    return out[:M]


# ----------------------------------------------------------------------------
# Fused transformer encoder block
# ----------------------------------------------------------------------------
def _encoder_kernel(num_heads, n_valid, nb, TQ,
                    xf_ref,
                    ln1w_ref, ln1b_ref,
                    wq_ref, wk_ref, wv_ref, wproj_ref, bproj_ref,
                    ln2w_ref, ln2b_ref, w1_ref, b1_ref, w2_ref, b2_ref,
                    o_ref, kc_ref, vc_ref, attn_ref):
    Np, C = xf_ref.shape[1], xf_ref.shape[2]
    hd = C // num_heads
    qi = pl.program_id(1)

    ln1w, ln1b = ln1w_ref[...], ln1b_ref[...]

    # Keys beyond the true sequence length are masked out of the softmax.
    col = lax.broadcasted_iota(jnp.int32, (1, Np), 1)
    kmask = jnp.where(col < n_valid, 0.0, NEG_INF).astype(jnp.float32)

    # ---- K / V projections over the full batch-group sequence --------------
    # Computed once per batch group (qi == 0) and cached in bf16 VMEM scratch:
    # the query-tile axis (qi, "arbitrary") never recomputes them.  LN + the
    # matmuls run over the merged (nb*Np, C) rows for maximum MXU occupancy.
    @pl.when(qi == 0)
    def _():
        xall = xf_ref[...].reshape(nb * Np, C)
        hf = _layernorm(xall, ln1w, ln1b).astype(MATMUL_DTYPE)
        kc_ref[...] = jnp.dot(hf, wk_ref[...],
                              preferred_element_type=jnp.float32).astype(MATMUL_DTYPE)
        vc_ref[...] = jnp.dot(hf, wv_ref[...],
                              preferred_element_type=jnp.float32).astype(MATMUL_DTYPE)

    # ---- query tile: sliced from the already-resident full-sequence block --
    q_start = pl.multiple_of(qi * TQ, TQ)
    xq = xf_ref[:, pl.ds(q_start, TQ), :].reshape(nb * TQ, C)   # residual rows
    hq = _layernorm(xq, ln1w, ln1b).astype(MATMUL_DTYPE)
    # NOTE: the 1/sqrt(head_dim) attention scale is folded into W_q at init.
    q_all = jnp.dot(hq, wq_ref[...], preferred_element_type=jnp.float32)

    k_all = kc_ref[...]
    v_all = vc_ref[...]
    wproj = wproj_ref[...]

    # ---- per-batch, per-head attention (the inherently narrow matmuls) -----
    accs = []
    for b in range(nb):
        q_b = q_all[b * TQ:(b + 1) * TQ, :]
        k_b = k_all[b * Np:(b + 1) * Np, :]
        v_b = v_all[b * Np:(b + 1) * Np, :]
        acc = jnp.zeros((TQ, C), jnp.float32)
        for hi in range(num_heads):
            sl = slice(hi * hd, (hi + 1) * hd)
            q_h = q_b[:, sl].astype(MATMUL_DTYPE)
            # q @ k^T via dot_general (no explicit transpose relayout)
            s = lax.dot_general(q_h, k_b[:, sl], (((1,), (1,)), ((), ())),
                                preferred_element_type=jnp.float32)     # (TQ, Np)
            s = s + kmask
            s = s - jnp.max(s, axis=-1, keepdims=True)
            pr = jnp.exp(s)
            inv = pl.reciprocal(jnp.sum(pr, axis=-1, keepdims=True), approx=True)
            pr = (pr * inv).astype(MATMUL_DTYPE)
            pv = jnp.dot(pr, v_b[:, sl], preferred_element_type=jnp.float32)  # (TQ, hd)
            # per-head output-projection accumulation -> lane-dense C-wide
            # result; no hd-wide masked column stores.
            acc = acc + jnp.dot(pv.astype(MATMUL_DTYPE), wproj[sl, :],
                                preferred_element_type=jnp.float32)
        accs.append(acc)

    if nb == 1:
        attn = accs[0]
    else:
        # batch-merge staging buffer; full-row (lane-dense) writes only.
        for b in range(nb):
            attn_ref[b * TQ:(b + 1) * TQ, :] = accs[b]
        attn = attn_ref[...]

    x1 = xq + attn + bproj_ref[...]

    # ---- MLP branch over merged rows (GELU after BOTH fc1 and fc2) ---------
    h = _layernorm(x1, ln2w_ref[...], ln2b_ref[...]).astype(MATMUL_DTYPE)
    h = jnp.dot(h, w1_ref[...], preferred_element_type=jnp.float32) + b1_ref[...]
    h = _gelu(h)
    h = jnp.dot(h.astype(MATMUL_DTYPE), w2_ref[...],
                preferred_element_type=jnp.float32) + b2_ref[...]
    h = _gelu(h)

    o_ref[...] = (x1 + h).reshape(nb, TQ, C)


def encoder_block(x, p, num_heads, n_valid):
    """x: (B, Npad, C) f32 with zero-padded rows; n_valid = true sequence length."""
    B, Np, C = x.shape
    Hm = p["w1"].shape[1]

    # Step batching / query tiling:
    #  * small problems: every batch + the full sequence in ONE grid step
    #    (otherwise grid-launch / pipeline-prologue overhead dominates),
    #  * large problems: one batch per step, query rows tiled at 128 so both
    #    TensorCores get work and VMEM stays bounded.
    if B * Np <= 512:
        nb, TQ = B, Np
    else:
        nb, TQ = 1, (Np if Np <= 128 else 128)
    assert B % nb == 0 and Np % TQ == 0
    nq = Np // TQ
    grid = (B // nb, nq)

    single_buf_w = _supports_buffered1()
    wbuf = 1 if single_buf_w else 2

    # VMEM budget: weights (single/double buffered), double-buffered
    # activations, scratch caches, plus headroom for in-kernel temporaries.
    wbytes = sum(int(p[k].size) * p[k].dtype.itemsize
                 for k in ("w_q", "w_k", "w_v", "w_proj", "w1", "w2"))
    act_bytes = 2 * (nb * Np * C * 4) + 2 * (nb * TQ * C * 4)
    scratch_bytes = 2 * nb * Np * C * 2 + nb * TQ * C * 4
    tmp_bytes = 4 * nb * TQ * (Hm + Np + 6 * C)
    vmem = _vmem_limit(wbuf * wbytes + act_bytes + scratch_bytes + tmp_bytes
                       + (wbuf * wbytes + act_bytes) // 2 + (2 << 20))
    # TODO(synk): on v7x (64 MiB VMEM), split the fused block into separate
    # attention and MLP kernels for ViT-L-sized dims so the two weight sets
    # are never co-resident; the fused kernel stays preferable on v5e/v6e.

    flops = (B * 4 * Np * C * C                       # K, V projections (once / batch)
             + B * Np * (2 * C * C                    # Q projection
                         + 4 * Np * C                 # scores + p@v
                         + 2 * C * C                  # output projection
                         + 4 * C * Hm))               # MLP
    trans = B * Np * (num_heads * Np + 2 * (Hm + C))
    ce = pl.CostEstimate(flops=int(flops), transcendentals=int(trans),
                         bytes_accessed=int(2 * B * Np * C * 4 + wbytes))

    def rep(bg, qi):
        return (0, 0)

    def wspec(shape):
        # grid-invariant weights: single-buffer when the build supports it
        if single_buf_w:
            return pl.BlockSpec(shape, rep, pipeline_mode=pl.Buffered(1))
        return pl.BlockSpec(shape, rep)

    kernel = partial(_encoder_kernel, num_heads, n_valid, nb, TQ)
    return pl.pallas_call(
        kernel,
        out_shape=jax.ShapeDtypeStruct((B, Np, C), jnp.float32),
        grid=grid,
        in_specs=[
            pl.BlockSpec((nb, Np, C), lambda bg, qi: (bg, 0, 0)),  # x: full seq
            wspec((1, C)),            # ln1 weight
            wspec((1, C)),            # ln1 bias
            wspec((C, C)),            # W_q  (qkv columns [0:C])
            wspec((C, C)),            # W_k  (qkv columns [C:2C])
            wspec((C, C)),            # W_v  (qkv columns [2C:3C])
            wspec((C, C)),            # W_proj
            wspec((1, C)),            # b_proj
            wspec((1, C)),            # ln2 weight
            wspec((1, C)),            # ln2 bias
            wspec((C, Hm)),           # W_fc1
            wspec((1, Hm)),           # b_fc1
            wspec((Hm, C)),           # W_fc2
            wspec((1, C)),            # b_fc2
        ],
        out_specs=pl.BlockSpec((nb, TQ, C), lambda bg, qi: (bg, qi, 0)),
        scratch_shapes=[
            pltpu.VMEM((nb * Np, C), MATMUL_DTYPE),   # K cache (per batch group)
            pltpu.VMEM((nb * Np, C), MATMUL_DTYPE),   # V cache (per batch group)
            pltpu.VMEM((nb * TQ, C), jnp.float32),    # attn batch-merge buffer
        ],
        compiler_params=pltpu.CompilerParams(
            dimension_semantics=("parallel", "arbitrary"),
            vmem_limit_bytes=vmem),
        cost_estimate=ce,
    )(x,
      p["ln1_w"], p["ln1_b"],
      p["w_q"], p["w_k"], p["w_v"], p["w_proj"], p["b_proj"],
      p["ln2_w"], p["ln2_b"], p["w1"], p["b1"], p["w2"], p["b2"])


# ----------------------------------------------------------------------------
# Full ViT forward (glue in JAX, compute in Pallas)
# ----------------------------------------------------------------------------
def vit_forward(x, params, cfg):
    B, Cin, H, W = x.shape
    ps, D = cfg["patch_size"], cfg["dim"]
    gh, gw = H // ps, W // ps
    P = gh * gw
    N = P + 1

    # Patch embedding: stride-ps conv == (extract patches) @ W_patch + b_patch.
    # Cast to bf16 at materialization: the kernel casts anyway and the x stream
    # is the dominant HBM traffic of this matmul.
    patches = (
        x.reshape(B, Cin, gh, ps, gw, ps)
         .transpose(0, 2, 4, 1, 3, 5)                 # (B, gh, gw, Cin, ps, ps)
         .reshape(B * P, Cin * ps * ps)
         .astype(MATMUL_DTYPE)
    )
    emb = pallas_linear(patches, params["patch_w"], params["patch_b"]).reshape(B, P, D)

    # cls token appended at the END (exactly as the reference forward does);
    # pos embed is same-size so the interpolation path is never taken.
    cls = jnp.broadcast_to(params["cls_token"], (B, 1, D))
    xseq = jnp.concatenate([emb, cls], axis=1) + params["pos_embed"]   # (B, N, D)

    # Pad the sequence to an (8,128)-friendly length; padded rows are zeros and
    # are masked out of the attention softmax inside the encoder kernel.
    Npad = _round_up(N, 8) if N <= 128 else _round_up(N, 128)
    if Npad != N:
        xseq = jnp.pad(xseq, ((0, 0), (0, Npad - N), (0, 0)))

    for blk in params["blocks"]:
        xseq = encoder_block(xseq, blk, cfg["num_heads"], n_valid=N)

    pooled = xseq[:, 0]        # 'token' pooling reads x[:,0] (reference quirk)

    NC = params["head_w"].shape[1]
    if NC >= 128:
        logits = pallas_linear(pooled.astype(MATMUL_DTYPE),
                               params["head_w"], params["head_b"])
    else:
        # Tiny head: a pallas_call would be pure launch overhead plus masked
        # partial stores -- plain XLA is strictly better here.
        logits = (jnp.dot(pooled.astype(MATMUL_DTYPE), params["head_w"],
                          preferred_element_type=jnp.float32)
                  + params["head_b"])
    return logits


# ----------------------------------------------------------------------------
# Deterministic parameter init (shapes follow the module's __init__)
# ----------------------------------------------------------------------------
def trunc_normal(key, shape, std=0.02):
    return std * jax.random.truncated_normal(key, -2.0, 2.0, shape, jnp.float32)


def init_params(key, cfg):
    ps, Cin, D = cfg["patch_size"], cfg["in_channels"], cfg["dim"]
    P = (cfg["image_size"] // ps) ** 2
    Hm = int(cfg["dim"] * cfg["mlp_ratio"])
    NC = cfg["num_classes"]
    wdt = MATMUL_DTYPE    # matmul weights stored bf16 (halves weight DMA/VMEM)

    # attention scale folded into W_q once, at init time (not per call).
    qscale = float(D // cfg["num_heads"]) ** -0.5

    keys = iter(jax.random.split(key, 16 + 8 * cfg["depths"]))
    params = {
        # Conv2d proj stored as (Cin*ps*ps, D) matmul weight + bias.
        "patch_w": trunc_normal(next(keys), (Cin * ps * ps, D), std=0.05).astype(wdt),
        "patch_b": jnp.zeros((D,), jnp.float32),
        "cls_token": trunc_normal(next(keys), (1, 1, D)),
        "pos_embed": trunc_normal(next(keys), (1, P + 1, D)),
        "head_w": trunc_normal(next(keys), (D, NC)).astype(wdt),
        "head_b": jnp.zeros((NC,), jnp.float32),
        "blocks": [],
    }
    for _ in range(cfg["depths"]):
        params["blocks"].append({
            "ln1_w": jnp.ones((1, D), jnp.float32),
            "ln1_b": jnp.zeros((1, D), jnp.float32),
            # w_q / w_k / w_v are the columns [0:D], [D:2D], [2D:3D] of the
            # fused qkv Linear (qkv_bias=False); 1/sqrt(head_dim) folded in w_q.
            "w_q": (trunc_normal(next(keys), (D, D)) * qscale).astype(wdt),
            "w_k": trunc_normal(next(keys), (D, D)).astype(wdt),
            "w_v": trunc_normal(next(keys), (D, D)).astype(wdt),
            "w_proj": trunc_normal(next(keys), (D, D)).astype(wdt),
            "b_proj": jnp.zeros((1, D), jnp.float32),
            "ln2_w": jnp.ones((1, D), jnp.float32),
            "ln2_b": jnp.zeros((1, D), jnp.float32),
            "w1": trunc_normal(next(keys), (D, Hm)).astype(wdt),
            "b1": jnp.zeros((1, Hm), jnp.float32),
            "w2": trunc_normal(next(keys), (Hm, D)).astype(wdt),
            "b2": jnp.zeros((1, D), jnp.float32),
        })
    return params


# ----------------------------------------------------------------------------
if __name__ == "__main__":
    cfg = dict(
        image_size=16,
        patch_size=8,
        in_channels=4,
        depths=2,
        num_heads=4,
        mlp_ratio=4,
        dim=32,
        num_classes=16,
    )

    key = jax.random.PRNGKey(0)
    k_param, k_x = jax.random.split(key)
    params = init_params(k_param, cfg)

    B = 2
    x = jax.random.normal(
        k_x, (B, cfg["in_channels"], cfg["image_size"], cfg["image_size"]),
        dtype=jnp.float32)

    _supports_buffered1()   # prime the capability probe outside of jit tracing

    fwd = jax.jit(lambda inp, prm: vit_forward(inp, prm, cfg))
    logits = jax.block_until_ready(fwd(x, params))
    assert logits.shape == (B, cfg["num_classes"])
    assert bool(jnp.all(jnp.isfinite(logits)))
    print("KERNEL_OK")
</pallas_src>

<mosaic_0001>
module attributes {stable_mosaic.version = 11 : i64} {
  func.func @_probe_kernel(%arg0: i32, %arg1: memref<8x128xf32, #tpu.memory_space<vmem>>, %arg2: memref<8x128xf32, #tpu.memory_space<vmem>>) attributes {dimension_semantics = [#tpu.dimension_semantics<arbitrary>], iteration_bounds = array<i64: 2>, scalar_prefetch = 0 : i64, scratch_operands = 0 : i64, tpu.core_type = #tpu.core_type<tc>, window_params = [{pipeline_mode = #tpu.pipeline_mode<synchronous>, transform_indices = @transform_0, window_bounds = array<i64: 8, 128>}, {transform_indices = @transform_1, window_bounds = array<i64: 8, 128>}]} {
    %c0 = arith.constant 0 : index
    %c0_0 = arith.constant 0 : index
    %0 = vector.load %arg1[%c0, %c0_0] : memref<8x128xf32, #tpu.memory_space<vmem>>, vector<8x128xf32>
    %cst = arith.constant 1.000000e+00 : f32
    %1 = vector.broadcast %cst : f32 to vector<8x128xf32>
    %2 = arith.addf %0, %1 : vector<8x128xf32>
    %c0_1 = arith.constant 0 : index
    %c0_2 = arith.constant 0 : index
    %3 = vector.load %arg2[%c0_1, %c0_2] : memref<8x128xf32, #tpu.memory_space<vmem>>, vector<8x128xf32>
    tpu.vector_store %arg2[%c0_1, %c0_2], %2 {strides = array<i32>} : memref<8x128xf32, #tpu.memory_space<vmem>>, vector<8x128xf32>,
    return
  }
  func.func @transform_0(%arg0: i32) -> (i32, i32) {
    %c0_i32 = arith.constant 0 : i32
    %c0_i32_0 = arith.constant 0 : i32
    %c0_i32_1 = arith.constant 0 : i32
    return %c0_i32, %c0_i32_0 : i32, i32
  }
  func.func @transform_1(%arg0: i32) -> (i32, i32) {
    %c0_i32 = arith.constant 0 : i32
    %c0_i32_0 = arith.constant 0 : i32
    return %arg0, %c0_i32 : i32, i32
  }
}

module attributes {stable_mosaic.version = 11 : i64} {
  func.func @_linear_kernel(%arg0: i32, %arg1: i32, %arg2: memref<8x256xbf16, #tpu.memory_space<vmem>>, %arg3: memref<256x32xbf16, #tpu.memory_space<vmem>>, %arg4: memref<1x32xf32, #tpu.memory_space<vmem>>, %arg5: memref<8x32xf32, #tpu.memory_space<vmem>>) attributes {dimension_semantics = [#tpu.dimension_semantics<parallel>, #tpu.dimension_semantics<parallel>], iteration_bounds = array<i64: 1, 1>, scalar_prefetch = 0 : i64, scratch_operands = 0 : i64, tpu.core_type = #tpu.core_type<tc>, window_params = [{transform_indices = @transform_0, window_bounds = array<i64: 8, 256>}, {transform_indices = @transform_1, window_bounds = array<i64: 256, 32>}, {transform_indices = @transform_2, window_bounds = array<i64: 1, 32>}, {transform_indices = @transform_3, window_bounds = array<i64: 8, 32>}]} {
    %c0 = arith.constant 0 : index
    %c0_0 = arith.constant 0 : index
    %0 = vector.load %arg2[%c0, %c0_0] : memref<8x256xbf16, #tpu.memory_space<vmem>>, vector<8x256xbf16>
    %c0_1 = arith.constant 0 : index
    %c0_2 = arith.constant 0 : index
    %1 = vector.load %arg3[%c0_1, %c0_2] : memref<256x32xbf16, #tpu.memory_space<vmem>>, vector<256x32xbf16>
    %cst = arith.constant dense<0.000000e+00> : vector<8x32xf32>
    %2 = tpu.matmul %0, %1, %cst {dimension_numbers = #tpu.dot_dimension_numbers<[1], [0], [0], [1], [0, 0, 1, 1], [], []>} : vector<8x256xbf16>, vector<256x32xbf16>, vector<8x32xf32> -> vector<8x32xf32>
    %c0_3 = arith.constant 0 : index
    %c0_4 = arith.constant 0 : index
    %3 = vector.load %arg4[%c0_3, %c0_4] : memref<1x32xf32, #tpu.memory_space<vmem>>, vector<1x32xf32>
    %4 = vector.broadcast %3 : vector<1x32xf32> to vector<8x32xf32>
    %5 = arith.addf %2, %4 : vector<8x32xf32>
    %c0_5 = arith.constant 0 : index
    %c0_6 = arith.constant 0 : index
    %6 = vector.load %arg5[%c0_5, %c0_6] : memref<8x32xf32, #tpu.memory_space<vmem>>, vector<8x32xf32>
    tpu.vector_store %arg5[%c0_5, %c0_6], %5 {strides = array<i32>} : memref<8x32xf32, #tpu.memory_space<vmem>>, vector<8x32xf32>,
    return
  }
  func.func @transform_0(%arg0: i32, %arg1: i32) -> (i32, i32) {
    %c0_i32 = arith.constant 0 : i32
    %c0_i32_0 = arith.constant 0 : i32
    return %arg0, %c0_i32 : i32, i32
  }
  func.func @transform_1(%arg0: i32, %arg1: i32) -> (i32, i32) {
    %c0_i32 = arith.constant 0 : i32
    %c0_i32_0 = arith.constant 0 : i32
    return %c0_i32, %arg1 : i32, i32
  }
  func.func @transform_2(%arg0: i32, %arg1: i32) -> (i32, i32) {
    %c0_i32 = arith.constant 0 : i32
    %c0_i32_0 = arith.constant 0 : i32
    return %c0_i32, %arg1 : i32, i32
  }
  func.func @transform_3(%arg0: i32, %arg1: i32) -> (i32, i32) {
    %c0_i32 = arith.constant 0 : i32
    return %arg0, %arg1 : i32, i32
  }
}

module attributes {stable_mosaic.version = 11 : i64} {
  func.func @_encoder_kernel(%arg0: i32, %arg1: i32, %arg2: memref<2x8x32xf32, #tpu.memory_space<vmem>>, %arg3: memref<1x32xf32, #tpu.memory_space<vmem>>, %arg4: memref<1x32xf32, #tpu.memory_space<vmem>>, %arg5: memref<32x32xbf16, #tpu.memory_space<vmem>>, %arg6: memref<32x32xbf16, #tpu.memory_space<vmem>>, %arg7: memref<32x32xbf16, #tpu.memory_space<vmem>>, %arg8: memref<32x32xbf16, #tpu.memory_space<vmem>>, %arg9: memref<1x32xf32, #tpu.memory_space<vmem>>, %arg10: memref<1x32xf32, #tpu.memory_space<vmem>>, %arg11: memref<1x32xf32, #tpu.memory_space<vmem>>, %arg12: memref<32x128xbf16, #tpu.memory_space<vmem>>, %arg13: memref<1x128xf32, #tpu.memory_space<vmem>>, %arg14: memref<128x32xbf16, #tpu.memory_space<vmem>>, %arg15: memref<1x32xf32, #tpu.memory_space<vmem>>, %arg16: memref<2x8x32xf32, #tpu.memory_space<vmem>>, %arg17: memref<16x32xbf16, #tpu.memory_space<vmem>>, %arg18: memref<16x32xbf16, #tpu.memory_space<vmem>>, %arg19: memref<16x32xf32, #tpu.memory_space<vmem>>) attributes {dimension_semantics = [#tpu.dimension_semantics<parallel>, #tpu.dimension_semantics<arbitrary>], iteration_bounds = array<i64: 1, 1>, scalar_prefetch = 0 : i64, scratch_operands = 3 : i64, tpu.core_type = #tpu.core_type<tc>, window_params = [{transform_indices = @transform_0, window_bounds = array<i64: 2, 8, 32>}, {pipeline_mode = #tpu.pipeline_mode<synchronous>, transform_indices = @transform_1, window_bounds = array<i64: 1, 32>}, {pipeline_mode = #tpu.pipeline_mode<synchronous>, transform_indices = @transform_2, window_bounds = array<i64: 1, 32>}, {pipeline_mode = #tpu.pipeline_mode<synchronous>, transform_indices = @transform_3, window_bounds = array<i64: 32, 32>}, {pipeline_mode = #tpu.pipeline_mode<synchronous>, transform_indices = @transform_4, window_bounds = array<i64: 32, 32>}, {pipeline_mode = #tpu.pipeline_mode<synchronous>, transform_indices = @transform_5, window_bounds = array<i64: 32, 32>}, {pipeline_mode = #tpu.pipeline_mode<synchronous>, transform_indices = @transform_6, window_bounds = array<i64: 32, 32>}, {pipeline_mode = #tpu.pipeline_mode<synchronous>, transform_indices = @transform_7, window_bounds = array<i64: 1, 32>}, {pipeline_mode = #tpu.pipeline_mode<synchronous>, transform_indices = @transform_8, window_bounds = array<i64: 1, 32>}, {pipeline_mode = #tpu.pipeline_mode<synchronous>, transform_indices = @transform_9, window_bounds = array<i64: 1, 32>}, {pipeline_mode = #tpu.pipeline_mode<synchronous>, transform_indices = @transform_10, window_bounds = array<i64: 32, 128>}, {pipeline_mode = #tpu.pipeline_mode<synchronous>, transform_indices = @transform_11, window_bounds = array<i64: 1, 128>}, {pipeline_mode = #tpu.pipeline_mode<synchronous>, transform_indices = @transform_12, window_bounds = array<i64: 128, 32>}, {pipeline_mode = #tpu.pipeline_mode<synchronous>, transform_indices = @transform_13, window_bounds = array<i64: 1, 32>}, {transform_indices = @transform_14, window_bounds = array<i64: 2, 8, 32>}]} {
    %c0 = arith.constant 0 : index
    %c0_0 = arith.constant 0 : index
    %0 = vector.load %arg3[%c0, %c0_0] : memref<1x32xf32, #tpu.memory_space<vmem>>, vector<1x32xf32>
    %c0_1 = arith.constant 0 : index
    %c0_2 = arith.constant 0 : index
    %1 = vector.load %arg4[%c0_1, %c0_2] : memref<1x32xf32, #tpu.memory_space<vmem>>, vector<1x32xf32>
    %2 = tpu.iota {dimensions = array<i32: 1>} : vector<1x8xi32>
    %c5_i32 = arith.constant 5 : i32
    %3 = vector.broadcast %c5_i32 : i32 to vector<1x8xi32>
    %4 = arith.cmpi slt, %2, %3 : vector<1x8xi32>
    %cst = arith.constant 0.000000e+00 : f32
    %cst_3 = arith.constant -1.000000e+30 : f32
    %5 = vector.broadcast %cst : f32 to vector<1x8xf32>
    %6 = vector.broadcast %cst_3 : f32 to vector<1x8xf32>
    %7 = arith.select %4, %5, %6 : vector<1x8xi1>, vector<1x8xf32>
    %c0_i32 = arith.constant 0 : i32
    %8 = arith.cmpi eq, %arg1, %c0_i32 : i32
    %9 = arith.extui %8 : i1 to i32
    %c0_i32_4 = arith.constant 0 : i32
    %10 = arith.cmpi ne, %9, %c0_i32_4 : i32
    scf.if %10 {
      %c0_122 = arith.constant 0 : index
      %c0_123 = arith.constant 0 : index
      %c0_124 = arith.constant 0 : index
      %362 = vector.load %arg2[%c0_122, %c0_123, %c0_124] : memref<2x8x32xf32, #tpu.memory_space<vmem>>, vector<2x8x32xf32>
      %363 = vector.shape_cast %362 : vector<2x8x32xf32> to vector<16x32xf32>
      %cst_125 = arith.constant dense<0.000000e+00> : vector<16xf32>
      %364 = vector.multi_reduction <add>, %363, %cst_125 [1] : vector<16x32xf32> to vector<16xf32>
      %365 = vector.shape_cast %364 : vector<16xf32> to vector<16x1xf32>
      %cst_126 = arith.constant 3.200000e+01 : f32
      %366 = vector.broadcast %cst_126 : f32 to vector<16x1xf32>
      %367 = arith.divf %365, %366 : vector<16x1xf32>
      %368 = vector.broadcast %367 : vector<16x1xf32> to vector<16x32xf32>
      %369 = arith.subf %363, %368 : vector<16x32xf32>
      %370 = arith.mulf %369, %369 : vector<16x32xf32>
      %cst_127 = arith.constant dense<0.000000e+00> : vector<16xf32>
      %371 = vector.multi_reduction <add>, %370, %cst_127 [1] : vector<16x32xf32> to vector<16xf32>
      %372 = vector.shape_cast %371 : vector<16xf32> to vector<16x1xf32>
      %cst_128 = arith.constant 3.200000e+01 : f32
      %373 = vector.broadcast %cst_128 : f32 to vector<16x1xf32>
      %374 = arith.divf %372, %373 : vector<16x1xf32>
      %375 = vector.broadcast %367 : vector<16x1xf32> to vector<16x32xf32>
      %376 = arith.subf %363, %375 : vector<16x32xf32>
      %cst_129 = arith.constant 9.99999974E-6 : f32
      %377 = vector.broadcast %cst_129 : f32 to vector<16x1xf32>
      %378 = arith.addf %374, %377 : vector<16x1xf32>
      %379 = math.sqrt %378 : vector<16x1xf32>
      %380 = vector.broadcast %379 : vector<16x1xf32> to vector<16x32xf32>
      %381 = arith.divf %376, %380 : vector<16x32xf32>
      %382 = vector.broadcast %0 : vector<1x32xf32> to vector<16x32xf32>
      %383 = arith.mulf %381, %382 : vector<16x32xf32>
      %384 = vector.broadcast %1 : vector<1x32xf32> to vector<16x32xf32>
      %385 = arith.addf %383, %384 : vector<16x32xf32>
      %386 = arith.truncf %385 : vector<16x32xf32> to vector<16x32xbf16>
      %c0_130 = arith.constant 0 : index
      %c0_131 = arith.constant 0 : index
      %387 = vector.load %arg6[%c0_130, %c0_131] : memref<32x32xbf16, #tpu.memory_space<vmem>>, vector<32x32xbf16>
      %cst_132 = arith.constant dense<0.000000e+00> : vector<16x32xf32>
      %388 = tpu.matmul %386, %387, %cst_132 {dimension_numbers = #tpu.dot_dimension_numbers<[1], [0], [0], [1], [0, 0, 1, 1], [], []>} : vector<16x32xbf16>, vector<32x32xbf16>, vector<16x32xf32> -> vector<16x32xf32>
      %389 = arith.truncf %388 : vector<16x32xf32> to vector<16x32xbf16>
      %c0_133 = arith.constant 0 : index
      %c0_134 = arith.constant 0 : index
      %390 = vector.load %arg17[%c0_133, %c0_134] : memref<16x32xbf16, #tpu.memory_space<vmem>>, vector<16x32xbf16>
      tpu.vector_store %arg17[%c0_133, %c0_134], %389 {strides = array<i32>} : memref<16x32xbf16, #tpu.memory_space<vmem>>, vector<16x32xbf16>,
      %c0_135 = arith.constant 0 : index
      %c0_136 = arith.constant 0 : index
      %391 = vector.load %arg7[%c0_135, %c0_136] : memref<32x32xbf16, #tpu.memory_space<vmem>>, vector<32x32xbf16>
      %cst_137 = arith.constant dense<0.000000e+00> : vector<16x32xf32>
      %392 = tpu.matmul %386, %391, %cst_137 {dimension_numbers = #tpu.dot_dimension_numbers<[1], [0], [0], [1], [0, 0, 1, 1], [], []>} : vector<16x32xbf16>, vector<32x32xbf16>, vector<16x32xf32> -> vector<16x32xf32>
      %393 = arith.truncf %392 : vector<16x32xf32> to vector<16x32xbf16>
      %c0_138 = arith.constant 0 : index
      %c0_139 = arith.constant 0 : index
      %394 = vector.load %arg18[%c0_138, %c0_139] : memref<16x32xbf16, #tpu.memory_space<vmem>>, vector<16x32xbf16>
      tpu.vector_store %arg18[%c0_138, %c0_139], %393 {strides = array<i32>} : memref<16x32xbf16, #tpu.memory_space<vmem>>, vector<16x32xbf16>,
    } else {
    }
    %c8_i32 = arith.constant 8 : i32
    %11 = arith.muli %arg1, %c8_i32 : i32
    %12 = tpu.assume_multiple %11, 8 : i32
    %c0_5 = arith.constant 0 : index
    %13 = arith.index_cast %12 : i32 to index
    %c0_6 = arith.constant 0 : index
    %14 = vector.load %arg2[%c0_5, %13, %c0_6] : memref<2x8x32xf32, #tpu.memory_space<vmem>>, vector<2x8x32xf32>
    %15 = vector.shape_cast %14 : vector<2x8x32xf32> to vector<16x32xf32>
    %cst_7 = arith.constant dense<0.000000e+00> : vector<16xf32>
    %16 = vector.multi_reduction <add>, %15, %cst_7 [1] : vector<16x32xf32> to vector<16xf32>
    %17 = vector.shape_cast %16 : vector<16xf32> to vector<16x1xf32>
    %cst_8 = arith.constant 3.200000e+01 : f32
    %18 = vector.broadcast %cst_8 : f32 to vector<16x1xf32>
    %19 = arith.divf %17, %18 : vector<16x1xf32>
    %20 = vector.broadcast %19 : vector<16x1xf32> to vector<16x32xf32>
    %21 = arith.subf %15, %20 : vector<16x32xf32>
    %22 = arith.mulf %21, %21 : vector<16x32xf32>
    %cst_9 = arith.constant dense<0.000000e+00> : vector<16xf32>
    %23 = vector.multi_reduction <add>, %22, %cst_9 [1] : vector<16x32xf32> to vector<16xf32>
    %24 = vector.shape_cast %23 : vector<16xf32> to vector<16x1xf32>
    %cst_10 = arith.constant 3.200000e+01 : f32
    %25 = vector.broadcast %cst_10 : f32 to vector<16x1xf32>
    %26 = arith.divf %24, %25 : vector<16x1xf32>
    %27 = vector.broadcast %19 : vector<16x1xf32> to vector<16x32xf32>
    %28 = arith.subf %15, %27 : vector<16x32xf32>
    %cst_11 = arith.constant 9.99999974E-6 : f32
    %29 = vector.broadcast %cst_11 : f32 to vector<16x1xf32>
    %30 = arith.addf %26, %29 : vector<16x1xf32>
    %31 = math.sqrt %30 : vector<16x1xf32>
    %32 = vector.broadcast %31 : vector<16x1xf32> to vector<16x32xf32>
    %33 = arith.divf %28, %32 : vector<16x32xf32>
    %34 = vector.broadcast %0 : vector<1x32xf32> to vector<16x32xf32>
    %35 = arith.mulf %33, %34 : vector<16x32xf32>
    %36 = vector.broadcast %1 : vector<1x32xf32> to vector<16x32xf32>
    %37 = arith.addf %35, %36 : vector<16x32xf32>
    %38 = arith.truncf %37 : vector<16x32xf32> to vector<16x32xbf16>
    %c0_12 = arith.constant 0 : index
    %c0_13 = arith.constant 0 : index
    %39 = vector.load %arg5[%c0_12, %c0_13] : memref<32x32xbf16, #tpu.memory_space<vmem>>, vector<32x32xbf16>
    %cst_14 = arith.constant dense<0.000000e+00> : vector<16x32xf32>
    %40 = tpu.matmul %38, %39, %cst_14 {dimension_numbers = #tpu.dot_dimension_numbers<[1], [0], [0], [1], [0, 0, 1, 1], [], []>} : vector<16x32xbf16>, vector<32x32xbf16>, vector<16x32xf32> -> vector<16x32xf32>
    %c0_15 = arith.constant 0 : index
    %c0_16 = arith.constant 0 : index
    %41 = vector.load %arg17[%c0_15, %c0_16] : memref<16x32xbf16, #tpu.memory_space<vmem>>, vector<16x32xbf16>
    %c0_17 = arith.constant 0 : index
    %c0_18 = arith.constant 0 : index
    %42 = vector.load %arg18[%c0_17, %c0_18] : memref<16x32xbf16, #tpu.memory_space<vmem>>, vector<16x32xbf16>
    %c0_19 = arith.constant 0 : index
    %c0_20 = arith.constant 0 : index
    %43 = vector.load %arg8[%c0_19, %c0_20] : memref<32x32xbf16, #tpu.memory_space<vmem>>, vector<32x32xbf16>
    %44 = vector.extract_strided_slice %40 {offsets = [0, 0], sizes = [8, 32], strides = [1, 1]} : vector<16x32xf32> to vector<8x32xf32>
    %45 = vector.extract_strided_slice %41 {offsets = [0, 0], sizes = [8, 32], strides = [1, 1]} : vector<16x32xbf16> to vector<8x32xbf16>
    %46 = vector.extract_strided_slice %42 {offsets = [0, 0], sizes = [8, 32], strides = [1, 1]} : vector<16x32xbf16> to vector<8x32xbf16>
    %cst_21 = arith.constant 0.000000e+00 : f32
    %47 = vector.broadcast %cst_21 : f32 to vector<8x32xf32>
    %48 = vector.extract_strided_slice %44 {offsets = [0, 0], sizes = [8, 8], strides = [1, 1]} : vector<8x32xf32> to vector<8x8xf32>
    %49 = arith.truncf %48 : vector<8x8xf32> to vector<8x8xbf16>
    %50 = vector.extract_strided_slice %45 {offsets = [0, 0], sizes = [8, 8], strides = [1, 1]} : vector<8x32xbf16> to vector<8x8xbf16>
    %cst_22 = arith.constant dense<0.000000e+00> : vector<8x8xf32>
    %51 = tpu.matmul %49, %50, %cst_22 {dimension_numbers = #tpu.dot_dimension_numbers<[1], [1], [0], [0], [0, 0, 1, 0], [], []>} : vector<8x8xbf16>, vector<8x8xbf16>, vector<8x8xf32> -> vector<8x8xf32>
    %52 = vector.broadcast %7 : vector<1x8xf32> to vector<8x8xf32>
    %53 = arith.addf %51, %52 : vector<8x8xf32>
    %cst_23 = arith.constant dense<0xFF800000> : vector<8xf32>
    %54 = vector.multi_reduction <maximumf>, %53, %cst_23 [1] : vector<8x8xf32> to vector<8xf32>
    %55 = vector.shape_cast %54 : vector<8xf32> to vector<8x1xf32>
    %56 = vector.broadcast %55 : vector<8x1xf32> to vector<8x8xf32>
    %57 = arith.subf %53, %56 : vector<8x8xf32>
    %58 = math.exp %57 : vector<8x8xf32>
    %cst_24 = arith.constant dense<0.000000e+00> : vector<8xf32>
    %59 = vector.multi_reduction <add>, %58, %cst_24 [1] : vector<8x8xf32> to vector<8xf32>
    %60 = vector.shape_cast %59 : vector<8xf32> to vector<8x1xf32>
    %61 = tpu.reciprocal %60 {approx = true} : vector<8x1xf32> -> vector<8x1xf32>
    %62 = vector.broadcast %61 : vector<8x1xf32> to vector<8x8xf32>
    %63 = arith.mulf %58, %62 : vector<8x8xf32>
    %64 = arith.truncf %63 : vector<8x8xf32> to vector<8x8xbf16>
    %65 = vector.extract_strided_slice %46 {offsets = [0, 0], sizes = [8, 8], strides = [1, 1]} : vector<8x32xbf16> to vector<8x8xbf16>
    %cst_25 = arith.constant dense<0.000000e+00> : vector<8x8xf32>
    %66 = tpu.matmul %64, %65, %cst_25 {dimension_numbers = #tpu.dot_dimension_numbers<[1], [0], [0], [1], [0, 0, 1, 1], [], []>} : vector<8x8xbf16>, vector<8x8xbf16>, vector<8x8xf32> -> vector<8x8xf32>
    %67 = arith.truncf %66 : vector<8x8xf32> to vector<8x8xbf16>
    %68 = vector.extract_strided_slice %43 {offsets = [0, 0], sizes = [8, 32], strides = [1, 1]} : vector<32x32xbf16> to vector<8x32xbf16>
    %cst_26 = arith.constant dense<0.000000e+00> : vector<8x32xf32>
    %69 = tpu.matmul %67, %68, %cst_26 {dimension_numbers = #tpu.dot_dimension_numbers<[1], [0], [0], [1], [0, 0, 1, 1], [], []>} : vector<8x8xbf16>, vector<8x32xbf16>, vector<8x32xf32> -> vector<8x32xf32>
    %70 = arith.addf %47, %69 : vector<8x32xf32>
    %71 = vector.extract_strided_slice %44 {offsets = [0, 8], sizes = [8, 8], strides = [1, 1]} : vector<8x32xf32> to vector<8x8xf32>
    %72 = arith.truncf %71 : vector<8x8xf32> to vector<8x8xbf16>
    %73 = vector.extract_strided_slice %45 {offsets = [0, 8], sizes = [8, 8], strides = [1, 1]} : vector<8x32xbf16> to vector<8x8xbf16>
    %cst_27 = arith.constant dense<0.000000e+00> : vector<8x8xf32>
    %74 = tpu.matmul %72, %73, %cst_27 {dimension_numbers = #tpu.dot_dimension_numbers<[1], [1], [0], [0], [0, 0, 1, 0], [], []>} : vector<8x8xbf16>, vector<8x8xbf16>, vector<8x8xf32> -> vector<8x8xf32>
    %75 = vector.broadcast %7 : vector<1x8xf32> to vector<8x8xf32>
    %76 = arith.addf %74, %75 : vector<8x8xf32>
    %cst_28 = arith.constant dense<0xFF800000> : vector<8xf32>
    %77 = vector.multi_reduction <maximumf>, %76, %cst_28 [1] : vector<8x8xf32> to vector<8xf32>
    %78 = vector.shape_cast %77 : vector<8xf32> to vector<8x1xf32>
    %79 = vector.broadcast %78 : vector<8x1xf32> to vector<8x8xf32>
    %80 = arith.subf %76, %79 : vector<8x8xf32>
    %81 = math.exp %80 : vector<8x8xf32>
    %cst_29 = arith.constant dense<0.000000e+00> : vector<8xf32>
    %82 = vector.multi_reduction <add>, %81, %cst_29 [1] : vector<8x8xf32> to vector<8xf32>
    %83 = vector.shape_cast %82 : vector<8xf32> to vector<8x1xf32>
    %84 = tpu.reciprocal %83 {approx = true} : vector<8x1xf32> -> vector<8x1xf32>
    %85 = vector.broadcast %84 : vector<8x1xf32> to vector<8x8xf32>
    %86 = arith.mulf %81, %85 : vector<8x8xf32>
    %87 = arith.truncf %86 : vector<8x8xf32> to vector<8x8xbf16>
    %88 = vector.extract_strided_slice %46 {offsets = [0, 8], sizes = [8, 8], strides = [1, 1]} : vector<8x32xbf16> to vector<8x8xbf16>
    %cst_30 = arith.constant dense<0.000000e+00> : vector<8x8xf32>
    %89 = tpu.matmul %87, %88, %cst_30 {dimension_numbers = #tpu.dot_dimension_numbers<[1], [0], [0], [1], [0, 0, 1, 1], [], []>} : vector<8x8xbf16>, vector<8x8xbf16>, vector<8x8xf32> -> vector<8x8xf32>
    %90 = arith.truncf %89 : vector<8x8xf32> to vector<8x8xbf16>
    %91 = vector.extract_strided_slice %43 {offsets = [8, 0], sizes = [8, 32], strides = [1, 1]} : vector<32x32xbf16> to vector<8x32xbf16>
    %cst_31 = arith.constant dense<0.000000e+00> : vector<8x32xf32>
    %92 = tpu.matmul %90, %91, %cst_31 {dimension_numbers = #tpu.dot_dimension_numbers<[1], [0], [0], [1], [0, 0, 1, 1], [], []>} : vector<8x8xbf16>, vector<8x32xbf16>, vector<8x32xf32> -> vector<8x32xf32>
    %93 = arith.addf %70, %92 : vector<8x32xf32>
    %94 = vector.extract_strided_slice %44 {offsets = [0, 16], sizes = [8, 8], strides = [1, 1]} : vector<8x32xf32> to vector<8x8xf32>
    %95 = arith.truncf %94 : vector<8x8xf32> to vector<8x8xbf16>
    %96 = vector.extract_strided_slice %45 {offsets = [0, 16], sizes = [8, 8], strides = [1, 1]} : vector<8x32xbf16> to vector<8x8xbf16>
    %cst_32 = arith.constant dense<0.000000e+00> : vector<8x8xf32>
    %97 = tpu.matmul %95, %96, %cst_32 {dimension_numbers = #tpu.dot_dimension_numbers<[1], [1], [0], [0], [0, 0, 1, 0], [], []>} : vector<8x8xbf16>, vector<8x8xbf16>, vector<8x8xf32> -> vector<8x8xf32>
    %98 = vector.broadcast %7 : vector<1x8xf32> to vector<8x8xf32>
    %99 = arith.addf %97, %98 : vector<8x8xf32>
    %cst_33 = arith.constant dense<0xFF800000> : vector<8xf32>
    %100 = vector.multi_reduction <maximumf>, %99, %cst_33 [1] : vector<8x8xf32> to vector<8xf32>
    %101 = vector.shape_cast %100 : vector<8xf32> to vector<8x1xf32>
    %102 = vector.broadcast %101 : vector<8x1xf32> to vector<8x8xf32>
    %103 = arith.subf %99, %102 : vector<8x8xf32>
    %104 = math.exp %103 : vector<8x8xf32>
    %cst_34 = arith.constant dense<0.000000e+00> : vector<8xf32>
    %105 = vector.multi_reduction <add>, %104, %cst_34 [1] : vector<8x8xf32> to vector<8xf32>
    %106 = vector.shape_cast %105 : vector<8xf32> to vector<8x1xf32>
    %107 = tpu.reciprocal %106 {approx = true} : vector<8x1xf32> -> vector<8x1xf32>
    %108 = vector.broadcast %107 : vector<8x1xf32> to vector<8x8xf32>
    %109 = arith.mulf %104, %108 : vector<8x8xf32>
    %110 = arith.truncf %109 : vector<8x8xf32> to vector<8x8xbf16>
    %111 = vector.extract_strided_slice %46 {offsets = [0, 16], sizes = [8, 8], strides = [1, 1]} : vector<8x32xbf16> to vector<8x8xbf16>
    %cst_35 = arith.constant dense<0.000000e+00> : vector<8x8xf32>
    %112 = tpu.matmul %110, %111, %cst_35 {dimension_numbers = #tpu.dot_dimension_numbers<[1], [0], [0], [1], [0, 0, 1, 1], [], []>} : vector<8x8xbf16>, vector<8x8xbf16>, vector<8x8xf32> -> vector<8x8xf32>
    %113 = arith.truncf %112 : vector<8x8xf32> to vector<8x8xbf16>
    %114 = vector.extract_strided_slice %43 {offsets = [16, 0], sizes = [8, 32], strides = [1, 1]} : vector<32x32xbf16> to vector<8x32xbf16>
    %cst_36 = arith.constant dense<0.000000e+00> : vector<8x32xf32>
    %115 = tpu.matmul %113, %114, %cst_36 {dimension_numbers = #tpu.dot_dimension_numbers<[1], [0], [0], [1], [0, 0, 1, 1], [], []>} : vector<8x8xbf16>, vector<8x32xbf16>, vector<8x32xf32> -> vector<8x32xf32>
    %116 = arith.addf %93, %115 : vector<8x32xf32>
    %117 = vector.extract_strided_slice %44 {offsets = [0, 24], sizes = [8, 8], strides = [1, 1]} : vector<8x32xf32> to vector<8x8xf32>
    %118 = arith.truncf %117 : vector<8x8xf32> to vector<8x8xbf16>
    %119 = vector.extract_strided_slice %45 {offsets = [0, 24], sizes = [8, 8], strides = [1, 1]} : vector<8x32xbf16> to vector<8x8xbf16>
    %cst_37 = arith.constant dense<0.000000e+00> : vector<8x8xf32>
    %120 = tpu.matmul %118, %119, %cst_37 {dimension_numbers = #tpu.dot_dimension_numbers<[1], [1], [0], [0], [0, 0, 1, 0], [], []>} : vector<8x8xbf16>, vector<8x8xbf16>, vector<8x8xf32> -> vector<8x8xf32>
    %121 = vector.broadcast %7 : vector<1x8xf32> to vector<8x8xf32>
    %122 = arith.addf %120, %121 : vector<8x8xf32>
    %cst_38 = arith.constant dense<0xFF800000> : vector<8xf32>
    %123 = vector.multi_reduction <maximumf>, %122, %cst_38 [1] : vector<8x8xf32> to vector<8xf32>
    %124 = vector.shape_cast %123 : vector<8xf32> to vector<8x1xf32>
    %125 = vector.broadcast %124 : vector<8x1xf32> to vector<8x8xf32>
    %126 = arith.subf %122, %125 : vector<8x8xf32>
    %127 = math.exp %126 : vector<8x8xf32>
    %cst_39 = arith.constant dense<0.000000e+00> : vector<8xf32>
    %128 = vector.multi_reduction <add>, %127, %cst_39 [1] : vector<8x8xf32> to vector<8xf32>
    %129 = vector.shape_cast %128 : vector<8xf32> to vector<8x1xf32>
    %130 = tpu.reciprocal %129 {approx = true} : vector<8x1xf32> -> vector<8x1xf32>
    %131 = vector.broadcast %130 : vector<8x1xf32> to vector<8x8xf32>
    %132 = arith.mulf %127, %131 : vector<8x8xf32>
    %133 = arith.truncf %132 : vector<8x8xf32> to vector<8x8xbf16>
    %134 = vector.extract_strided_slice %46 {offsets = [0, 24], sizes = [8, 8], strides = [1, 1]} : vector<8x32xbf16> to vector<8x8xbf16>
    %cst_40 = arith.constant dense<0.000000e+00> : vector<8x8xf32>
    %135 = tpu.matmul %133, %134, %cst_40 {dimension_numbers = #tpu.dot_dimension_numbers<[1], [0], [0], [1], [0, 0, 1, 1], [], []>} : vector<8x8xbf16>, vector<8x8xbf16>, vector<8x8xf32> -> vector<8x8xf32>
    %136 = arith.truncf %135 : vector<8x8xf32> to vector<8x8xbf16>
    %137 = vector.extract_strided_slice %43 {offsets = [24, 0], sizes = [8, 32], strides = [1, 1]} : vector<32x32xbf16> to vector<8x32xbf16>
    %cst_41 = arith.constant dense<0.000000e+00> : vector<8x32xf32>
    %138 = tpu.matmul %136, %137, %cst_41 {dimension_numbers = #tpu.dot_dimension_numbers<[1], [0], [0], [1], [0, 0, 1, 1], [], []>} : vector<8x8xbf16>, vector<8x32xbf16>, vector<8x32xf32> -> vector<8x32xf32>
    %139 = arith.addf %116, %138 : vector<8x32xf32>
    %140 = vector.extract_strided_slice %40 {offsets = [8, 0], sizes = [8, 32], strides = [1, 1]} : vector<16x32xf32> to vector<8x32xf32>
    %141 = vector.extract_strided_slice %41 {offsets = [8, 0], sizes = [8, 32], strides = [1, 1]} : vector<16x32xbf16> to vector<8x32xbf16>
    %142 = vector.extract_strided_slice %42 {offsets = [8, 0], sizes = [8, 32], strides = [1, 1]} : vector<16x32xbf16> to vector<8x32xbf16>
    %cst_42 = arith.constant 0.000000e+00 : f32
    %143 = vector.broadcast %cst_42 : f32 to vector<8x32xf32>
    %144 = vector.extract_strided_slice %140 {offsets = [0, 0], sizes = [8, 8], strides = [1, 1]} : vector<8x32xf32> to vector<8x8xf32>
    %145 = arith.truncf %144 : vector<8x8xf32> to vector<8x8xbf16>
    %146 = vector.extract_strided_slice %141 {offsets = [0, 0], sizes = [8, 8], strides = [1, 1]} : vector<8x32xbf16> to vector<8x8xbf16>
    %cst_43 = arith.constant dense<0.000000e+00> : vector<8x8xf32>
    %147 = tpu.matmul %145, %146, %cst_43 {dimension_numbers = #tpu.dot_dimension_numbers<[1], [1], [0], [0], [0, 0, 1, 0], [], []>} : vector<8x8xbf16>, vector<8x8xbf16>, vector<8x8xf32> -> vector<8x8xf32>
    %148 = vector.broadcast %7 : vector<1x8xf32> to vector<8x8xf32>
    %149 = arith.addf %147, %148 : vector<8x8xf32>
    %cst_44 = arith.constant dense<0xFF800000> : vector<8xf32>
    %150 = vector.multi_reduction <maximumf>, %149, %cst_44 [1] : vector<8x8xf32> to vector<8xf32>
    %151 = vector.shape_cast %150 : vector<8xf32> to vector<8x1xf32>
    %152 = vector.broadcast %151 : vector<8x1xf32> to vector<8x8xf32>
    %153 = arith.subf %149, %152 : vector<8x8xf32>
    %154 = math.exp %153 : vector<8x8xf32>
    %cst_45 = arith.constant dense<0.000000e+00> : vector<8xf32>
    %155 = vector.multi_reduction <add>, %154, %cst_45 [1] : vector<8x8xf32> to vector<8xf32>
    %156 = vector.shape_cast %155 : vector<8xf32> to vector<8x1xf32>
    %157 = tpu.reciprocal %156 {approx = true} : vector<8x1xf32> -> vector<8x1xf32>
    %158 = vector.broadcast %157 : vector<8x1xf32> to vector<8x8xf32>
    %159 = arith.mulf %154, %158 : vector<8x8xf32>
    %160 = arith.truncf %159 : vector<8x8xf32> to vector<8x8xbf16>
    %161 = vector.extract_strided_slice %142 {offsets = [0, 0], sizes = [8, 8], strides = [1, 1]} : vector<8x32xbf16> to vector<8x8xbf16>
    %cst_46 = arith.constant dense<0.000000e+00> : vector<8x8xf32>
    %162 = tpu.matmul %160, %161, %cst_46 {dimension_numbers = #tpu.dot_dimension_numbers<[1], [0], [0], [1], [0, 0, 1, 1], [], []>} : vector<8x8xbf16>, vector<8x8xbf16>, vector<8x8xf32> -> vector<8x8xf32>
    %163 = arith.truncf %162 : vector<8x8xf32> to vector<8x8xbf16>
    %164 = vector.extract_strided_slice %43 {offsets = [0, 0], sizes = [8, 32], strides = [1, 1]} : vector<32x32xbf16> to vector<8x32xbf16>
    %cst_47 = arith.constant dense<0.000000e+00> : vector<8x32xf32>
    %165 = tpu.matmul %163, %164, %cst_47 {dimension_numbers = #tpu.dot_dimension_numbers<[1], [0], [0], [1], [0, 0, 1, 1], [], []>} : vector<8x8xbf16>, vector<8x32xbf16>, vector<8x32xf32> -> vector<8x32xf32>
    %166 = arith.addf %143, %165 : vector<8x32xf32>
    %167 = vector.extract_strided_slice %140 {offsets = [0, 8], sizes = [8, 8], strides = [1, 1]} : vector<8x32xf32> to vector<8x8xf32>
    %168 = arith.truncf %167 : vector<8x8xf32> to vector<8x8xbf16>
    %169 = vector.extract_strided_slice %141 {offsets = [0, 8], sizes = [8, 8], strides = [1, 1]} : vector<8x32xbf16> to vector<8x8xbf16>
    %cst_48 = arith.constant dense<0.000000e+00> : vector<8x8xf32>
    %170 = tpu.matmul %168, %169, %cst_48 {dimension_numbers = #tpu.dot_dimension_numbers<[1], [1], [0], [0], [0, 0, 1, 0], [], []>} : vector<8x8xbf16>, vector<8x8xbf16>, vector<8x8xf32> -> vector<8x8xf32>
    %171 = vector.broadcast %7 : vector<1x8xf32> to vector<8x8xf32>
    %172 = arith.addf %170, %171 : vector<8x8xf32>
    %cst_49 = arith.constant dense<0xFF800000> : vector<8xf32>
    %173 = vector.multi_reduction <maximumf>, %172, %cst_49 [1] : vector<8x8xf32> to vector<8xf32>
    %174 = vector.shape_cast %173 : vector<8xf32> to vector<8x1xf32>
    %175 = vector.broadcast %174 : vector<8x1xf32> to vector<8x8xf32>
    %176 = arith.subf %172, %175 : vector<8x8xf32>
    %177 = math.exp %176 : vector<8x8xf32>
    %cst_50 = arith.constant dense<0.000000e+00> : vector<8xf32>
    %178 = vector.multi_reduction <add>, %177, %cst_50 [1] : vector<8x8xf32> to vector<8xf32>
    %179 = vector.shape_cast %178 : vector<8xf32> to vector<8x1xf32>
    %180 = tpu.reciprocal %179 {approx = true} : vector<8x1xf32> -> vector<8x1xf32>
    %181 = vector.broadcast %180 : vector<8x1xf32> to vector<8x8xf32>
    %182 = arith.mulf %177, %181 : vector<8x8xf32>
    %183 = arith.truncf %182 : vector<8x8xf32> to vector<8x8xbf16>
    %184 = vector.extract_strided_slice %142 {offsets = [0, 8], sizes = [8, 8], strides = [1, 1]} : vector<8x32xbf16> to vector<8x8xbf16>
    %cst_51 = arith.constant dense<0.000000e+00> : vector<8x8xf32>
    %185 = tpu.matmul %183, %184, %cst_51 {dimension_numbers = #tpu.dot_dimension_numbers<[1], [0], [0], [1], [0, 0, 1, 1], [], []>} : vector<8x8xbf16>, vector<8x8xbf16>, vector<8x8xf32> -> vector<8x8xf32>
    %186 = arith.truncf %185 : vector<8x8xf32> to vector<8x8xbf16>
    %187 = vector.extract_strided_slice %43 {offsets = [8, 0], sizes = [8, 32], strides = [1, 1]} : vector<32x32xbf16> to vector<8x32xbf16>
    %cst_52 = arith.constant dense<0.000000e+00> : vector<8x32xf32>
    %188 = tpu.matmul %186, %187, %cst_52 {dimension_numbers = #tpu.dot_dimension_numbers<[1], [0], [0], [1], [0, 0, 1, 1], [], []>} : vector<8x8xbf16>, vector<8x32xbf16>, vector<8x32xf32> -> vector<8x32xf32>
    %189 = arith.addf %166, %188 : vector<8x32xf32>
    %190 = vector.extract_strided_slice %140 {offsets = [0, 16], sizes = [8, 8], strides = [1, 1]} : vector<8x32xf32> to vector<8x8xf32>
    %191 = arith.truncf %190 : vector<8x8xf32> to vector<8x8xbf16>
    %192 = vector.extract_strided_slice %141 {offsets = [0, 16], sizes = [8, 8], strides = [1, 1]} : vector<8x32xbf16> to vector<8x8xbf16>
    %cst_53 = arith.constant dense<0.000000e+00> : vector<8x8xf32>
    %193 = tpu.matmul %191, %192, %cst_53 {dimension_numbers = #tpu.dot_dimension_numbers<[1], [1], [0], [0], [0, 0, 1, 0], [], []>} : vector<8x8xbf16>, vector<8x8xbf16>, vector<8x8xf32> -> vector<8x8xf32>
    %194 = vector.broadcast %7 : vector<1x8xf32> to vector<8x8xf32>
    %195 = arith.addf %193, %194 : vector<8x8xf32>
    %cst_54 = arith.constant dense<0xFF800000> : vector<8xf32>
    %196 = vector.multi_reduction <maximumf>, %195, %cst_54 [1] : vector<8x8xf32> to vector<8xf32>
    %197 = vector.shape_cast %196 : vector<8xf32> to vector<8x1xf32>
    %198 = vector.broadcast %197 : vector<8x1xf32> to vector<8x8xf32>
    %199 = arith.subf %195, %198 : vector<8x8xf32>
    %200 = math.exp %199 : vector<8x8xf32>
    %cst_55 = arith.constant dense<0.000000e+00> : vector<8xf32>
    %201 = vector.multi_reduction <add>, %200, %cst_55 [1] : vector<8x8xf32> to vector<8xf32>
    %202 = vector.shape_cast %201 : vector<8xf32> to vector<8x1xf32>
    %203 = tpu.reciprocal %202 {approx = true} : vector<8x1xf32> -> vector<8x1xf32>
    %204 = vector.broadcast %203 : vector<8x1xf32> to vector<8x8xf32>
    %205 = arith.mulf %200, %204 : vector<8x8xf32>
    %206 = arith.truncf %205 : vector<8x8xf32> to vector<8x8xbf16>
    %207 = vector.extract_strided_slice %142 {offsets = [0, 16], sizes = [8, 8], strides = [1, 1]} : vector<8x32xbf16> to vector<8x8xbf16>
    %cst_56 = arith.constant dense<0.000000e+00> : vector<8x8xf32>
    %208 = tpu.matmul %206, %207, %cst_56 {dimension_numbers = #tpu.dot_dimension_numbers<[1], [0], [0], [1], [0, 0, 1, 1], [], []>} : vector<8x8xbf16>, vector<8x8xbf16>, vector<8x8xf32> -> vector<8x8xf32>
    %209 = arith.truncf %208 : vector<8x8xf32> to vector<8x8xbf16>
    %210 = vector.extract_strided_slice %43 {offsets = [16, 0], sizes = [8, 32], strides = [1, 1]} : vector<32x32xbf16> to vector<8x32xbf16>
    %cst_57 = arith.constant dense<0.000000e+00> : vector<8x32xf32>
    %211 = tpu.matmul %209, %210, %cst_57 {dimension_numbers = #tpu.dot_dimension_numbers<[1], [0], [0], [1], [0, 0, 1, 1], [], []>} : vector<8x8xbf16>, vector<8x32xbf16>, vector<8x32xf32> -> vector<8x32xf32>
    %212 = arith.addf %189, %211 : vector<8x32xf32>
    %213 = vector.extract_strided_slice %140 {offsets = [0, 24], sizes = [8, 8], strides = [1, 1]} : vector<8x32xf32> to vector<8x8xf32>
    %214 = arith.truncf %213 : vector<8x8xf32> to vector<8x8xbf16>
    %215 = vector.extract_strided_slice %141 {offsets = [0, 24], sizes = [8, 8], strides = [1, 1]} : vector<8x32xbf16> to vector<8x8xbf16>
    %cst_58 = arith.constant dense<0.000000e+00> : vector<8x8xf32>
    %216 = tpu.matmul %214, %215, %cst_58 {dimension_numbers = #tpu.dot_dimension_numbers<[1], [1], [0], [0], [0, 0, 1, 0], [], []>} : vector<8x8xbf16>, vector<8x8xbf16>, vector<8x8xf32> -> vector<8x8xf32>
    %217 = vector.broadcast %7 : vector<1x8xf32> to vector<8x8xf32>
    %218 = arith.addf %216, %217 : vector<8x8xf32>
    %cst_59 = arith.constant dense<0xFF800000> : vector<8xf32>
    %219 = vector.multi_reduction <maximumf>, %218, %cst_59 [1] : vector<8x8xf32> to vector<8xf32>
    %220 = vector.shape_cast %219 : vector<8xf32> to vector<8x1xf32>
    %221 = vector.broadcast %220 : vector<8x1xf32> to vector<8x8xf32>
    %222 = arith.subf %218, %221 : vector<8x8xf32>
    %223 = math.exp %222 : vector<8x8xf32>
    %cst_60 = arith.constant dense<0.000000e+00> : vector<8xf32>
    %224 = vector.multi_reduction <add>, %223, %cst_60 [1] : vector<8x8xf32> to vector<8xf32>
    %225 = vector.shape_cast %224 : vector<8xf32> to vector<8x1xf32>
    %226 = tpu.reciprocal %225 {approx = true} : vector<8x1xf32> -> vector<8x1xf32>
    %227 = vector.broadcast %226 : vector<8x1xf32> to vector<8x8xf32>
    %228 = arith.mulf %223, %227 : vector<8x8xf32>
    %229 = arith.truncf %228 : vector<8x8xf32> to vector<8x8xbf16>
    %230 = vector.extract_strided_slice %142 {offsets = [0, 24], sizes = [8, 8], strides = [1, 1]} : vector<8x32xbf16> to vector<8x8xbf16>
    %cst_61 = arith.constant dense<0.000000e+00> : vector<8x8xf32>
    %231 = tpu.matmul %229, %230, %cst_61 {dimension_numbers = #tpu.dot_dimension_numbers<[1], [0], [0], [1], [0, 0, 1, 1], [], []>} : vector<8x8xbf16>, vector<8x8xbf16>, vector<8x8xf32> -> vector<8x8xf32>
    %232 = arith.truncf %231 : vector<8x8xf32> to vector<8x8xbf16>
    %233 = vector.extract_strided_slice %43 {offsets = [24, 0], sizes = [8, 32], strides = [1, 1]} : vector<32x32xbf16> to vector<8x32xbf16>
    %cst_62 = arith.constant dense<0.000000e+00> : vector<8x32xf32>
    %234 = tpu.matmul %232, %233, %cst_62 {dimension_numbers = #tpu.dot_dimension_numbers<[1], [0], [0], [1], [0, 0, 1, 1], [], []>} : vector<8x8xbf16>, vector<8x32xbf16>, vector<8x32xf32> -> vector<8x32xf32>
    %235 = arith.addf %212, %234 : vector<8x32xf32>
    %c0_63 = arith.constant 0 : index
    %c0_64 = arith.constant 0 : index
    %236 = vector.load %arg19[%c0_63, %c0_64] : memref<16x32xf32, #tpu.memory_space<vmem>>, vector<8x32xf32>
    tpu.vector_store %arg19[%c0_63, %c0_64], %139 {strides = array<i32>} : memref<16x32xf32, #tpu.memory_space<vmem>>, vector<8x32xf32>,
    %c8 = arith.constant 8 : index
    %c0_65 = arith.constant 0 : index
    %237 = vector.load %arg19[%c8, %c0_65] : memref<16x32xf32, #tpu.memory_space<vmem>>, vector<8x32xf32>
    tpu.vector_store %arg19[%c8, %c0_65], %235 {strides = array<i32>} : memref<16x32xf32, #tpu.memory_space<vmem>>, vector<8x32xf32>,
    %c0_66 = arith.constant 0 : index
    %c0_67 = arith.constant 0 : index
    %238 = vector.load %arg19[%c0_66, %c0_67] : memref<16x32xf32, #tpu.memory_space<vmem>>, vector<16x32xf32>
    %239 = arith.addf %15, %238 : vector<16x32xf32>
    %c0_68 = arith.constant 0 : index
    %c0_69 = arith.constant 0 : index
    %240 = vector.load %arg9[%c0_68, %c0_69] : memref<1x32xf32, #tpu.memory_space<vmem>>, vector<1x32xf32>
    %241 = vector.broadcast %240 : vector<1x32xf32> to vector<16x32xf32>
    %242 = arith.addf %239, %241 : vector<16x32xf32>
    %c0_70 = arith.constant 0 : index
    %c0_71 = arith.constant 0 : index
    %243 = vector.load %arg10[%c0_70, %c0_71] : memref<1x32xf32, #tpu.memory_space<vmem>>, vector<1x32xf32>
    %c0_72 = arith.constant 0 : index
    %c0_73 = arith.constant 0 : index
    %244 = vector.load %arg11[%c0_72, %c0_73] : memref<1x32xf32, #tpu.memory_space<vmem>>, vector<1x32xf32>
    %cst_74 = arith.constant dense<0.000000e+00> : vector<16xf32>
    %245 = vector.multi_reduction <add>, %242, %cst_74 [1] : vector<16x32xf32> to vector<16xf32>
    %246 = vector.shape_cast %245 : vector<16xf32> to vector<16x1xf32>
    %cst_75 = arith.constant 3.200000e+01 : f32
    %247 = vector.broadcast %cst_75 : f32 to vector<16x1xf32>
    %248 = arith.divf %246, %247 : vector<16x1xf32>
    %249 = vector.broadcast %248 : vector<16x1xf32> to vector<16x32xf32>
    %250 = arith.subf %242, %249 : vector<16x32xf32>
    %251 = arith.mulf %250, %250 : vector<16x32xf32>
    %cst_76 = arith.constant dense<0.000000e+00> : vector<16xf32>
    %252 = vector.multi_reduction <add>, %251, %cst_76 [1] : vector<16x32xf32> to vector<16xf32>
    %253 = vector.shape_cast %252 : vector<16xf32> to vector<16x1xf32>
    %cst_77 = arith.constant 3.200000e+01 : f32
    %254 = vector.broadcast %cst_77 : f32 to vector<16x1xf32>
    %255 = arith.divf %253, %254 : vector<16x1xf32>
    %256 = vector.broadcast %248 : vector<16x1xf32> to vector<16x32xf32>
    %257 = arith.subf %242, %256 : vector<16x32xf32>
    %cst_78 = arith.constant 9.99999974E-6 : f32
    %258 = vector.broadcast %cst_78 : f32 to vector<16x1xf32>
    %259 = arith.addf %255, %258 : vector<16x1xf32>
    %260 = math.sqrt %259 : vector<16x1xf32>
    %261 = vector.broadcast %260 : vector<16x1xf32> to vector<16x32xf32>
    %262 = arith.divf %257, %261 : vector<16x32xf32>
    %263 = vector.broadcast %243 : vector<1x32xf32> to vector<16x32xf32>
    %264 = arith.mulf %262, %263 : vector<16x32xf32>
    %265 = vector.broadcast %244 : vector<1x32xf32> to vector<16x32xf32>
    %266 = arith.addf %264, %265 : vector<16x32xf32>
    %267 = arith.truncf %266 : vector<16x32xf32> to vector<16x32xbf16>
    %c0_79 = arith.constant 0 : index
    %c0_80 = arith.constant 0 : index
    %268 = vector.load %arg12[%c0_79, %c0_80] : memref<32x128xbf16, #tpu.memory_space<vmem>>, vector<32x128xbf16>
    %cst_81 = arith.constant dense<0.000000e+00> : vector<16x128xf32>
    %269 = tpu.matmul %267, %268, %cst_81 {dimension_numbers = #tpu.dot_dimension_numbers<[1], [0], [0], [1], [0, 0, 1, 1], [], []>} : vector<16x32xbf16>, vector<32x128xbf16>, vector<16x128xf32> -> vector<16x128xf32>
    %c0_82 = arith.constant 0 : index
    %c0_83 = arith.constant 0 : index
    %270 = vector.load %arg13[%c0_82, %c0_83] : memref<1x128xf32, #tpu.memory_space<vmem>>, vector<1x128xf32>
    %271 = vector.broadcast %270 : vector<1x128xf32> to vector<16x128xf32>
    %272 = arith.addf %269, %271 : vector<16x128xf32>
    %cst_84 = arith.constant 5.000000e-01 : f32
    %273 = vector.broadcast %cst_84 : f32 to vector<16x128xf32>
    %274 = arith.mulf %273, %272 : vector<16x128xf32>
    %cst_85 = arith.constant 0.707106769 : f32
    %275 = vector.broadcast %cst_85 : f32 to vector<16x128xf32>
    %276 = arith.mulf %272, %275 : vector<16x128xf32>
    %cst_86 = arith.constant 0.000000e+00 : f32
    %277 = vector.broadcast %cst_86 : f32 to vector<16x128xf32>
    %278 = arith.cmpf oge, %276, %277 : vector<16x128xf32>
    %cst_87 = arith.constant 1.000000e+00 : f32
    %cst_88 = arith.constant -1.000000e+00 : f32
    %279 = vector.broadcast %cst_87 : f32 to vector<16x128xf32>
    %280 = vector.broadcast %cst_88 : f32 to vector<16x128xf32>
    %281 = arith.select %278, %279, %280 : vector<16x128xi1>, vector<16x128xf32>
    %282 = math.absf %276 : vector<16x128xf32>
    %cst_89 = arith.constant 0.327591091 : f32
    %283 = vector.broadcast %cst_89 : f32 to vector<16x128xf32>
    %284 = arith.mulf %283, %282 : vector<16x128xf32>
    %cst_90 = arith.constant 1.000000e+00 : f32
    %285 = vector.broadcast %cst_90 : f32 to vector<16x128xf32>
    %286 = arith.addf %285, %284 : vector<16x128xf32>
    %287 = tpu.reciprocal %286 {approx = true} : vector<16x128xf32> -> vector<16x128xf32>
    %cst_91 = arith.constant 1.06140542 : f32
    %288 = vector.broadcast %cst_91 : f32 to vector<16x128xf32>
    %289 = arith.mulf %288, %287 : vector<16x128xf32>
    %cst_92 = arith.constant -1.45315206 : f32
    %290 = vector.broadcast %cst_92 : f32 to vector<16x128xf32>
    %291 = arith.addf %289, %290 : vector<16x128xf32>
    %292 = arith.mulf %291, %287 : vector<16x128xf32>
    %cst_93 = arith.constant 1.42141378 : f32
    %293 = vector.broadcast %cst_93 : f32 to vector<16x128xf32>
    %294 = arith.addf %292, %293 : vector<16x128xf32>
    %295 = arith.mulf %294, %287 : vector<16x128xf32>
    %cst_94 = arith.constant -0.284496725 : f32
    %296 = vector.broadcast %cst_94 : f32 to vector<16x128xf32>
    %297 = arith.addf %295, %296 : vector<16x128xf32>
    %298 = arith.mulf %297, %287 : vector<16x128xf32>
    %cst_95 = arith.constant 0.254829586 : f32
    %299 = vector.broadcast %cst_95 : f32 to vector<16x128xf32>
    %300 = arith.addf %298, %299 : vector<16x128xf32>
    %301 = arith.mulf %300, %287 : vector<16x128xf32>
    %cst_96 = arith.constant 0.000000e+00 : f32
    %302 = vector.broadcast %cst_96 : f32 to vector<16x128xf32>
    %303 = arith.subf %302, %282 : vector<16x128xf32>
    %304 = arith.mulf %303, %282 : vector<16x128xf32>
    %305 = math.exp %304 : vector<16x128xf32>
    %306 = arith.mulf %301, %305 : vector<16x128xf32>
    %cst_97 = arith.constant 1.000000e+00 : f32
    %307 = vector.broadcast %cst_97 : f32 to vector<16x128xf32>
    %308 = arith.subf %307, %306 : vector<16x128xf32>
    %309 = arith.mulf %281, %308 : vector<16x128xf32>
    %cst_98 = arith.constant 1.000000e+00 : f32
    %310 = vector.broadcast %cst_98 : f32 to vector<16x128xf32>
    %311 = arith.addf %310, %309 : vector<16x128xf32>
    %312 = arith.mulf %274, %311 : vector<16x128xf32>
    %313 = arith.truncf %312 : vector<16x128xf32> to vector<16x128xbf16>
    %c0_99 = arith.constant 0 : index
    %c0_100 = arith.constant 0 : index
    %314 = vector.load %arg14[%c0_99, %c0_100] : memref<128x32xbf16, #tpu.memory_space<vmem>>, vector<128x32xbf16>
    %cst_101 = arith.constant dense<0.000000e+00> : vector<16x32xf32>
    %315 = tpu.matmul %313, %314, %cst_101 {dimension_numbers = #tpu.dot_dimension_numbers<[1], [0], [0], [1], [0, 0, 1, 1], [], []>} : vector<16x128xbf16>, vector<128x32xbf16>, vector<16x32xf32> -> vector<16x32xf32>
    %c0_102 = arith.constant 0 : index
    %c0_103 = arith.constant 0 : index
    %316 = vector.load %arg15[%c0_102, %c0_103] : memref<1x32xf32, #tpu.memory_space<vmem>>, vector<1x32xf32>
    %317 = vector.broadcast %316 : vector<1x32xf32> to vector<16x32xf32>
    %318 = arith.addf %315, %317 : vector<16x32xf32>
    %cst_104 = arith.constant 5.000000e-01 : f32
    %319 = vector.broadcast %cst_104 : f32 to vector<16x32xf32>
    %320 = arith.mulf %319, %318 : vector<16x32xf32>
    %cst_105 = arith.constant 0.707106769 : f32
    %321 = vector.broadcast %cst_105 : f32 to vector<16x32xf32>
    %322 = arith.mulf %318, %321 : vector<16x32xf32>
    %cst_106 = arith.constant 0.000000e+00 : f32
    %323 = vector.broadcast %cst_106 : f32 to vector<16x32xf32>
    %324 = arith.cmpf oge, %322, %323 : vector<16x32xf32>
    %cst_107 = arith.constant 1.000000e+00 : f32
    %cst_108 = arith.constant -1.000000e+00 : f32
    %325 = vector.broadcast %cst_107 : f32 to vector<16x32xf32>
    %326 = vector.broadcast %cst_108 : f32 to vector<16x32xf32>
    %327 = arith.select %324, %325, %326 : vector<16x32xi1>, vector<16x32xf32>
    %328 = math.absf %322 : vector<16x32xf32>
    %cst_109 = arith.constant 0.327591091 : f32
    %329 = vector.broadcast %cst_109 : f32 to vector<16x32xf32>
    %330 = arith.mulf %329, %328 : vector<16x32xf32>
    %cst_110 = arith.constant 1.000000e+00 : f32
    %331 = vector.broadcast %cst_110 : f32 to vector<16x32xf32>
    %332 = arith.addf %331, %330 : vector<16x32xf32>
    %333 = tpu.reciprocal %332 {approx = true} : vector<16x32xf32> -> vector<16x32xf32>
    %cst_111 = arith.constant 1.06140542 : f32
    %334 = vector.broadcast %cst_111 : f32 to vector<16x32xf32>
    %335 = arith.mulf %334, %333 : vector<16x32xf32>
    %cst_112 = arith.constant -1.45315206 : f32
    %336 = vector.broadcast %cst_112 : f32 to vector<16x32xf32>
    %337 = arith.addf %335, %336 : vector<16x32xf32>
    %338 = arith.mulf %337, %333 : vector<16x32xf32>
    %cst_113 = arith.constant 1.42141378 : f32
    %339 = vector.broadcast %cst_113 : f32 to vector<16x32xf32>
    %340 = arith.addf %338, %339 : vector<16x32xf32>
    %341 = arith.mulf %340, %333 : vector<16x32xf32>
    %cst_114 = arith.constant -0.284496725 : f32
    %342 = vector.broadcast %cst_114 : f32 to vector<16x32xf32>
    %343 = arith.addf %341, %342 : vector<16x32xf32>
    %344 = arith.mulf %343, %333 : vector<16x32xf32>
    %cst_115 = arith.constant 0.254829586 : f32
    %345 = vector.broadcast %cst_115 : f32 to vector<16x32xf32>
    %346 = arith.addf %344, %345 : vector<16x32xf32>
    %347 = arith.mulf %346, %333 : vector<16x32xf32>
    %cst_116 = arith.constant 0.000000e+00 : f32
    %348 = vector.broadcast %cst_116 : f32 to vector<16x32xf32>
    %349 = arith.subf %348, %328 : vector<16x32xf32>
    %350 = arith.mulf %349, %328 : vector<16x32xf32>
    %351 = math.exp %350 : vector<16x32xf32>
    %352 = arith.mulf %347, %351 : vector<16x32xf32>
    %cst_117 = arith.constant 1.000000e+00 : f32
    %353 = vector.broadcast %cst_117 : f32 to vector<16x32xf32>
    %354 = arith.subf %353, %352 : vector<16x32xf32>
    %355 = arith.mulf %327, %354 : vector<16x32xf32>
    %cst_118 = arith.constant 1.000000e+00 : f32
    %356 = vector.broadcast %cst_118 : f32 to vector<16x32xf32>
    %357 = arith.addf %356, %355 : vector<16x32xf32>
    %358 = arith.mulf %320, %357 : vector<16x32xf32>
    %359 = arith.addf %242, %358 : vector<16x32xf32>
    %360 = vector.shape_cast %359 : vector<16x32xf32> to vector<2x8x32xf32>
    %c0_119 = arith.constant 0 : index
    %c0_120 = arith.constant 0 : index
    %c0_121 = arith.constant 0 : index
    %361 = vector.load %arg16[%c0_119, %c0_120, %c0_121] : memref<2x8x32xf32, #tpu.memory_space<vmem>>, vector<2x8x32xf32>
    tpu.vector_store %arg16[%c0_119, %c0_120, %c0_121], %360 {strides = array<i32>} : memref<2x8x32xf32, #tpu.memory_space<vmem>>, vector<2x8x32xf32>,
    return
  }
  func.func @transform_0(%arg0: i32, %arg1: i32) -> (i32, i32, i32) {
    %c0_i32 = arith.constant 0 : i32
    %c0_i32_0 = arith.constant 0 : i32
    %c0_i32_1 = arith.constant 0 : i32
    return %arg0, %c0_i32, %c0_i32_0 : i32, i32, i32
  }
  func.func @transform_1(%arg0: i32, %arg1: i32) -> (i32, i32) {
    %c0_i32 = arith.constant 0 : i32
    %c0_i32_0 = arith.constant 0 : i32
    %c0_i32_1 = arith.constant 0 : i32
    return %c0_i32, %c0_i32_0 : i32, i32
  }
  func.func @transform_2(%arg0: i32, %arg1: i32) -> (i32, i32) {
    %c0_i32 = arith.constant 0 : i32
    %c0_i32_0 = arith.constant 0 : i32
    %c0_i32_1 = arith.constant 0 : i32
    return %c0_i32, %c0_i32_0 : i32, i32
  }
  func.func @transform_3(%arg0: i32, %arg1: i32) -> (i32, i32) {
    %c0_i32 = arith.constant 0 : i32
    %c0_i32_0 = arith.constant 0 : i32
    %c0_i32_1 = arith.constant 0 : i32
    return %c0_i32, %c0_i32_0 : i32, i32
  }
  func.func @transform_4(%arg0: i32, %arg1: i32) -> (i32, i32) {
    %c0_i32 = arith.constant 0 : i32
    %c0_i32_0 = arith.constant 0 : i32
    %c0_i32_1 = arith.constant 0 : i32
    return %c0_i32, %c0_i32_0 : i32, i32
  }
  func.func @transform_5(%arg0: i32, %arg1: i32) -> (i32, i32) {
    %c0_i32 = arith.constant 0 : i32
    %c0_i32_0 = arith.constant 0 : i32
    %c0_i32_1 = arith.constant 0 : i32
    return %c0_i32, %c0_i32_0 : i32, i32
  }
  func.func @transform_6(%arg0: i32, %arg1: i32) -> (i32, i32) {
    %c0_i32 = arith.constant 0 : i32
    %c0_i32_0 = arith.constant 0 : i32
    %c0_i32_1 = arith.constant 0 : i32
    return %c0_i32, %c0_i32_0 : i32, i32
  }
  func.func @transform_7(%arg0: i32, %arg1: i32) -> (i32, i32) {
    %c0_i32 = arith.constant 0 : i32
    %c0_i32_0 = arith.constant 0 : i32
    %c0_i32_1 = arith.constant 0 : i32
    return %c0_i32, %c0_i32_0 : i32, i32
  }
  func.func @transform_8(%arg0: i32, %arg1: i32) -> (i32, i32) {
    %c0_i32 = arith.constant 0 : i32
    %c0_i32_0 = arith.constant 0 : i32
    %c0_i32_1 = arith.constant 0 : i32
    return %c0_i32, %c0_i32_0 : i32, i32
  }
  func.func @transform_9(%arg0: i32, %arg1: i32) -> (i32, i32) {
    %c0_i32 = arith.constant 0 : i32
    %c0_i32_0 = arith.constant 0 : i32
    %c0_i32_1 = arith.constant 0 : i32
    return %c0_i32, %c0_i32_0 : i32, i32
  }
  func.func @transform_10(%arg0: i32, %arg1: i32) -> (i32, i32) {
    %c0_i32 = arith.constant 0 : i32
    %c0_i32_0 = arith.constant 0 : i32
    %c0_i32_1 = arith.constant 0 : i32
    return %c0_i32, %c0_i32_0 : i32, i32
  }
  func.func @transform_11(%arg0: i32, %arg1: i32) -> (i32, i32) {
    %c0_i32 = arith.constant 0 : i32
    %c0_i32_0 = arith.constant 0 : i32
    %c0_i32_1 = arith.constant 0 : i32
    return %c0_i32, %c0_i32_0 : i32, i32
  }
  func.func @transform_12(%arg0: i32, %arg1: i32) -> (i32, i32) {
    %c0_i32 = arith.constant 0 : i32
    %c0_i32_0 = arith.constant 0 : i32
    %c0_i32_1 = arith.constant 0 : i32
    return %c0_i32, %c0_i32_0 : i32, i32
  }
  func.func @transform_13(%arg0: i32, %arg1: i32) -> (i32, i32) {
    %c0_i32 = arith.constant 0 : i32
    %c0_i32_0 = arith.constant 0 : i32
    %c0_i32_1 = arith.constant 0 : i32
    return %c0_i32, %c0_i32_0 : i32, i32
  }
  func.func @transform_14(%arg0: i32, %arg1: i32) -> (i32, i32, i32) {
    %c0_i32 = arith.constant 0 : i32
    %c0_i32_0 = arith.constant 0 : i32
    return %arg0, %arg1, %c0_i32 : i32, i32, i32
  }
}

</mosaic_0001>

<llo_original>
// kernel: tpu_custom_call.1
$region0: #{tpu_custom_call.1}
  #allocation0 [shape = 'u32[]', space=smem, size = 0x4, offset = 0x4, fixed_abs, tag = 'smem constant byte address 0x4 - core index']
  #allocation1 [shape = 'u32[144,128]{1,0:T(1,128)}', space=vmem, size = 0x12000, scoped, tag = 'internal scratch']
  %s0 = inlined_call_operand.hbm [shape: f32[8,128], index: 0, kind: input, shape index: {}]
  %s1 = inlined_call_operand.hbm [shape: f32[16,128], index: 1, kind: output, shape index: {}]
  %s2 = sld [smem:[#allocation0]]
  $region41: #{tpu_custom_call.1} parent=0
    _
  %s4 = ssub.s32 1, %s2
  %s5 = scalar_select 0, %s4, %s2
  $region1: #{tpu_custom_call.1} parent=0
    #allocation2 [shape = 'u8[4096]{0}', space=vmem, size = 0x1000, scoped, tag = 'input window, operand 0, single buffered']
    #allocation3 [shape = 's32[2]{0}', space=sflag, size = 0x8, scoped, tag = 'scoped memory for tpu_custom_call.1']
    #allocation4 [shape = 's32[2]{0}', space=sflag, size = 0x8, scoped, tag = 'scoped memory for tpu_custom_call.1']
    #allocation5 [shape = 'u8[8192]{0}', space=vmem, size = 0x2000, scoped, tag = 'output window, operand 0']
    %6 = vsyncpa [#allocation3], 0
    %7 = vsyncpa [#allocation4], 0
    %s8 = scalar_lea.sflag [#allocation4], 1
    %9 = vsyncpa %s8, 0
    loop: start=0, step=1, limit=4
    $region2: #{tpu_custom_call.1} parent=1 // loop_pre_header
      _
    $region3: #{tpu_custom_call.1} parent=1 // loop_header
      %s11 = sphi 0, %s15
      %p12 = scmp.ge.s32.totalorder %s11, 4
      %s19 = sphi 0, %s19
      %s21 = sphi 0, %s19
      %s22 = sphi 0, %s21
      %s36 = sphi 0, %s22
      %s42 = sphi 0, %s44
      %s45 = sphi 0, %s42
      %s46 = sphi 0, %s45
      %s62 = sphi 0, %s46
    $region4: #{tpu_custom_call.1} parent=1 // loop_header_branch
      %14 = sbr.rel (%p12) target = $region8
    $region5: #{tpu_custom_call.1} parent=1 // loop_body
      %s16 = ssub.s32 %s11, 1
      %s17 = ssub.s32 %s11, 2
      %s18 = sadd.s32 %s11, 1
      %s20 = sadd.s32 %s19, 1
      %p23 = scmp.eq.s32.totalorder %s11, 1
      %p24 = scmp.ne.s32.totalorder %s19, %s21
      %p25 = scmp.eq.s32.totalorder %s11, 0
      %p26 = por %p24, %p25
      %p27 = scmp.ne.s32.totalorder %s19, %s21
      %p28 = scmp.eq.s32.totalorder %s16, 1
      %p29 = por %p27, %p28
      %p30 = scmp.ne.s32.totalorder %s21, %s22
      %p31 = scmp.eq.s32.totalorder %s16, 0
      %p32 = por %p30, %p31
      %p33 = scmp.ne.s32.totalorder %s21, %s22
      %p34 = scmp.eq.s32.totalorder %s17, 1
      %p35 = por %p33, %p34
      %p37 = scmp.ne.s32.totalorder %s22, %s36
      %p38 = scmp.eq.s32.totalorder %s17, 0
      %p39 = por %p37, %p38
      %s40 = ssub.s32 %s11, %s18
      %p41 = scmp.eq.s32.totalorder %s40, 0
      %s43 = sadd.s32 %s42, 1
      %s44 = scalar_select %p41, %s42, %s43
      %p47 = pneg %p41
      %p48 = scmp.eq.s32.totalorder %s11, 1
      %p49 = por %p47, %p48
      %p50 = scmp.ne.s32.totalorder %s42, %s45
      %p51 = scmp.eq.s32.totalorder %s11, 0
      %p52 = por %p50, %p51
      %p53 = scmp.ne.s32.totalorder %s42, %s45
      %p54 = scmp.eq.s32.totalorder %s16, 1
      %p55 = por %p53, %p54
      %p56 = scmp.ne.s32.totalorder %s45, %s46
      %p57 = scmp.eq.s32.totalorder %s16, 0
      %p58 = por %p56, %p57
      %p59 = scmp.ne.s32.totalorder %s45, %s46
      %p60 = scmp.eq.s32.totalorder %s17, 1
      %p61 = por %p59, %p60
      %p63 = scmp.ne.s32.totalorder %s46, %s62
      %p64 = scmp.eq.s32.totalorder %s17, 0
      %p65 = por %p63, %p64
      %p66 = scmp.le.s32.totalorder 1, %s11
      %p67 = scmp.lt.s32.totalorder %s11, 3
      %p68 = pnand %p66, %p67
      %p69 = pneg %p68
      // Predicated region
      $region9: #{tpu_custom_call.1} parent=5 // pred_check
        _
      $region10: #{tpu_custom_call.1} parent=5 // pred_check_branch
        %71 = sbr.rel (%p68) target = $region12
      $region11: #{tpu_custom_call.1} parent=5 // pred_region
        %s72 = ssub.s32 %s11, 1
        // Predicated region
        $region13: #{tpu_custom_call.1} parent=11 // pred_check
          %p73 = pneg %p32
        $region14: #{tpu_custom_call.1} parent=11 // pred_check_branch
          %75 = sbr.rel (%p73) target = $region16
        $region15: #{tpu_custom_call.1} parent=11 // pred_region
          %s77 = ssub.s32 128, 128
          %78 = vsyncadd [#allocation3], %s77
          %s80 = sshll.u32 [#allocation2], 4
          %s81 = int_to_ptr.vmem [resolvable:$true] %s80
          %83 = dma.hbm_to_vmem [thread:$0]  %s0, 128, %s81, [#allocation3]
        $region16: #{tpu_custom_call.1} parent=11 // pred_fallthru
          _
      $region12: #{tpu_custom_call.1} parent=5 // pred_fallthru
        _
      %p84 = scmp.lt.s32.totalorder %s11, 2
      // Predicated region
      $region17: #{tpu_custom_call.1} parent=5 // pred_check
        %p85 = pneg %p84
      $region18: #{tpu_custom_call.1} parent=5 // pred_check_branch
        %87 = sbr.rel (%p85) target = $region20
      $region19: #{tpu_custom_call.1} parent=5 // pred_region
        _
      $region20: #{tpu_custom_call.1} parent=5 // pred_fallthru
        _
      %p88 = scmp.le.s32.totalorder 1, %s11
      %p89 = scmp.lt.s32.totalorder %s11, 3
      %p90 = pnand %p88, %p89
      %p91 = pneg %p90
      // Predicated region
      $region21: #{tpu_custom_call.1} parent=5 // pred_check
        _
      $region22: #{tpu_custom_call.1} parent=5 // pred_check_branch
        %93 = sbr.rel (%p90) target = $region24
      $region23: #{tpu_custom_call.1} parent=5 // pred_region
        %s94 = ssub.s32 %s11, 1
        // Predicated region
        $region25: #{tpu_custom_call.1} parent=23 // pred_check
          %p95 = pneg %p32
        $region26: #{tpu_custom_call.1} parent=23 // pred_check_branch
          %97 = sbr.rel (%p95) target = $region28
        $region27: #{tpu_custom_call.1} parent=23 // pred_region
          %98 = dma.done [#allocation3], 128
        $region28: #{tpu_custom_call.1} parent=23 // pred_fallthru
          _
        %p99 = pneg %p32
        %p100 = pneg %p29
        %p101 = pneg %p58
        %p102 = pneg %p55
        %s103 = sand.u32 %s45, 1
        %s104 = scalar_lea.sflag [#allocation4], %s103
        %s105 = sand.u32 %s45, 1
        %s106 = smul.addr %s105, 8
        %s107 = scalar_lea.vmem [#allocation5], %s106
        %v108 = vld [vmem:[#allocation2] sm:$0xff]
        %v109 = vadd.f32 %v108, 1.0
        %110 = vst [vmem:[%s107] sm:$0xff] %v109
        %s111 = sand.u32 %s45, 1
        %s112 = scalar_lea.sflag [#allocation4], %s111
        %s113 = sand.u32 %s45, 1
        %s114 = smul.addr %s113, 8
        %s115 = scalar_lea.vmem [#allocation5], %s114
        // Predicated region
        $region29: #{tpu_custom_call.1} parent=23 // pred_check
          %p116 = pneg %p55
        $region30: #{tpu_custom_call.1} parent=23 // pred_check_branch
          %118 = sbr.rel (%p116) target = $region32
        $region31: #{tpu_custom_call.1} parent=23 // pred_region
          %s120 = ssub.s32 128, 128
          %121 = vsyncadd %s112, %s120
          %s122 = smul.addr %s16, 128
          %s123 = scalar_lea.hbm %s1, %s122
          %s125 = sshll.u32 %s115, 4
          %s126 = int_to_ptr.vmem [resolvable:$true] %s125
          %128 = dma.vmem_to_hbm [thread:$0]  %s126, 128, %s123, %s112
        $region32: #{tpu_custom_call.1} parent=23 // pred_fallthru
          _
      $region24: #{tpu_custom_call.1} parent=5 // pred_fallthru
        _
      %p129 = scmp.le.s32.totalorder 2, %s11
      // Predicated region
      $region33: #{tpu_custom_call.1} parent=5 // pred_check
        %p130 = pneg %p129
      $region34: #{tpu_custom_call.1} parent=5 // pred_check_branch
        %132 = sbr.rel (%p130) target = $region36
      $region35: #{tpu_custom_call.1} parent=5 // pred_region
        %s133 = ssub.s32 %s11, 2
        // Predicated region
        $region37: #{tpu_custom_call.1} parent=35 // pred_check
          %p134 = pneg %p61
        $region38: #{tpu_custom_call.1} parent=35 // pred_check_branch
          %136 = sbr.rel (%p134) target = $region40
        $region39: #{tpu_custom_call.1} parent=35 // pred_region
          %s137 = sand.u32 %s46, 1
          %s138 = scalar_lea.sflag [#allocation4], %s137
          %s139 = sand.u32 %s46, 1
          %s140 = smul.addr %s139, 8
          %s141 = scalar_lea.vmem [#allocation5], %s140
          %142 = dma.done %s138, 128
        $region40: #{tpu_custom_call.1} parent=35 // pred_fallthru
          _
      $region36: #{tpu_custom_call.1} parent=5 // pred_fallthru
        _
    $region6: #{tpu_custom_call.1} parent=1 // loop_footer
      %s15 = sadd.s32 1, %s11
    $region7: #{tpu_custom_call.1} parent=1 // loop_footer_branch
      %10 = sbr.rel target = $region3
    $region8: #{tpu_custom_call.1} parent=1 // loop_exit
      _
    %143 = vsyncpa [#allocation3], 1
    %s144 = scalar_lea.sflag [#allocation3], 1
    %145 = vsyncpa %s144, 1
    %146 = vsyncpa [#allocation4], 1
    %s147 = scalar_lea.sflag [#allocation4], 1
    %148 = vsyncpa %s147, 1

// kernel: _lambda_.3
$region0: #{_lambda_.3}
  #allocation0 [shape = 'u32[]', space=smem, size = 0x4, offset = 0x4, fixed_abs, tag = 'smem constant byte address 0x4 - core index']
  #allocation1 [shape = 'u32[144,128]{1,0:T(1,128)}', space=vmem, size = 0x12000, scoped, tag = 'internal scratch']
  %s0 = inlined_call_operand.vmem [shape: bf16[8,256], index: 0, kind: input, shape index: {}]
  %s1 = inlined_call_operand.vmem [shape: bf16[256,32], index: 1, kind: input, shape index: {}]
  %s2 = inlined_call_operand.vmem [shape: f32[1,32], index: 2, kind: input, shape index: {}]
  %s3 = inlined_call_operand.vmem [shape: f32[8,32], index: 3, kind: output, shape index: {}]
  %s4 = sld [smem:[#allocation0]]
  $region22: #{_lambda_.3} parent=0
    _
  %s6 = ssub.s32 1, %s4
  %s7 = scalar_select 0, %s6, %s4
  // Predicated region
  $region2: #{_lambda_.3} parent=0 // pred_check
    _
  $region3: #{_lambda_.3} parent=0 // pred_check_branch
    %9 = sbr.rel (0) target = $region5
  $region4: #{_lambda_.3} parent=0 // pred_region
    _
  $region5: #{_lambda_.3} parent=0 // pred_fallthru
    _
  // Predicated region
  $region6: #{_lambda_.3} parent=0 // pred_check
    _
  $region7: #{_lambda_.3} parent=0 // pred_check_branch
    %11 = sbr.rel (0) target = $region9
  $region8: #{_lambda_.3} parent=0 // pred_region
    _
  $region9: #{_lambda_.3} parent=0 // pred_fallthru
    _
  // Predicated region
  $region10: #{_lambda_.3} parent=0 // pred_check
    _
  $region11: #{_lambda_.3} parent=0 // pred_check_branch
    %13 = sbr.rel (0) target = $region13
  $region12: #{_lambda_.3} parent=0 // pred_region
    _
  $region13: #{_lambda_.3} parent=0 // pred_fallthru
    _
  %v15 = vld [vmem:[%s0] sm:$0xff]
  %v16 = vld [vmem:[%s1] sm:$0xf]
  %v17 = vld [vmem:[%s1 + $0x4] sm:$0xf]
  %v18 = vld [vmem:[%s1 + $0x8] sm:$0xf]
  %v19 = vld [vmem:[%s1 + $0xc] sm:$0xf]
  %v20 = vld [vmem:[%s1 + $0x10] sm:$0xf]
  %v21 = vld [vmem:[%s1 + $0x14] sm:$0xf]
  %v22 = vld [vmem:[%s1 + $0x18] sm:$0xf]
  %v23 = vld [vmem:[%s1 + $0x1c] sm:$0xf]
  %v24 = vld [vmem:[%s1 + $0x20] sm:$0xf]
  %v25 = vld [vmem:[%s1 + $0x24] sm:$0xf]
  %v26 = vld [vmem:[%s1 + $0x28] sm:$0xf]
  %v27 = vld [vmem:[%s1 + $0x2c] sm:$0xf]
  %v28 = vld [vmem:[%s1 + $0x30] sm:$0xf]
  %v29 = vld [vmem:[%s1 + $0x34] sm:$0xf]
  %v30 = vld [vmem:[%s1 + $0x38] sm:$0xf]
  %v31 = vld [vmem:[%s1 + $0x3c] sm:$0xf]
  %v32 = vld [vmem:[%s1 + $0x40] sm:$0xf]
  %v33 = vld [vmem:[%s1 + $0x44] sm:$0xf]
  %v34 = vld [vmem:[%s1 + $0x48] sm:$0xf]
  %v35 = vld [vmem:[%s1 + $0x4c] sm:$0xf]
  %v36 = vld [vmem:[%s1 + $0x50] sm:$0xf]
  %v37 = vld [vmem:[%s1 + $0x54] sm:$0xf]
  %v38 = vld [vmem:[%s1 + $0x58] sm:$0xf]
  %v39 = vld [vmem:[%s1 + $0x5c] sm:$0xf]
  %v40 = vld [vmem:[%s1 + $0x60] sm:$0xf]
  %v41 = vld [vmem:[%s1 + $0x64] sm:$0xf]
  %v42 = vld [vmem:[%s1 + $0x68] sm:$0xf]
  %v43 = vld [vmem:[%s1 + $0x6c] sm:$0xf]
  %v44 = vld [vmem:[%s1 + $0x70] sm:$0xf]
  %v45 = vld [vmem:[%s1 + $0x74] sm:$0xf]
  %v46 = vld [vmem:[%s1 + $0x78] sm:$0xf]
  %v47 = vld [vmem:[%s1 + $0x7c] sm:$0xf]
  %v48 = vld [vmem:[%s2] sm:$0x1]
  %v50 = vlaneseq
  %v51 = vshrl.u32 %v50, 7
  %v52 = vsub.s32 0, %v51
  %v53 = vrot.slane %v48, %v52
  %v56 = vunpack.c.l.b16 %v15
  %v57 = vunpack.c.h.b16 %v15
  %v58 = vpack.c.b16 %v56, %v56
  %v59 = vpack.c.b16 %v57, %v57
  %v94 = vunpack.c.l.b16 %v16
  %v95 = vunpack.c.l.b16 %v17
  %v96 = vunpack.c.l.b16 %v18
  %v97 = vunpack.c.l.b16 %v19
  %v98 = vunpack.c.l.b16 %v20
  %v99 = vunpack.c.l.b16 %v21
  %v100 = vunpack.c.l.b16 %v22
  %v101 = vunpack.c.l.b16 %v23
  %v102 = vunpack.c.l.b16 %v24
  %v103 = vunpack.c.l.b16 %v25
  %v104 = vunpack.c.l.b16 %v26
  %v105 = vunpack.c.l.b16 %v27
  %v106 = vunpack.c.l.b16 %v28
  %v107 = vunpack.c.l.b16 %v29
  %v108 = vunpack.c.l.b16 %v30
  %v109 = vunpack.c.l.b16 %v31
  %v110 = vunpack.c.l.b16 %v32
  %v111 = vunpack.c.l.b16 %v33
  %v112 = vunpack.c.l.b16 %v34
  %v113 = vunpack.c.l.b16 %v35
  %v114 = vunpack.c.l.b16 %v36
  %v115 = vunpack.c.l.b16 %v37
  %v116 = vunpack.c.l.b16 %v38
  %v117 = vunpack.c.l.b16 %v39
  %v118 = vunpack.c.l.b16 %v40
  %v119 = vunpack.c.l.b16 %v41
  %v120 = vunpack.c.l.b16 %v42
  %v121 = vunpack.c.l.b16 %v43
  %v122 = vunpack.c.l.b16 %v44
  %v123 = vunpack.c.l.b16 %v45
  %v124 = vunpack.c.l.b16 %v46
  %v125 = vunpack.c.l.b16 %v47
  %v126 = vpack.c.b16 %v95, %v94
  %v127 = vpack.c.b16 %v97, %v96
  %v128 = vpack.c.b16 %v99, %v98
  %v129 = vpack.c.b16 %v101, %v100
  %v130 = vpack.c.b16 %v103, %v102
  %v131 = vpack.c.b16 %v105, %v104
  %v132 = vpack.c.b16 %v107, %v106
  %v133 = vpack.c.b16 %v109, %v108
  %v134 = vpack.c.b16 %v111, %v110
  %v135 = vpack.c.b16 %v113, %v112
  %v136 = vpack.c.b16 %v115, %v114
  %v137 = vpack.c.b16 %v117, %v116
  %v138 = vpack.c.b16 %v119, %v118
  %v139 = vpack.c.b16 %v121, %v120
  %v140 = vpack.c.b16 %v123, %v122
  %v141 = vpack.c.b16 %v125, %v124
  %158 = vmatprep.subr.bf16.mxu0 0
  %159 = vmatpush1.bf16.msra.mxu0 %v126
  %160 = vmatprep.subr.bf16.mxu0 0
  %161 = vmatpush1.bf16.msra.mxu0 %v127
  %162 = vmatprep.subr.bf16.mxu0 0
  %163 = vmatpush1.bf16.msra.mxu0 %v128
  %164 = vmatprep.subr.bf16.mxu0 0
  %165 = vmatpush1.bf16.msra.mxu0 %v129
  %166 = vmatprep.subr.bf16.mxu0 0
  %167 = vmatpush1.bf16.msra.mxu0 %v130
  %168 = vmatprep.subr.bf16.mxu0 0
  %169 = vmatpush1.bf16.msra.mxu0 %v131
  %170 = vmatprep.subr.bf16.mxu0 0
  %171 = vmatpush1.bf16.msra.mxu0 %v132
  %172 = vmatprep.subr.bf16.mxu0 0
  %173 = vmatpush1.bf16.msra.mxu0 %v133
  %174 = vmatprep.subr.bf16.mxu0 0
  %175 = vmatpush1.bf16.msra.mxu0 %v134
  %176 = vmatprep.subr.bf16.mxu0 0
  %177 = vmatpush1.bf16.msra.mxu0 %v135
  %178 = vmatprep.subr.bf16.mxu0 0
  %179 = vmatpush1.bf16.msra.mxu0 %v136
  %180 = vmatprep.subr.bf16.mxu0 0
  %181 = vmatpush1.bf16.msra.mxu0 %v137
  %182 = vmatprep.subr.bf16.mxu0 0
  %183 = vmatpush1.bf16.msra.mxu0 %v138
  %184 = vmatprep.subr.bf16.mxu0 0
  %185 = vmatpush1.bf16.msra.mxu0 %v139
  %186 = vmatprep.subr.bf16.mxu0 0
  %187 = vmatpush1.bf16.msra.mxu0 %v140
  %188 = vmatprep.subr.bf16.mxu0 0
  %189 = vmatpush1.bf16.msra.mxu0 %v141
  %190 = vmatprep.mubr.bf16.mxu0 %v59
  %191 = vmatmul.mubr.bf16.gmra.mrb[0].mxu0 %v58
  %v192 = vpop.f32.mrb[0].mxu0
  %v193 = vadd.f32 %v53, %v192
  %v194 = vpop.f32.mrb[0].mxu0
  %v195 = vpop.f32.mrb[0].mxu0
  %v196 = vpop.f32.mrb[0].mxu0
  %197 = vdwg.mxu0
  %vm198 = vcmask 261120
  %199 = vst.msk [vmem:[%s3] sm:$0xff] %vm198, %v193
  // Predicated region
  $region14: #{_lambda_.3} parent=0 // pred_check
    _
  $region15: #{_lambda_.3} parent=0 // pred_check_branch
    %201 = sbr.rel (0) target = $region17
  $region16: #{_lambda_.3} parent=0 // pred_region
    _
  $region17: #{_lambda_.3} parent=0 // pred_fallthru
    _
  // Predicated region
  $region18: #{_lambda_.3} parent=0 // pred_check
    _
  $region19: #{_lambda_.3} parent=0 // pred_check_branch
    %203 = sbr.rel (0) target = $region21
  $region20: #{_lambda_.3} parent=0 // pred_region
    _
  $region21: #{_lambda_.3} parent=0 // pred_fallthru
    _

// kernel: _lambda_.4
$region0: #{_lambda_.4}
  #allocation0 [shape = 'u32[]', space=smem, size = 0x4, offset = 0x4, fixed_abs, tag = 'smem constant byte address 0x4 - core index']
  #allocation1 [shape = 'u32[144,128]{1,0:T(1,128)}', space=vmem, size = 0x12000, scoped, tag = 'internal scratch']
  #allocation2 [shape = 'bf16[16,32]{1,0:T(16,128)(2,1)}', space=vmem, size = 0x1000, scoped, tag = 'scratch operand']
  #allocation3 [shape = 'bf16[16,32]{1,0:T(16,128)(2,1)}', space=vmem, size = 0x1000, scoped, tag = 'scratch operand']
  #allocation4 [shape = 'f32[16,32]{1,0:T(8,128)}', space=vmem, size = 0x2000, scoped, tag = 'scratch operand']
  %s0 = inlined_call_operand.vmem [shape: f32[2,8,32], index: 0, kind: input, shape index: {}]
  %s1 = inlined_call_operand.vmem [shape: f32[1,32], index: 1, kind: input, shape index: {}]
  %s2 = inlined_call_operand.vmem [shape: f32[1,32], index: 2, kind: input, shape index: {}]
  %s3 = inlined_call_operand.vmem [shape: bf16[32,32], index: 3, kind: input, shape index: {}]
  %s4 = inlined_call_operand.vmem [shape: bf16[32,32], index: 4, kind: input, shape index: {}]
  %s5 = inlined_call_operand.vmem [shape: bf16[32,32], index: 5, kind: input, shape index: {}]
  %s6 = inlined_call_operand.vmem [shape: bf16[32,32], index: 6, kind: input, shape index: {}]
  %s7 = inlined_call_operand.vmem [shape: f32[1,32], index: 7, kind: input, shape index: {}]
  %s8 = inlined_call_operand.vmem [shape: f32[1,32], index: 8, kind: input, shape index: {}]
  %s9 = inlined_call_operand.vmem [shape: f32[1,32], index: 9, kind: input, shape index: {}]
  %s10 = inlined_call_operand.vmem [shape: bf16[32,128], index: 10, kind: input, shape index: {}]
  %s11 = inlined_call_operand.vmem [shape: f32[1,128], index: 11, kind: input, shape index: {}]
  %s12 = inlined_call_operand.vmem [shape: bf16[128,32], index: 12, kind: input, shape index: {}]
  %s13 = inlined_call_operand.vmem [shape: f32[1,32], index: 13, kind: input, shape index: {}]
  %s14 = inlined_call_operand.vmem [shape: f32[2,8,32], index: 14, kind: output, shape index: {}]
  %s15 = sld [smem:[#allocation0]]
  $region70: #{_lambda_.4} parent=0
    _
  %s17 = ssub.s32 1, %s15
  %s18 = scalar_select 0, %s17, %s15
  // Predicated region
  $region2: #{_lambda_.4} parent=0 // pred_check
    _
  $region3: #{_lambda_.4} parent=0 // pred_check_branch
    %20 = sbr.rel (0) target = $region5
  $region4: #{_lambda_.4} parent=0 // pred_region
    _
  $region5: #{_lambda_.4} parent=0 // pred_fallthru
    _
  // Predicated region
  $region6: #{_lambda_.4} parent=0 // pred_check
    _
  $region7: #{_lambda_.4} parent=0 // pred_check_branch
    %22 = sbr.rel (0) target = $region9
  $region8: #{_lambda_.4} parent=0 // pred_region
    _
  $region9: #{_lambda_.4} parent=0 // pred_fallthru
    _
  // Predicated region
  $region10: #{_lambda_.4} parent=0 // pred_check
    _
  $region11: #{_lambda_.4} parent=0 // pred_check_branch
    %24 = sbr.rel (0) target = $region13
  $region12: #{_lambda_.4} parent=0 // pred_region
    _
  $region13: #{_lambda_.4} parent=0 // pred_fallthru
    _
  // Predicated region
  $region14: #{_lambda_.4} parent=0 // pred_check
    _
  $region15: #{_lambda_.4} parent=0 // pred_check_branch
    %26 = sbr.rel (0) target = $region17
  $region16: #{_lambda_.4} parent=0 // pred_region
    _
  $region17: #{_lambda_.4} parent=0 // pred_fallthru
    _
  // Predicated region
  $region18: #{_lambda_.4} parent=0 // pred_check
    _
  $region19: #{_lambda_.4} parent=0 // pred_check_branch
    %28 = sbr.rel (0) target = $region21
  $region20: #{_lambda_.4} parent=0 // pred_region
    _
  $region21: #{_lambda_.4} parent=0 // pred_fallthru
    _
  // Predicated region
  $region22: #{_lambda_.4} parent=0 // pred_check
    _
  $region23: #{_lambda_.4} parent=0 // pred_check_branch
    %30 = sbr.rel (0) target = $region25
  $region24: #{_lambda_.4} parent=0 // pred_region
    _
  $region25: #{_lambda_.4} parent=0 // pred_fallthru
    _
  // Predicated region
  $region26: #{_lambda_.4} parent=0 // pred_check
    _
  $region27: #{_lambda_.4} parent=0 // pred_check_branch
    %32 = sbr.rel (0) target = $region29
  $region28: #{_lambda_.4} parent=0 // pred_region
    _
  $region29: #{_lambda_.4} parent=0 // pred_fallthru
    _
  // Predicated region
  $region30: #{_lambda_.4} parent=0 // pred_check
    _
  $region31: #{_lambda_.4} parent=0 // pred_check_branch
    %34 = sbr.rel (0) target = $region33
  $region32: #{_lambda_.4} parent=0 // pred_region
    _
  $region33: #{_lambda_.4} parent=0 // pred_fallthru
    _
  // Predicated region
  $region34: #{_lambda_.4} parent=0 // pred_check
    _
  $region35: #{_lambda_.4} parent=0 // pred_check_branch
    %36 = sbr.rel (0) target = $region37
  $region36: #{_lambda_.4} parent=0 // pred_region
    _
  $region37: #{_lambda_.4} parent=0 // pred_fallthru
    _
  // Predicated region
  $region38: #{_lambda_.4} parent=0 // pred_check
    _
  $region39: #{_lambda_.4} parent=0 // pred_check_branch
    %38 = sbr.rel (0) target = $region41
  $region40: #{_lambda_.4} parent=0 // pred_region
    _
  $region41: #{_lambda_.4} parent=0 // pred_fallthru
    _
  // Predicated region
  $region42: #{_lambda_.4} parent=0 // pred_check
    _
  $region43: #{_lambda_.4} parent=0 // pred_check_branch
    %40 = sbr.rel (0) target = $region45
  $region44: #{_lambda_.4} parent=0 // pred_region
    _
  $region45: #{_lambda_.4} parent=0 // pred_fallthru
    _
  // Predicated region
  $region46: #{_lambda_.4} parent=0 // pred_check
    _
  $region47: #{_lambda_.4} parent=0 // pred_check_branch
    %42 = sbr.rel (0) target = $region49
  $region48: #{_lambda_.4} parent=0 // pred_region
    _
  $region49: #{_lambda_.4} parent=0 // pred_fallthru
    _
  // Predicated region
  $region50: #{_lambda_.4} parent=0 // pred_check
    _
  $region51: #{_lambda_.4} parent=0 // pred_check_branch
    %44 = sbr.rel (0) target = $region53
  $region52: #{_lambda_.4} parent=0 // pred_region
    _
  $region53: #{_lambda_.4} parent=0 // pred_fallthru
    _
  // Predicated region
  $region54: #{_lambda_.4} parent=0 // pred_check
    _
  $region55: #{_lambda_.4} parent=0 // pred_check_branch
    %46 = sbr.rel (0) target = $region57
  $region56: #{_lambda_.4} parent=0 // pred_region
    _
  $region57: #{_lambda_.4} parent=0 // pred_fallthru
    _
  %v48 = vld [vmem:[%s1] sm:$0x1]
  %v49 = vld [vmem:[%s2] sm:$0x1]
  %v50 = vlaneseq
  %v51 = vand.u32 %v50, 127
  %vm52 = vcmp.lt.s32.totalorder %v51, 5
  %v53 = vsel %vm52, 0.0, -1e+30
  %p54 = scmp.eq.s32.totalorder 0, 0
  // Predicated region
  $region58: #{_lambda_.4} parent=0 // pred_check
    %p55 = pneg %p54
  $region59: #{_lambda_.4} parent=0 // pred_check_branch
    %57 = sbr.rel (%p55) target = $region61
  $region60: #{_lambda_.4} parent=0 // pred_region
    %v58 = vld [vmem:[%s0] sm:$0xff]
    %v59 = vld [vmem:[%s0 + $0x8] sm:$0xff]
    %vm60 = vcmask 261120
    %v61 = vsel %vm60, %v58, 0.0
    %62 = vadd.xlane.f32.xlu0 %v61
    %v63 = vpop.xlane.xlu0 %62
    %v64 = vsel %vm60, %v59, 0.0
    %65 = vadd.xlane.f32.xlu0 %v64
    %v66 = vpop.xlane.xlu0 %65
    %v67 = vrcp.pop 32.0
    %v68 = vmul.f32 %v63, %v67
    %v69 = vmul.f32 %v66, %v67
    %v70 = vsub.f32 %v58, %v68
    %v71 = vsub.f32 %v59, %v69
    %v72 = vmul.f32 %v70, %v70
    %v73 = vmul.f32 %v71, %v71
    %v74 = vsel %vm60, %v72, 0.0
    %75 = vadd.xlane.f32.xlu0 %v74
    %v76 = vpop.xlane.xlu0 %75
    %v77 = vsel %vm60, %v73, 0.0
    %78 = vadd.xlane.f32.xlu0 %v77
    %v79 = vpop.xlane.xlu0 %78
    %v80 = vmul.f32 %v76, %v67
    %v81 = vmul.f32 %v79, %v67
    %v82 = vadd.f32 %v80, 1e-05
    %v83 = vadd.f32 %v81, 1e-05
    %v84 = vrsqrt.pop %v82
    %v85 = vmul.f32 %v82, %v84
    %vm86 = vcmp.eq.f32.partialorder %v82, inf
    %v87 = vsel %vm86, %v82, %v85
    %vm88 = vcmp.eq.f32.partialorder %v82, 0.0
    %v89 = vand.u32 %v82, 2147483648
    %v90 = vsel %vm88, %v89, %v87
    %v91 = vrsqrt.pop %v83
    %v92 = vmul.f32 %v83, %v91
    %vm93 = vcmp.eq.f32.partialorder %v83, inf
    %v94 = vsel %vm93, %v83, %v92
    %vm95 = vcmp.eq.f32.partialorder %v83, 0.0
    %v96 = vand.u32 %v83, 2147483648
    %v97 = vsel %vm95, %v96, %v94
    %v98 = vrcp.pop %v90
    %v99 = vmul.f32 %v70, %v98
    %v100 = vrcp.pop %v97
    %v101 = vmul.f32 %v71, %v100
    %v103 = vlaneseq
    %v104 = vshrl.u32 %v103, 7
    %v105 = vsub.s32 0, %v104
    %v106 = vrot.slane %v48, %v105
    %v108 = vmul.f32 %v99, %v106
    %v109 = vmul.f32 %v101, %v106
    %v111 = vlaneseq
    %v112 = vshrl.u32 %v111, 7
    %v113 = vsub.s32 0, %v112
    %v114 = vrot.slane %v49, %v113
    %v116 = vadd.f32 %v108, %v114
    %v117 = vadd.f32 %v109, %v114
    %v118 = vpack.c.bf16 %v117, %v116
    %v119 = vld [vmem:[%s4] sm:$0xf]
    %v120 = vld [vmem:[%s4 + $0x4] sm:$0xf]
    %v121 = vld [vmem:[%s4 + $0x8] sm:$0xf]
    %v122 = vld [vmem:[%s4 + $0xc] sm:$0xf]
    %v127 = vunpack.c.l.b16 %v119
    %v128 = vunpack.c.l.b16 %v120
    %v129 = vunpack.c.l.b16 %v121
    %v130 = vunpack.c.l.b16 %v122
    %v131 = vpack.c.b16 %v128, %v127
    %v132 = vpack.c.b16 %v130, %v129
    %v136 = vsel %vm60, %v118, 0
    %138 = vmatprep.subr.bf16.mxu0 0
    %139 = vmatpush1.bf16.msra.mxu0 %v131
    %140 = vmatprep.subr.bf16.mxu0 0
    %141 = vmatpush1.bf16.msra.mxu0 %v132
    %142 = vmatprep.subr.bf16.mxu0 0
    %143 = vmatpush1.bf16.msra.mxu0 0
    %144 = vmatprep.subr.bf16.mxu0 0
    %145 = vmatpush1.bf16.msra.mxu0 0
    %146 = vmatprep.subr.bf16.mxu0 0
    %147 = vmatpush1.bf16.msra.mxu0 0
    %148 = vmatprep.subr.bf16.mxu0 0
    %149 = vmatpush1.bf16.msra.mxu0 0
    %150 = vmatprep.subr.bf16.mxu0 0
    %151 = vmatpush1.bf16.msra.mxu0 0
    %152 = vmatprep.subr.bf16.mxu0 0
    %153 = vmatpush1.bf16.msra.mxu0 0
    %154 = vmatprep.subr.bf16.mxu0 0
    %155 = vmatpush1.bf16.msra.mxu0 0
    %156 = vmatprep.subr.bf16.mxu0 0
    %157 = vmatpush1.bf16.msra.mxu0 0
    %158 = vmatprep.subr.bf16.mxu0 0
    %159 = vmatpush1.bf16.msra.mxu0 0
    %160 = vmatprep.subr.bf16.mxu0 0
    %161 = vmatpush1.bf16.msra.mxu0 0
    %162 = vmatprep.subr.bf16.mxu0 0
    %163 = vmatpush1.bf16.msra.mxu0 0
    %164 = vmatprep.subr.bf16.mxu0 0
    %165 = vmatpush1.bf16.msra.mxu0 0
    %166 = vmatprep.subr.bf16.mxu0 0
    %167 = vmatpush1.bf16.msra.mxu0 0
    %168 = vmatprep.subr.bf16.mxu0 0
    %169 = vmatpush1.bf16.msra.mxu0 0
    %170 = vmatprep.mubr.bf16.mxu0 0
    %171 = vmatmul.mubr.bf16.gmra.mrb[0].mxu0 %v136
    %v172 = vpop.f32.mrb[0].mxu0
    %v173 = vadd.f32 0.0, %v172
    %v174 = vpop.f32.mrb[0].mxu0
    %v175 = vpop.f32.mrb[0].mxu0
    %v176 = vadd.f32 0.0, %v175
    %v177 = vpop.f32.mrb[0].mxu0
    %178 = vdwg.mxu0
    %v179 = vpack.c.bf16 %v176, %v173
    %180 = vst.msk [vmem:[#allocation2] sm:$0xff] %vm60, %v179
    %v181 = vld [vmem:[%s5] sm:$0xf]
    %v182 = vld [vmem:[%s5 + $0x4] sm:$0xf]
    %v183 = vld [vmem:[%s5 + $0x8] sm:$0xf]
    %v184 = vld [vmem:[%s5 + $0xc] sm:$0xf]
    %v189 = vunpack.c.l.b16 %v181
    %v190 = vunpack.c.l.b16 %v182
    %v191 = vunpack.c.l.b16 %v183
    %v192 = vunpack.c.l.b16 %v184
    %v193 = vpack.c.b16 %v190, %v189
    %v194 = vpack.c.b16 %v192, %v191
    %197 = vmatprep.subr.bf16.mxu0 0
    %198 = vmatpush1.bf16.msra.mxu0 %v193
    %199 = vmatprep.subr.bf16.mxu0 0
    %200 = vmatpush1.bf16.msra.mxu0 %v194
    %201 = vmatprep.subr.bf16.mxu0 0
    %202 = vmatpush1.bf16.msra.mxu0 0
    %203 = vmatprep.subr.bf16.mxu0 0
    %204 = vmatpush1.bf16.msra.mxu0 0
    %205 = vmatprep.subr.bf16.mxu0 0
    %206 = vmatpush1.bf16.msra.mxu0 0
    %207 = vmatprep.subr.bf16.mxu0 0
    %208 = vmatpush1.bf16.msra.mxu0 0
    %209 = vmatprep.subr.bf16.mxu0 0
    %210 = vmatpush1.bf16.msra.mxu0 0
    %211 = vmatprep.subr.bf16.mxu0 0
    %212 = vmatpush1.bf16.msra.mxu0 0
    %213 = vmatprep.subr.bf16.mxu0 0
    %214 = vmatpush1.bf16.msra.mxu0 0
    %215 = vmatprep.subr.bf16.mxu0 0
    %216 = vmatpush1.bf16.msra.mxu0 0
    %217 = vmatprep.subr.bf16.mxu0 0
    %218 = vmatpush1.bf16.msra.mxu0 0
    %219 = vmatprep.subr.bf16.mxu0 0
    %220 = vmatpush1.bf16.msra.mxu0 0
    %221 = vmatprep.subr.bf16.mxu0 0
    %222 = vmatpush1.bf16.msra.mxu0 0
    %223 = vmatprep.subr.bf16.mxu0 0
    %224 = vmatpush1.bf16.msra.mxu0 0
    %225 = vmatprep.subr.bf16.mxu0 0
    %226 = vmatpush1.bf16.msra.mxu0 0
    %227 = vmatprep.subr.bf16.mxu0 0
    %228 = vmatpush1.bf16.msra.mxu0 0
    %229 = vmatprep.mubr.bf16.mxu0 0
    %230 = vmatmul.mubr.bf16.gmra.mrb[0].mxu0 %v136
    %v231 = vpop.f32.mrb[0].mxu0
    %v232 = vadd.f32 0.0, %v231
    %v233 = vpop.f32.mrb[0].mxu0
    %v234 = vpop.f32.mrb[0].mxu0
    %v235 = vadd.f32 0.0, %v234
    %v236 = vpop.f32.mrb[0].mxu0
    %237 = vdwg.mxu0
    %v238 = vpack.c.bf16 %v235, %v232
    %239 = vst.msk [vmem:[#allocation3] sm:$0xff] %vm60, %v238
  $region61: #{_lambda_.4} parent=0 // pred_fallthru
    _
  %s240 = smul.u32 0, 8
  %s241 = scalar_lea.vmem %s0, %s240
  %v242 = vld [vmem:[%s241] sm:$0xff]
  %v243 = vld [vmem:[%s241 + $0x8] sm:$0xff]
  %vm244 = vcmask 261120
  %v245 = vsel %vm244, %v242, 0.0
  %246 = vadd.xlane.f32.xlu0 %v245
  %v247 = vpop.xlane.xlu0 %246
  %v248 = vsel %vm244, %v243, 0.0
  %249 = vadd.xlane.f32.xlu0 %v248
  %v250 = vpop.xlane.xlu0 %249
  %v251 = vrcp.pop 32.0
  %v252 = vmul.f32 %v247, %v251
  %v253 = vmul.f32 %v250, %v251
  %v254 = vsub.f32 %v242, %v252
  %v255 = vsub.f32 %v243, %v253
  %v256 = vmul.f32 %v254, %v254
  %v257 = vmul.f32 %v255, %v255
  %v258 = vsel %vm244, %v256, 0.0
  %259 = vadd.xlane.f32.xlu0 %v258
  %v260 = vpop.xlane.xlu0 %259
  %v261 = vsel %vm244, %v257, 0.0
  %262 = vadd.xlane.f32.xlu0 %v261
  %v263 = vpop.xlane.xlu0 %262
  %v264 = vmul.f32 %v260, %v251
  %v265 = vmul.f32 %v263, %v251
  %v266 = vadd.f32 %v264, 1e-05
  %v267 = vadd.f32 %v265, 1e-05
  %v268 = vrsqrt.pop %v266
  %v269 = vmul.f32 %v266, %v268
  %vm270 = vcmp.eq.f32.partialorder %v266, inf
  %v271 = vsel %vm270, %v266, %v269
  %vm272 = vcmp.eq.f32.partialorder %v266, 0.0
  %v273 = vand.u32 %v266, 2147483648
  %v274 = vsel %vm272, %v273, %v271
  %v275 = vrsqrt.pop %v267
  %v276 = vmul.f32 %v267, %v275
  %vm277 = vcmp.eq.f32.partialorder %v267, inf
  %v278 = vsel %vm277, %v267, %v276
  %vm279 = vcmp.eq.f32.partialorder %v267, 0.0
  %v280 = vand.u32 %v267, 2147483648
  %v281 = vsel %vm279, %v280, %v278
  %v282 = vrcp.pop %v274
  %v283 = vmul.f32 %v254, %v282
  %v284 = vrcp.pop %v281
  %v285 = vmul.f32 %v255, %v284
  %v287 = vlaneseq
  %v288 = vshrl.u32 %v287, 7
  %v289 = vsub.s32 0, %v288
  %v290 = vrot.slane %v48, %v289
  %v292 = vmul.f32 %v283, %v290
  %v293 = vmul.f32 %v285, %v290
  %v295 = vlaneseq
  %v296 = vshrl.u32 %v295, 7
  %v297 = vsub.s32 0, %v296
  %v298 = vrot.slane %v49, %v297
  %v300 = vadd.f32 %v292, %v298
  %v301 = vadd.f32 %v293, %v298
  %v302 = vpack.c.bf16 %v301, %v300
  %v303 = vld [vmem:[%s3] sm:$0xf]
  %v304 = vld [vmem:[%s3 + $0x4] sm:$0xf]
  %v305 = vld [vmem:[%s3 + $0x8] sm:$0xf]
  %v306 = vld [vmem:[%s3 + $0xc] sm:$0xf]
  %v311 = vunpack.c.l.b16 %v303
  %v312 = vunpack.c.l.b16 %v304
  %v313 = vunpack.c.l.b16 %v305
  %v314 = vunpack.c.l.b16 %v306
  %v315 = vpack.c.b16 %v312, %v311
  %v316 = vpack.c.b16 %v314, %v313
  %v320 = vsel %vm244, %v302, 0
  %322 = vmatprep.subr.bf16.mxu0 0
  %323 = vmatpush1.bf16.msra.mxu0 %v315
  %324 = vmatprep.subr.bf16.mxu0 0
  %325 = vmatpush1.bf16.msra.mxu0 %v316
  %326 = vmatprep.subr.bf16.mxu0 0
  %327 = vmatpush1.bf16.msra.mxu0 0
  %328 = vmatprep.subr.bf16.mxu0 0
  %329 = vmatpush1.bf16.msra.mxu0 0
  %330 = vmatprep.subr.bf16.mxu0 0
  %331 = vmatpush1.bf16.msra.mxu0 0
  %332 = vmatprep.subr.bf16.mxu0 0
  %333 = vmatpush1.bf16.msra.mxu0 0
  %334 = vmatprep.subr.bf16.mxu0 0
  %335 = vmatpush1.bf16.msra.mxu0 0
  %336 = vmatprep.subr.bf16.mxu0 0
  %337 = vmatpush1.bf16.msra.mxu0 0
  %338 = vmatprep.subr.bf16.mxu0 0
  %339 = vmatpush1.bf16.msra.mxu0 0
  %340 = vmatprep.subr.bf16.mxu0 0
  %341 = vmatpush1.bf16.msra.mxu0 0
  %342 = vmatprep.subr.bf16.mxu0 0
  %343 = vmatpush1.bf16.msra.mxu0 0
  %344 = vmatprep.subr.bf16.mxu0 0
  %345 = vmatpush1.bf16.msra.mxu0 0
  %346 = vmatprep.subr.bf16.mxu0 0
  %347 = vmatpush1.bf16.msra.mxu0 0
  %348 = vmatprep.subr.bf16.mxu0 0
  %349 = vmatpush1.bf16.msra.mxu0 0
  %350 = vmatprep.subr.bf16.mxu0 0
  %351 = vmatpush1.bf16.msra.mxu0 0
  %352 = vmatprep.subr.bf16.mxu0 0
  %353 = vmatpush1.bf16.msra.mxu0 0
  %354 = vmatprep.mubr.bf16.mxu0 0
  %355 = vmatmul.mubr.bf16.gmra.mrb[0].mxu0 %v320
  %v356 = vpop.f32.mrb[0].mxu0
  %v357 = vadd.f32 0.0, %v356
  %v358 = vpop.f32.mrb[0].mxu0
  %v359 = vpop.f32.mrb[0].mxu0
  %v360 = vadd.f32 0.0, %v359
  %v361 = vpop.f32.mrb[0].mxu0
  %362 = vdwg.mxu0
  %v363 = vld [vmem:[#allocation2] sm:$0xff]
  %v364 = vld [vmem:[#allocation3] sm:$0xff]
  %v365 = vld [vmem:[%s6] sm:$0xf]
  %v366 = vld [vmem:[%s6 + $0x4] sm:$0xf]
  %v367 = vld [vmem:[%s6 + $0x8] sm:$0xf]
  %v368 = vld [vmem:[%s6 + $0xc] sm:$0xf]
  %v369 = vpack.c.bf16 %v357, %v357
  %vm370 = vcmask 64512
  %v372 = vsel %vm370, %v369, 0
  %v375 = vsel %vm370, %v363, 0
  %377 = vmatprep.subr.bf16.mxu0 0
  %378 = vmatpush1.bf16.xpose.msra.mxu0 %v375
  %379 = vmatprep.subr.bf16.mxu0 0
  %380 = vmatpush1.bf16.xpose.msra.mxu0 0
  %381 = vmatprep.subr.bf16.mxu0 0
  %382 = vmatpush1.bf16.xpose.msra.mxu0 0
  %383 = vmatprep.subr.bf16.mxu0 0
  %384 = vmatpush1.bf16.xpose.msra.mxu0 0
  %385 = vmatprep.subr.bf16.mxu0 0
  %386 = vmatpush1.bf16.xpose.msra.mxu0 0
  %387 = vmatprep.subr.bf16.mxu0 0
  %388 = vmatpush1.bf16.xpose.msra.mxu0 0
  %389 = vmatprep.subr.bf16.mxu0 0
  %390 = vmatpush1.bf16.xpose.msra.mxu0 0
  %391 = vmatprep.subr.bf16.mxu0 0
  %392 = vmatpush1.bf16.xpose.msra.mxu0 0
  %393 = vmatprep.subr.bf16.mxu0 0
  %394 = vmatpush1.bf16.xpose.msra.mxu0 0
  %395 = vmatprep.subr.bf16.mxu0 0
  %396 = vmatpush1.bf16.xpose.msra.mxu0 0
  %397 = vmatprep.subr.bf16.mxu0 0
  %398 = vmatpush1.bf16.xpose.msra.mxu0 0
  %399 = vmatprep.subr.bf16.mxu0 0
  %400 = vmatpush1.bf16.xpose.msra.mxu0 0
  %401 = vmatprep.subr.bf16.mxu0 0
  %402 = vmatpush1.bf16.xpose.msra.mxu0 0
  %403 = vmatprep.subr.bf16.mxu0 0
  %404 = vmatpush1.bf16.xpose.msra.mxu0 0
  %405 = vmatprep.subr.bf16.mxu0 0
  %406 = vmatpush1.bf16.xpose.msra.mxu0 0
  %407 = vmatprep.subr.bf16.mxu0 0
  %408 = vmatpush1.bf16.xpose.msra.mxu0 0
  %409 = vmatprep.mubr.bf16.mxu0 0
  %410 = vmatmul.mubr.bf16.gmra.mrb[0].mxu0 %v372
  %v411 = vpop.f32.mrb[0].mxu0
  %v412 = vadd.f32 %v53, %v411
  %v413 = vpop.f32.mrb[0].mxu0
  %v414 = vpop.f32.mrb[0].mxu0
  %v415 = vpop.f32.mrb[0].mxu0
  %416 = vdwg.mxu0
  %v417 = vsel %vm370, %v412, -inf
  %418 = vmax.xlane.f32.xlu0 %v417
  %v419 = vpop.xlane.xlu0 %418
  %v420 = vsub.f32 %v412, %v419
  %v421 = vmul.f32 %v420, 1.442695
  %v422 = vpow.pop %v421
  %v423 = vsel %vm370, %v422, 0.0
  %424 = vadd.xlane.f32.xlu0 %v423
  %v425 = vpop.xlane.xlu0 %424
  %v426 = vrcp.pop %v425
  %v427 = vmul.f32 %v422, %v426
  %v428 = vpack.c.bf16 %v427, %v427
  %v430 = vsel %vm370, %v428, 0
  %vm432 = vcmask 1043456
  %v434 = vsel %vm432, %v364, 0
  %436 = vmatprep.subr.bf16.mxu0 0
  %437 = vmatpush1.bf16.msra.mxu0 %v434
  %438 = vmatprep.subr.bf16.mxu0 0
  %439 = vmatpush1.bf16.msra.mxu0 0
  %440 = vmatprep.subr.bf16.mxu0 0
  %441 = vmatpush1.bf16.msra.mxu0 0
  %442 = vmatprep.subr.bf16.mxu0 0
  %443 = vmatpush1.bf16.msra.mxu0 0
  %444 = vmatprep.subr.bf16.mxu0 0
  %445 = vmatpush1.bf16.msra.mxu0 0
  %446 = vmatprep.subr.bf16.mxu0 0
  %447 = vmatpush1.bf16.msra.mxu0 0
  %448 = vmatprep.subr.bf16.mxu0 0
  %449 = vmatpush1.bf16.msra.mxu0 0
  %450 = vmatprep.subr.bf16.mxu0 0
  %451 = vmatpush1.bf16.msra.mxu0 0
  %452 = vmatprep.subr.bf16.mxu0 0
  %453 = vmatpush1.bf16.msra.mxu0 0
  %454 = vmatprep.subr.bf16.mxu0 0
  %455 = vmatpush1.bf16.msra.mxu0 0
  %456 = vmatprep.subr.bf16.mxu0 0
  %457 = vmatpush1.bf16.msra.mxu0 0
  %458 = vmatprep.subr.bf16.mxu0 0
  %459 = vmatpush1.bf16.msra.mxu0 0
  %460 = vmatprep.subr.bf16.mxu0 0
  %461 = vmatpush1.bf16.msra.mxu0 0
  %462 = vmatprep.subr.bf16.mxu0 0
  %463 = vmatpush1.bf16.msra.mxu0 0
  %464 = vmatprep.subr.bf16.mxu0 0
  %465 = vmatpush1.bf16.msra.mxu0 0
  %466 = vmatprep.subr.bf16.mxu0 0
  %467 = vmatpush1.bf16.msra.mxu0 0
  %468 = vmatprep.mubr.bf16.mxu0 0
  %469 = vmatmul.mubr.bf16.gmra.mrb[0].mxu0 %v430
  %v470 = vpop.f32.mrb[0].mxu0
  %v471 = vadd.f32 0.0, %v470
  %v472 = vpop.f32.mrb[0].mxu0
  %v473 = vpop.f32.mrb[0].mxu0
  %v474 = vpop.f32.mrb[0].mxu0
  %475 = vdwg.mxu0
  %v476 = vpack.c.bf16 %v471, %v471
  %478 = vrot.lane.b32.xlu0 %v369, 120
  %v479 = vpop.permute.xlu0 %478
  %481 = vrot.lane.b32.xlu0 %v363, 120
  %v482 = vpop.permute.xlu0 %481
  %v484 = vsel %vm370, %v479, 0
  %v487 = vsel %vm370, %v482, 0
  %489 = vmatprep.subr.bf16.mxu0 0
  %490 = vmatpush1.bf16.xpose.msra.mxu0 %v487
  %491 = vmatprep.subr.bf16.mxu0 0
  %492 = vmatpush1.bf16.xpose.msra.mxu0 0
  %493 = vmatprep.subr.bf16.mxu0 0
  %494 = vmatpush1.bf16.xpose.msra.mxu0 0
  %495 = vmatprep.subr.bf16.mxu0 0
  %496 = vmatpush1.bf16.xpose.msra.mxu0 0
  %497 = vmatprep.subr.bf16.mxu0 0
  %498 = vmatpush1.bf16.xpose.msra.mxu0 0
  %499 = vmatprep.subr.bf16.mxu0 0
  %500 = vmatpush1.bf16.xpose.msra.mxu0 0
  %501 = vmatprep.subr.bf16.mxu0 0
  %502 = vmatpush1.bf16.xpose.msra.mxu0 0
  %503 = vmatprep.subr.bf16.mxu0 0
  %504 = vmatpush1.bf16.xpose.msra.mxu0 0
  %505 = vmatprep.subr.bf16.mxu0 0
  %506 = vmatpush1.bf16.xpose.msra.mxu0 0
  %507 = vmatprep.subr.bf16.mxu0 0
  %508 = vmatpush1.bf16.xpose.msra.mxu0 0
  %509 = vmatprep.subr.bf16.mxu0 0
  %510 = vmatpush1.bf16.xpose.msra.mxu0 0
  %511 = vmatprep.subr.bf16.mxu0 0
  %512 = vmatpush1.bf16.xpose.msra.mxu0 0
  %513 = vmatprep.subr.bf16.mxu0 0
  %514 = vmatpush1.bf16.xpose.msra.mxu0 0
  %515 = vmatprep.subr.bf16.mxu0 0
  %516 = vmatpush1.bf16.xpose.msra.mxu0 0
  %517 = vmatprep.subr.bf16.mxu0 0
  %518 = vmatpush1.bf16.xpose.msra.mxu0 0
  %519 = vmatprep.subr.bf16.mxu0 0
  %520 = vmatpush1.bf16.xpose.msra.mxu0 0
  %521 = vmatprep.mubr.bf16.mxu0 0
  %522 = vmatmul.mubr.bf16.gmra.mrb[0].mxu0 %v484
  %v523 = vpop.f32.mrb[0].mxu0
  %v524 = vadd.f32 %v53, %v523
  %v525 = vpop.f32.mrb[0].mxu0
  %v526 = vpop.f32.mrb[0].mxu0
  %v527 = vpop.f32.mrb[0].mxu0
  %528 = vdwg.mxu0
  %v529 = vsel %vm370, %v524, -inf
  %530 = vmax.xlane.f32.xlu0 %v529
  %v531 = vpop.xlane.xlu0 %530
  %v532 = vsub.f32 %v524, %v531
  %v533 = vmul.f32 %v532, 1.442695
  %v534 = vpow.pop %v533
  %v535 = vsel %vm370, %v534, 0.0
  %536 = vadd.xlane.f32.xlu0 %v535
  %v537 = vpop.xlane.xlu0 %536
  %v538 = vrcp.pop %v537
  %v539 = vmul.f32 %v534, %v538
  %v540 = vpack.c.bf16 %v539, %v539
  %542 = vrot.lane.b32.xlu0 %v364, 120
  %v543 = vpop.permute.xlu0 %542
  %v545 = vsel %vm370, %v540, 0
  %v548 = vsel %vm432, %v543, 0
  %550 = vmatprep.subr.bf16.mxu0 0
  %551 = vmatpush1.bf16.msra.mxu0 %v548
  %552 = vmatprep.subr.bf16.mxu0 0
  %553 = vmatpush1.bf16.msra.mxu0 0
  %554 = vmatprep.subr.bf16.mxu0 0
  %555 = vmatpush1.bf16.msra.mxu0 0
  %556 = vmatprep.subr.bf16.mxu0 0
  %557 = vmatpush1.bf16.msra.mxu0 0
  %558 = vmatprep.subr.bf16.mxu0 0
  %559 = vmatpush1.bf16.msra.mxu0 0
  %560 = vmatprep.subr.bf16.mxu0 0
  %561 = vmatpush1.bf16.msra.mxu0 0
  %562 = vmatprep.subr.bf16.mxu0 0
  %563 = vmatpush1.bf16.msra.mxu0 0
  %564 = vmatprep.subr.bf16.mxu0 0
  %565 = vmatpush1.bf16.msra.mxu0 0
  %566 = vmatprep.subr.bf16.mxu0 0
  %567 = vmatpush1.bf16.msra.mxu0 0
  %568 = vmatprep.subr.bf16.mxu0 0
  %569 = vmatpush1.bf16.msra.mxu0 0
  %570 = vmatprep.subr.bf16.mxu0 0
  %571 = vmatpush1.bf16.msra.mxu0 0
  %572 = vmatprep.subr.bf16.mxu0 0
  %573 = vmatpush1.bf16.msra.mxu0 0
  %574 = vmatprep.subr.bf16.mxu0 0
  %575 = vmatpush1.bf16.msra.mxu0 0
  %576 = vmatprep.subr.bf16.mxu0 0
  %577 = vmatpush1.bf16.msra.mxu0 0
  %578 = vmatprep.subr.bf16.mxu0 0
  %579 = vmatpush1.bf16.msra.mxu0 0
  %580 = vmatprep.subr.bf16.mxu0 0
  %581 = vmatpush1.bf16.msra.mxu0 0
  %582 = vmatprep.mubr.bf16.mxu0 0
  %583 = vmatmul.mubr.bf16.gmra.mrb[0].mxu0 %v545
  %v584 = vpop.f32.mrb[0].mxu0
  %v585 = vadd.f32 0.0, %v584
  %v586 = vpop.f32.mrb[0].mxu0
  %v587 = vpop.f32.mrb[0].mxu0
  %v588 = vpop.f32.mrb[0].mxu0
  %589 = vdwg.mxu0
  %v590 = vpack.c.bf16 %v585, %v585
  %v592 = vsel %vm370, %v590, 0
  %v595 = vsel %vm432, %v366, 0
  %597 = vmatprep.subr.bf16.mxu0 0
  %598 = vmatpush1.bf16.msra.mxu0 %v595
  %599 = vmatprep.subr.bf16.mxu0 0
  %600 = vmatpush1.bf16.msra.mxu0 0
  %601 = vmatprep.subr.bf16.mxu0 0
  %602 = vmatpush1.bf16.msra.mxu0 0
  %603 = vmatprep.subr.bf16.mxu0 0
  %604 = vmatpush1.bf16.msra.mxu0 0
  %605 = vmatprep.subr.bf16.mxu0 0
  %606 = vmatpush1.bf16.msra.mxu0 0
  %607 = vmatprep.subr.bf16.mxu0 0
  %608 = vmatpush1.bf16.msra.mxu0 0
  %609 = vmatprep.subr.bf16.mxu0 0
  %610 = vmatpush1.bf16.msra.mxu0 0
  %611 = vmatprep.subr.bf16.mxu0 0
  %612 = vmatpush1.bf16.msra.mxu0 0
  %613 = vmatprep.subr.bf16.mxu0 0
  %614 = vmatpush1.bf16.msra.mxu0 0
  %615 = vmatprep.subr.bf16.mxu0 0
  %616 = vmatpush1.bf16.msra.mxu0 0
  %617 = vmatprep.subr.bf16.mxu0 0
  %618 = vmatpush1.bf16.msra.mxu0 0
  %619 = vmatprep.subr.bf16.mxu0 0
  %620 = vmatpush1.bf16.msra.mxu0 0
  %621 = vmatprep.subr.bf16.mxu0 0
  %622 = vmatpush1.bf16.msra.mxu0 0
  %623 = vmatprep.subr.bf16.mxu0 0
  %624 = vmatpush1.bf16.msra.mxu0 0
  %625 = vmatprep.subr.bf16.mxu0 0
  %626 = vmatpush1.bf16.msra.mxu0 0
  %627 = vmatprep.subr.bf16.mxu0 0
  %628 = vmatpush1.bf16.msra.mxu0 0
  %629 = vmatprep.mubr.bf16.mxu0 0
  %630 = vmatmul.mubr.bf16.gmra.mrb[0].mxu0 %v592
  %v631 = vpop.f32.mrb[0].mxu0
  %v632 = vadd.f32 0.0, %v631
  %v633 = vpop.f32.mrb[0].mxu0
  %v634 = vpop.f32.mrb[0].mxu0
  %v635 = vpop.f32.mrb[0].mxu0
  %636 = vdwg.mxu0
  %v638 = vsel %vm370, %v476, 0
  %v641 = vsel %vm432, %v365, 0
  %643 = vmatprep.subr.bf16.mxu0 0
  %644 = vmatpush1.bf16.msra.mxu0 %v641
  %645 = vmatprep.subr.bf16.mxu0 0
  %646 = vmatpush1.bf16.msra.mxu0 0
  %647 = vmatprep.subr.bf16.mxu0 0
  %648 = vmatpush1.bf16.msra.mxu0 0
  %649 = vmatprep.subr.bf16.mxu0 0
  %650 = vmatpush1.bf16.msra.mxu0 0
  %651 = vmatprep.subr.bf16.mxu0 0
  %652 = vmatpush1.bf16.msra.mxu0 0
  %653 = vmatprep.subr.bf16.mxu0 0
  %654 = vmatpush1.bf16.msra.mxu0 0
  %655 = vmatprep.subr.bf16.mxu0 0
  %656 = vmatpush1.bf16.msra.mxu0 0
  %657 = vmatprep.subr.bf16.mxu0 0
  %658 = vmatpush1.bf16.msra.mxu0 0
  %659 = vmatprep.subr.bf16.mxu0 0
  %660 = vmatpush1.bf16.msra.mxu0 0
  %661 = vmatprep.subr.bf16.mxu0 0
  %662 = vmatpush1.bf16.msra.mxu0 0
  %663 = vmatprep.subr.bf16.mxu0 0
  %664 = vmatpush1.bf16.msra.mxu0 0
  %665 = vmatprep.subr.bf16.mxu0 0
  %666 = vmatpush1.bf16.msra.mxu0 0
  %667 = vmatprep.subr.bf16.mxu0 0
  %668 = vmatpush1.bf16.msra.mxu0 0
  %669 = vmatprep.subr.bf16.mxu0 0
  %670 = vmatpush1.bf16.msra.mxu0 0
  %671 = vmatprep.subr.bf16.mxu0 0
  %672 = vmatpush1.bf16.msra.mxu0 0
  %673 = vmatprep.subr.bf16.mxu0 0
  %674 = vmatpush1.bf16.msra.mxu0 0
  %675 = vmatprep.mubr.bf16.mxu0 0
  %676 = vmatmul.mubr.bf16.gmra.mrb[0].mxu0 %v638
  %v677 = vpop.f32.mrb[0].mxu0
  %v678 = vadd.f32 %v632, %v677
  %v679 = vpop.f32.mrb[0].mxu0
  %v680 = vpop.f32.mrb[0].mxu0
  %v681 = vpop.f32.mrb[0].mxu0
  %682 = vdwg.mxu0
  %683 = vrot.lane.b32.xlu0 %v369, 112
  %v684 = vpop.permute.xlu0 %683
  %685 = vrot.lane.b32.xlu0 %v363, 112
  %v686 = vpop.permute.xlu0 %685
  %v688 = vsel %vm370, %v684, 0
  %v691 = vsel %vm370, %v686, 0
  %693 = vmatprep.subr.bf16.mxu0 0
  %694 = vmatpush1.bf16.xpose.msra.mxu0 %v691
  %695 = vmatprep.subr.bf16.mxu0 0
  %696 = vmatpush1.bf16.xpose.msra.mxu0 0
  %697 = vmatprep.subr.bf16.mxu0 0
  %698 = vmatpush1.bf16.xpose.msra.mxu0 0
  %699 = vmatprep.subr.bf16.mxu0 0
  %700 = vmatpush1.bf16.xpose.msra.mxu0 0
  %701 = vmatprep.subr.bf16.mxu0 0
  %702 = vmatpush1.bf16.xpose.msra.mxu0 0
  %703 = vmatprep.subr.bf16.mxu0 0
  %704 = vmatpush1.bf16.xpose.msra.mxu0 0
  %705 = vmatprep.subr.bf16.mxu0 0
  %706 = vmatpush1.bf16.xpose.msra.mxu0 0
  %707 = vmatprep.subr.bf16.mxu0 0
  %708 = vmatpush1.bf16.xpose.msra.mxu0 0
  %709 = vmatprep.subr.bf16.mxu0 0
  %710 = vmatpush1.bf16.xpose.msra.mxu0 0
  %711 = vmatprep.subr.bf16.mxu0 0
  %712 = vmatpush1.bf16.xpose.msra.mxu0 0
  %713 = vmatprep.subr.bf16.mxu0 0
  %714 = vmatpush1.bf16.xpose.msra.mxu0 0
  %715 = vmatprep.subr.bf16.mxu0 0
  %716 = vmatpush1.bf16.xpose.msra.mxu0 0
  %717 = vmatprep.subr.bf16.mxu0 0
  %718 = vmatpush1.bf16.xpose.msra.mxu0 0
  %719 = vmatprep.subr.bf16.mxu0 0
  %720 = vmatpush1.bf16.xpose.msra.mxu0 0
  %721 = vmatprep.subr.bf16.mxu0 0
  %722 = vmatpush1.bf16.xpose.msra.mxu0 0
  %723 = vmatprep.subr.bf16.mxu0 0
  %724 = vmatpush1.bf16.xpose.msra.mxu0 0
  %725 = vmatprep.mubr.bf16.mxu0 0
  %726 = vmatmul.mubr.bf16.gmra.mrb[0].mxu0 %v688
  %v727 = vpop.f32.mrb[0].mxu0
  %v728 = vadd.f32 %v53, %v727
  %v729 = vpop.f32.mrb[0].mxu0
  %v730 = vpop.f32.mrb[0].mxu0
  %v731 = vpop.f32.mrb[0].mxu0
  %732 = vdwg.mxu0
  %v733 = vsel %vm370, %v728, -inf
  %734 = vmax.xlane.f32.xlu0 %v733
  %v735 = vpop.xlane.xlu0 %734
  %v736 = vsub.f32 %v728, %v735
  %v737 = vmul.f32 %v736, 1.442695
  %v738 = vpow.pop %v737
  %v739 = vsel %vm370, %v738, 0.0
  %740 = vadd.xlane.f32.xlu0 %v739
  %v741 = vpop.xlane.xlu0 %740
  %v742 = vrcp.pop %v741
  %v743 = vmul.f32 %v738, %v742
  %v744 = vpack.c.bf16 %v743, %v743
  %745 = vrot.lane.b32.xlu0 %v364, 112
  %v746 = vpop.permute.xlu0 %745
  %v748 = vsel %vm370, %v744, 0
  %v751 = vsel %vm432, %v746, 0
  %753 = vmatprep.subr.bf16.mxu0 0
  %754 = vmatpush1.bf16.msra.mxu0 %v751
  %755 = vmatprep.subr.bf16.mxu0 0
  %756 = vmatpush1.bf16.msra.mxu0 0
  %757 = vmatprep.subr.bf16.mxu0 0
  %758 = vmatpush1.bf16.msra.mxu0 0
  %759 = vmatprep.subr.bf16.mxu0 0
  %760 = vmatpush1.bf16.msra.mxu0 0
  %761 = vmatprep.subr.bf16.mxu0 0
  %762 = vmatpush1.bf16.msra.mxu0 0
  %763 = vmatprep.subr.bf16.mxu0 0
  %764 = vmatpush1.bf16.msra.mxu0 0
  %765 = vmatprep.subr.bf16.mxu0 0
  %766 = vmatpush1.bf16.msra.mxu0 0
  %767 = vmatprep.subr.bf16.mxu0 0
  %768 = vmatpush1.bf16.msra.mxu0 0
  %769 = vmatprep.subr.bf16.mxu0 0
  %770 = vmatpush1.bf16.msra.mxu0 0
  %771 = vmatprep.subr.bf16.mxu0 0
  %772 = vmatpush1.bf16.msra.mxu0 0
  %773 = vmatprep.subr.bf16.mxu0 0
  %774 = vmatpush1.bf16.msra.mxu0 0
  %775 = vmatprep.subr.bf16.mxu0 0
  %776 = vmatpush1.bf16.msra.mxu0 0
  %777 = vmatprep.subr.bf16.mxu0 0
  %778 = vmatpush1.bf16.msra.mxu0 0
  %779 = vmatprep.subr.bf16.mxu0 0
  %780 = vmatpush1.bf16.msra.mxu0 0
  %781 = vmatprep.subr.bf16.mxu0 0
  %782 = vmatpush1.bf16.msra.mxu0 0
  %783 = vmatprep.subr.bf16.mxu0 0
  %784 = vmatpush1.bf16.msra.mxu0 0
  %785 = vmatprep.mubr.bf16.mxu0 0
  %786 = vmatmul.mubr.bf16.gmra.mrb[0].mxu0 %v748
  %v787 = vpop.f32.mrb[0].mxu0
  %v788 = vadd.f32 0.0, %v787
  %v789 = vpop.f32.mrb[0].mxu0
  %v790 = vpop.f32.mrb[0].mxu0
  %v791 = vpop.f32.mrb[0].mxu0
  %792 = vdwg.mxu0
  %v793 = vpack.c.bf16 %v788, %v788
  %v795 = vsel %vm370, %v793, 0
  %v798 = vsel %vm432, %v367, 0
  %800 = vmatprep.subr.bf16.mxu0 0
  %801 = vmatpush1.bf16.msra.mxu0 %v798
  %802 = vmatprep.subr.bf16.mxu0 0
  %803 = vmatpush1.bf16.msra.mxu0 0
  %804 = vmatprep.subr.bf16.mxu0 0
  %805 = vmatpush1.bf16.msra.mxu0 0
  %806 = vmatprep.subr.bf16.mxu0 0
  %807 = vmatpush1.bf16.msra.mxu0 0
  %808 = vmatprep.subr.bf16.mxu0 0
  %809 = vmatpush1.bf16.msra.mxu0 0
  %810 = vmatprep.subr.bf16.mxu0 0
  %811 = vmatpush1.bf16.msra.mxu0 0
  %812 = vmatprep.subr.bf16.mxu0 0
  %813 = vmatpush1.bf16.msra.mxu0 0
  %814 = vmatprep.subr.bf16.mxu0 0
  %815 = vmatpush1.bf16.msra.mxu0 0
  %816 = vmatprep.subr.bf16.mxu0 0
  %817 = vmatpush1.bf16.msra.mxu0 0
  %818 = vmatprep.subr.bf16.mxu0 0
  %819 = vmatpush1.bf16.msra.mxu0 0
  %820 = vmatprep.subr.bf16.mxu0 0
  %821 = vmatpush1.bf16.msra.mxu0 0
  %822 = vmatprep.subr.bf16.mxu0 0
  %823 = vmatpush1.bf16.msra.mxu0 0
  %824 = vmatprep.subr.bf16.mxu0 0
  %825 = vmatpush1.bf16.msra.mxu0 0
  %826 = vmatprep.subr.bf16.mxu0 0
  %827 = vmatpush1.bf16.msra.mxu0 0
  %828 = vmatprep.subr.bf16.mxu0 0
  %829 = vmatpush1.bf16.msra.mxu0 0
  %830 = vmatprep.subr.bf16.mxu0 0
  %831 = vmatpush1.bf16.msra.mxu0 0
  %832 = vmatprep.mubr.bf16.mxu0 0
  %833 = vmatmul.mubr.bf16.gmra.mrb[0].mxu0 %v795
  %v834 = vpop.f32.mrb[0].mxu0
  %v835 = vadd.f32 0.0, %v834
  %v836 = vpop.f32.mrb[0].mxu0
  %v837 = vpop.f32.mrb[0].mxu0
  %v838 = vpop.f32.mrb[0].mxu0
  %839 = vdwg.mxu0
  %v840 = vadd.f32 %v678, %v835
  %841 = vrot.lane.b32.xlu0 %v369, 104
  %v842 = vpop.permute.xlu0 %841
  %843 = vrot.lane.b32.xlu0 %v363, 104
  %v844 = vpop.permute.xlu0 %843
  %v846 = vsel %vm370, %v842, 0
  %v849 = vsel %vm370, %v844, 0
  %851 = vmatprep.subr.bf16.mxu0 0
  %852 = vmatpush1.bf16.xpose.msra.mxu0 %v849
  %853 = vmatprep.subr.bf16.mxu0 0
  %854 = vmatpush1.bf16.xpose.msra.mxu0 0
  %855 = vmatprep.subr.bf16.mxu0 0
  %856 = vmatpush1.bf16.xpose.msra.mxu0 0
  %857 = vmatprep.subr.bf16.mxu0 0
  %858 = vmatpush1.bf16.xpose.msra.mxu0 0
  %859 = vmatprep.subr.bf16.mxu0 0
  %860 = vmatpush1.bf16.xpose.msra.mxu0 0
  %861 = vmatprep.subr.bf16.mxu0 0
  %862 = vmatpush1.bf16.xpose.msra.mxu0 0
  %863 = vmatprep.subr.bf16.mxu0 0
  %864 = vmatpush1.bf16.xpose.msra.mxu0 0
  %865 = vmatprep.subr.bf16.mxu0 0
  %866 = vmatpush1.bf16.xpose.msra.mxu0 0
  %867 = vmatprep.subr.bf16.mxu0 0
  %868 = vmatpush1.bf16.xpose.msra.mxu0 0
  %869 = vmatprep.subr.bf16.mxu0 0
  %870 = vmatpush1.bf16.xpose.msra.mxu0 0
  %871 = vmatprep.subr.bf16.mxu0 0
  %872 = vmatpush1.bf16.xpose.msra.mxu0 0
  %873 = vmatprep.subr.bf16.mxu0 0
  %874 = vmatpush1.bf16.xpose.msra.mxu0 0
  %875 = vmatprep.subr.bf16.mxu0 0
  %876 = vmatpush1.bf16.xpose.msra.mxu0 0
  %877 = vmatprep.subr.bf16.mxu0 0
  %878 = vmatpush1.bf16.xpose.msra.mxu0 0
  %879 = vmatprep.subr.bf16.mxu0 0
  %880 = vmatpush1.bf16.xpose.msra.mxu0 0
  %881 = vmatprep.subr.bf16.mxu0 0
  %882 = vmatpush1.bf16.xpose.msra.mxu0 0
  %883 = vmatprep.mubr.bf16.mxu0 0
  %884 = vmatmul.mubr.bf16.gmra.mrb[0].mxu0 %v846
  %v885 = vpop.f32.mrb[0].mxu0
  %v886 = vadd.f32 %v53, %v885
  %v887 = vpop.f32.mrb[0].mxu0
  %v888 = vpop.f32.mrb[0].mxu0
  %v889 = vpop.f32.mrb[0].mxu0
  %890 = vdwg.mxu0
  %v891 = vsel %vm370, %v886, -inf
  %892 = vmax.xlane.f32.xlu0 %v891
  %v893 = vpop.xlane.xlu0 %892
  %v894 = vsub.f32 %v886, %v893
  %v895 = vmul.f32 %v894, 1.442695
  %v896 = vpow.pop %v895
  %v897 = vsel %vm370, %v896, 0.0
  %898 = vadd.xlane.f32.xlu0 %v897
  %v899 = vpop.xlane.xlu0 %898
  %v900 = vrcp.pop %v899
  %v901 = vmul.f32 %v896, %v900
  %v902 = vpack.c.bf16 %v901, %v901
  %903 = vrot.lane.b32.xlu0 %v364, 104
  %v904 = vpop.permute.xlu0 %903
  %v906 = vsel %vm370, %v902, 0
  %v909 = vsel %vm432, %v904, 0
  %911 = vmatprep.subr.bf16.mxu0 0
  %912 = vmatpush1.bf16.msra.mxu0 %v909
  %913 = vmatprep.subr.bf16.mxu0 0
  %914 = vmatpush1.bf16.msra.mxu0 0
  %915 = vmatprep.subr.bf16.mxu0 0
  %916 = vmatpush1.bf16.msra.mxu0 0
  %917 = vmatprep.subr.bf16.mxu0 0
  %918 = vmatpush1.bf16.msra.mxu0 0
  %919 = vmatprep.subr.bf16.mxu0 0
  %920 = vmatpush1.bf16.msra.mxu0 0
  %921 = vmatprep.subr.bf16.mxu0 0
  %922 = vmatpush1.bf16.msra.mxu0 0
  %923 = vmatprep.subr.bf16.mxu0 0
  %924 = vmatpush1.bf16.msra.mxu0 0
  %925 = vmatprep.subr.bf16.mxu0 0
  %926 = vmatpush1.bf16.msra.mxu0 0
  %927 = vmatprep.subr.bf16.mxu0 0
  %928 = vmatpush1.bf16.msra.mxu0 0
  %929 = vmatprep.subr.bf16.mxu0 0
  %930 = vmatpush1.bf16.msra.mxu0 0
  %931 = vmatprep.subr.bf16.mxu0 0
  %932 = vmatpush1.bf16.msra.mxu0 0
  %933 = vmatprep.subr.bf16.mxu0 0
  %934 = vmatpush1.bf16.msra.mxu0 0
  %935 = vmatprep.subr.bf16.mxu0 0
  %936 = vmatpush1.bf16.msra.mxu0 0
  %937 = vmatprep.subr.bf16.mxu0 0
  %938 = vmatpush1.bf16.msra.mxu0 0
  %939 = vmatprep.subr.bf16.mxu0 0
  %940 = vmatpush1.bf16.msra.mxu0 0
  %941 = vmatprep.subr.bf16.mxu0 0
  %942 = vmatpush1.bf16.msra.mxu0 0
  %943 = vmatprep.mubr.bf16.mxu0 0
  %944 = vmatmul.mubr.bf16.gmra.mrb[0].mxu0 %v906
  %v945 = vpop.f32.mrb[0].mxu0
  %v946 = vadd.f32 0.0, %v945
  %v947 = vpop.f32.mrb[0].mxu0
  %v948 = vpop.f32.mrb[0].mxu0
  %v949 = vpop.f32.mrb[0].mxu0
  %950 = vdwg.mxu0
  %v951 = vpack.c.bf16 %v946, %v946
  %v953 = vsel %vm370, %v951, 0
  %v956 = vsel %vm432, %v368, 0
  %958 = vmatprep.subr.bf16.mxu0 0
  %959 = vmatpush1.bf16.msra.mxu0 %v956
  %960 = vmatprep.subr.bf16.mxu0 0
  %961 = vmatpush1.bf16.msra.mxu0 0
  %962 = vmatprep.subr.bf16.mxu0 0
  %963 = vmatpush1.bf16.msra.mxu0 0
  %964 = vmatprep.subr.bf16.mxu0 0
  %965 = vmatpush1.bf16.msra.mxu0 0
  %966 = vmatprep.subr.bf16.mxu0 0
  %967 = vmatpush1.bf16.msra.mxu0 0
  %968 = vmatprep.subr.bf16.mxu0 0
  %969 = vmatpush1.bf16.msra.mxu0 0
  %970 = vmatprep.subr.bf16.mxu0 0
  %971 = vmatpush1.bf16.msra.mxu0 0
  %972 = vmatprep.subr.bf16.mxu0 0
  %973 = vmatpush1.bf16.msra.mxu0 0
  %974 = vmatprep.subr.bf16.mxu0 0
  %975 = vmatpush1.bf16.msra.mxu0 0
  %976 = vmatprep.subr.bf16.mxu0 0
  %977 = vmatpush1.bf16.msra.mxu0 0
  %978 = vmatprep.subr.bf16.mxu0 0
  %979 = vmatpush1.bf16.msra.mxu0 0
  %980 = vmatprep.subr.bf16.mxu0 0
  %981 = vmatpush1.bf16.msra.mxu0 0
  %982 = vmatprep.subr.bf16.mxu0 0
  %983 = vmatpush1.bf16.msra.mxu0 0
  %984 = vmatprep.subr.bf16.mxu0 0
  %985 = vmatpush1.bf16.msra.mxu0 0
  %986 = vmatprep.subr.bf16.mxu0 0
  %987 = vmatpush1.bf16.msra.mxu0 0
  %988 = vmatprep.subr.bf16.mxu0 0
  %989 = vmatpush1.bf16.msra.mxu0 0
  %990 = vmatprep.mubr.bf16.mxu0 0
  %991 = vmatmul.mubr.bf16.gmra.mrb[0].mxu0 %v953
  %v992 = vpop.f32.mrb[0].mxu0
  %v993 = vadd.f32 0.0, %v992
  %v994 = vpop.f32.mrb[0].mxu0
  %v995 = vpop.f32.mrb[0].mxu0
  %v996 = vpop.f32.mrb[0].mxu0
  %997 = vdwg.mxu0
  %v998 = vadd.f32 %v840, %v993
  %v999 = vpack.c.bf16 %v360, %v360
  %v1000 = vrot.slane %v363, 4
  %v1002 = vsel %vm370, %v999, 0
  %v1005 = vsel %vm370, %v1000, 0
  %1007 = vmatprep.subr.bf16.mxu0 0
  %1008 = vmatpush1.bf16.xpose.msra.mxu0 %v1005
  %1009 = vmatprep.subr.bf16.mxu0 0
  %1010 = vmatpush1.bf16.xpose.msra.mxu0 0
  %1011 = vmatprep.subr.bf16.mxu0 0
  %1012 = vmatpush1.bf16.xpose.msra.mxu0 0
  %1013 = vmatprep.subr.bf16.mxu0 0
  %1014 = vmatpush1.bf16.xpose.msra.mxu0 0
  %1015 = vmatprep.subr.bf16.mxu0 0
  %1016 = vmatpush1.bf16.xpose.msra.mxu0 0
  %1017 = vmatprep.subr.bf16.mxu0 0
  %1018 = vmatpush1.bf16.xpose.msra.mxu0 0
  %1019 = vmatprep.subr.bf16.mxu0 0
  %1020 = vmatpush1.bf16.xpose.msra.mxu0 0
  %1021 = vmatprep.subr.bf16.mxu0 0
  %1022 = vmatpush1.bf16.xpose.msra.mxu0 0
  %1023 = vmatprep.subr.bf16.mxu0 0
  %1024 = vmatpush1.bf16.xpose.msra.mxu0 0
  %1025 = vmatprep.subr.bf16.mxu0 0
  %1026 = vmatpush1.bf16.xpose.msra.mxu0 0
  %1027 = vmatprep.subr.bf16.mxu0 0
  %1028 = vmatpush1.bf16.xpose.msra.mxu0 0
  %1029 = vmatprep.subr.bf16.mxu0 0
  %1030 = vmatpush1.bf16.xpose.msra.mxu0 0
  %1031 = vmatprep.subr.bf16.mxu0 0
  %1032 = vmatpush1.bf16.xpose.msra.mxu0 0
  %1033 = vmatprep.subr.bf16.mxu0 0
  %1034 = vmatpush1.bf16.xpose.msra.mxu0 0
  %1035 = vmatprep.subr.bf16.mxu0 0
  %1036 = vmatpush1.bf16.xpose.msra.mxu0 0
  %1037 = vmatprep.subr.bf16.mxu0 0
  %1038 = vmatpush1.bf16.xpose.msra.mxu0 0
  %1039 = vmatprep.mubr.bf16.mxu0 0
  %1040 = vmatmul.mubr.bf16.gmra.mrb[0].mxu0 %v1002
  %v1041 = vpop.f32.mrb[0].mxu0
  %v1042 = vadd.f32 %v53, %v1041
  %v1043 = vpop.f32.mrb[0].mxu0
  %v1044 = vpop.f32.mrb[0].mxu0
  %v1045 = vpop.f32.mrb[0].mxu0
  %1046 = vdwg.mxu0
  %v1047 = vsel %vm370, %v1042, -inf
  %1048 = vmax.xlane.f32.xlu0 %v1047
  %v1049 = vpop.xlane.xlu0 %1048
  %v1050 = vsub.f32 %v1042, %v1049
  %v1051 = vmul.f32 %v1050, 1.442695
  %v1052 = vpow.pop %v1051
  %v1053 = vsel %vm370, %v1052, 0.0
  %1054 = vadd.xlane.f32.xlu0 %v1053
  %v1055 = vpop.xlane.xlu0 %1054
  %v1056 = vrcp.pop %v1055
  %v1057 = vmul.f32 %v1052, %v1056
  %v1058 = vpack.c.bf16 %v1057, %v1057
  %v1059 = vrot.slane %v364, 4
  %v1061 = vsel %vm370, %v1058, 0
  %v1064 = vsel %vm432, %v1059, 0
  %1066 = vmatprep.subr.bf16.mxu0 0
  %1067 = vmatpush1.bf16.msra.mxu0 %v1064
  %1068 = vmatprep.subr.bf16.mxu0 0
  %1069 = vmatpush1.bf16.msra.mxu0 0
  %1070 = vmatprep.subr.bf16.mxu0 0
  %1071 = vmatpush1.bf16.msra.mxu0 0
  %1072 = vmatprep.subr.bf16.mxu0 0
  %1073 = vmatpush1.bf16.msra.mxu0 0
  %1074 = vmatprep.subr.bf16.mxu0 0
  %1075 = vmatpush1.bf16.msra.mxu0 0
  %1076 = vmatprep.subr.bf16.mxu0 0
  %1077 = vmatpush1.bf16.msra.mxu0 0
  %1078 = vmatprep.subr.bf16.mxu0 0
  %1079 = vmatpush1.bf16.msra.mxu0 0
  %1080 = vmatprep.subr.bf16.mxu0 0
  %1081 = vmatpush1.bf16.msra.mxu0 0
  %1082 = vmatprep.subr.bf16.mxu0 0
  %1083 = vmatpush1.bf16.msra.mxu0 0
  %1084 = vmatprep.subr.bf16.mxu0 0
  %1085 = vmatpush1.bf16.msra.mxu0 0
  %1086 = vmatprep.subr.bf16.mxu0 0
  %1087 = vmatpush1.bf16.msra.mxu0 0
  %1088 = vmatprep.subr.bf16.mxu0 0
  %1089 = vmatpush1.bf16.msra.mxu0 0
  %1090 = vmatprep.subr.bf16.mxu0 0
  %1091 = vmatpush1.bf16.msra.mxu0 0
  %1092 = vmatprep.subr.bf16.mxu0 0
  %1093 = vmatpush1.bf16.msra.mxu0 0
  %1094 = vmatprep.subr.bf16.mxu0 0
  %1095 = vmatpush1.bf16.msra.mxu0 0
  %1096 = vmatprep.subr.bf16.mxu0 0
  %1097 = vmatpush1.bf16.msra.mxu0 0
  %1098 = vmatprep.mubr.bf16.mxu0 0
  %1099 = vmatmul.mubr.bf16.gmra.mrb[0].mxu0 %v1061
  %v1100 = vpop.f32.mrb[0].mxu0
  %v1101 = vadd.f32 0.0, %v1100
  %v1102 = vpop.f32.mrb[0].mxu0
  %v1103 = vpop.f32.mrb[0].mxu0
  %v1104 = vpop.f32.mrb[0].mxu0
  %1105 = vdwg.mxu0
  %v1106 = vpack.c.bf16 %v1101, %v1101
  %1108 = vrot.lane.b32.xlu0 %v999, 120
  %v1109 = vpop.permute.xlu0 %1108
  %1110 = vrot.lane.b32.xlu0 %v1000, 120
  %v1111 = vpop.permute.xlu0 %1110
  %v1113 = vsel %vm370, %v1109, 0
  %v1116 = vsel %vm370, %v1111, 0
  %1118 = vmatprep.subr.bf16.mxu0 0
  %1119 = vmatpush1.bf16.xpose.msra.mxu0 %v1116
  %1120 = vmatprep.subr.bf16.mxu0 0
  %1121 = vmatpush1.bf16.xpose.msra.mxu0 0
  %1122 = vmatprep.subr.bf16.mxu0 0
  %1123 = vmatpush1.bf16.xpose.msra.mxu0 0
  %1124 = vmatprep.subr.bf16.mxu0 0
  %1125 = vmatpush1.bf16.xpose.msra.mxu0 0
  %1126 = vmatprep.subr.bf16.mxu0 0
  %1127 = vmatpush1.bf16.xpose.msra.mxu0 0
  %1128 = vmatprep.subr.bf16.mxu0 0
  %1129 = vmatpush1.bf16.xpose.msra.mxu0 0
  %1130 = vmatprep.subr.bf16.mxu0 0
  %1131 = vmatpush1.bf16.xpose.msra.mxu0 0
  %1132 = vmatprep.subr.bf16.mxu0 0
  %1133 = vmatpush1.bf16.xpose.msra.mxu0 0
  %1134 = vmatprep.subr.bf16.mxu0 0
  %1135 = vmatpush1.bf16.xpose.msra.mxu0 0
  %1136 = vmatprep.subr.bf16.mxu0 0
  %1137 = vmatpush1.bf16.xpose.msra.mxu0 0
  %1138 = vmatprep.subr.bf16.mxu0 0
  %1139 = vmatpush1.bf16.xpose.msra.mxu0 0
  %1140 = vmatprep.subr.bf16.mxu0 0
  %1141 = vmatpush1.bf16.xpose.msra.mxu0 0
  %1142 = vmatprep.subr.bf16.mxu0 0
  %1143 = vmatpush1.bf16.xpose.msra.mxu0 0
  %1144 = vmatprep.subr.bf16.mxu0 0
  %1145 = vmatpush1.bf16.xpose.msra.mxu0 0
  %1146 = vmatprep.subr.bf16.mxu0 0
  %1147 = vmatpush1.bf16.xpose.msra.mxu0 0
  %1148 = vmatprep.subr.bf16.mxu0 0
  %1149 = vmatpush1.bf16.xpose.msra.mxu0 0
  %1150 = vmatprep.mubr.bf16.mxu0 0
  %1151 = vmatmul.mubr.bf16.gmra.mrb[0].mxu0 %v1113
  %v1152 = vpop.f32.mrb[0].mxu0
  %v1153 = vadd.f32 %v53, %v1152
  %v1154 = vpop.f32.mrb[0].mxu0
  %v1155 = vpop.f32.mrb[0].mxu0
  %v1156 = vpop.f32.mrb[0].mxu0
  %1157 = vdwg.mxu0
  %v1158 = vsel %vm370, %v1153, -inf
  %1159 = vmax.xlane.f32.xlu0 %v1158
  %v1160 = vpop.xlane.xlu0 %1159
  %v1161 = vsub.f32 %v1153, %v1160
  %v1162 = vmul.f32 %v1161, 1.442695
  %v1163 = vpow.pop %v1162
  %v1164 = vsel %vm370, %v1163, 0.0
  %1165 = vadd.xlane.f32.xlu0 %v1164
  %v1166 = vpop.xlane.xlu0 %1165
  %v1167 = vrcp.pop %v1166
  %v1168 = vmul.f32 %v1163, %v1167
  %v1169 = vpack.c.bf16 %v1168, %v1168
  %1170 = vrot.lane.b32.xlu0 %v1059, 120
  %v1171 = vpop.permute.xlu0 %1170
  %v1173 = vsel %vm370, %v1169, 0
  %v1176 = vsel %vm432, %v1171, 0
  %1178 = vmatprep.subr.bf16.mxu0 0
  %1179 = vmatpush1.bf16.msra.mxu0 %v1176
  %1180 = vmatprep.subr.bf16.mxu0 0
  %1181 = vmatpush1.bf16.msra.mxu0 0
  %1182 = vmatprep.subr.bf16.mxu0 0
  %1183 = vmatpush1.bf16.msra.mxu0 0
  %1184 = vmatprep.subr.bf16.mxu0 0
  %1185 = vmatpush1.bf16.msra.mxu0 0
  %1186 = vmatprep.subr.bf16.mxu0 0
  %1187 = vmatpush1.bf16.msra.mxu0 0
  %1188 = vmatprep.subr.bf16.mxu0 0
  %1189 = vmatpush1.bf16.msra.mxu0 0
  %1190 = vmatprep.subr.bf16.mxu0 0
  %1191 = vmatpush1.bf16.msra.mxu0 0
  %1192 = vmatprep.subr.bf16.mxu0 0
  %1193 = vmatpush1.bf16.msra.mxu0 0
  %1194 = vmatprep.subr.bf16.mxu0 0
  %1195 = vmatpush1.bf16.msra.mxu0 0
  %1196 = vmatprep.subr.bf16.mxu0 0
  %1197 = vmatpush1.bf16.msra.mxu0 0
  %1198 = vmatprep.subr.bf16.mxu0 0
  %1199 = vmatpush1.bf16.msra.mxu0 0
  %1200 = vmatprep.subr.bf16.mxu0 0
  %1201 = vmatpush1.bf16.msra.mxu0 0
  %1202 = vmatprep.subr.bf16.mxu0 0
  %1203 = vmatpush1.bf16.msra.mxu0 0
  %1204 = vmatprep.subr.bf16.mxu0 0
  %1205 = vmatpush1.bf16.msra.mxu0 0
  %1206 = vmatprep.subr.bf16.mxu0 0
  %1207 = vmatpush1.bf16.msra.mxu0 0
  %1208 = vmatprep.subr.bf16.mxu0 0
  %1209 = vmatpush1.bf16.msra.mxu0 0
  %1210 = vmatprep.mubr.bf16.mxu0 0
  %1211 = vmatmul.mubr.bf16.gmra.mrb[0].mxu0 %v1173
  %v1212 = vpop.f32.mrb[0].mxu0
  %v1213 = vadd.f32 0.0, %v1212
  %v1214 = vpop.f32.mrb[0].mxu0
  %v1215 = vpop.f32.mrb[0].mxu0
  %v1216 = vpop.f32.mrb[0].mxu0
  %1217 = vdwg.mxu0
  %v1218 = vpack.c.bf16 %v1213, %v1213
  %v1220 = vsel %vm370, %v1218, 0
  %1222 = vmatprep.subr.bf16.mxu0 0
  %1223 = vmatpush1.bf16.msra.mxu0 %v595
  %1224 = vmatprep.subr.bf16.mxu0 0
  %1225 = vmatpush1.bf16.msra.mxu0 0
  %1226 = vmatprep.subr.bf16.mxu0 0
  %1227 = vmatpush1.bf16.msra.mxu0 0
  %1228 = vmatprep.subr.bf16.mxu0 0
  %1229 = vmatpush1.bf16.msra.mxu0 0
  %1230 = vmatprep.subr.bf16.mxu0 0
  %1231 = vmatpush1.bf16.msra.mxu0 0
  %1232 = vmatprep.subr.bf16.mxu0 0
  %1233 = vmatpush1.bf16.msra.mxu0 0
  %1234 = vmatprep.subr.bf16.mxu0 0
  %1235 = vmatpush1.bf16.msra.mxu0 0
  %1236 = vmatprep.subr.bf16.mxu0 0
  %1237 = vmatpush1.bf16.msra.mxu0 0
  %1238 = vmatprep.subr.bf16.mxu0 0
  %1239 = vmatpush1.bf16.msra.mxu0 0
  %1240 = vmatprep.subr.bf16.mxu0 0
  %1241 = vmatpush1.bf16.msra.mxu0 0
  %1242 = vmatprep.subr.bf16.mxu0 0
  %1243 = vmatpush1.bf16.msra.mxu0 0
  %1244 = vmatprep.subr.bf16.mxu0 0
  %1245 = vmatpush1.bf16.msra.mxu0 0
  %1246 = vmatprep.subr.bf16.mxu0 0
  %1247 = vmatpush1.bf16.msra.mxu0 0
  %1248 = vmatprep.subr.bf16.mxu0 0
  %1249 = vmatpush1.bf16.msra.mxu0 0
  %1250 = vmatprep.subr.bf16.mxu0 0
  %1251 = vmatpush1.bf16.msra.mxu0 0
  %1252 = vmatprep.subr.bf16.mxu0 0
  %1253 = vmatpush1.bf16.msra.mxu0 0
  %1254 = vmatprep.mubr.bf16.mxu0 0
  %1255 = vmatmul.mubr.bf16.gmra.mrb[0].mxu0 %v1220
  %v1256 = vpop.f32.mrb[0].mxu0
  %v1257 = vadd.f32 0.0, %v1256
  %v1258 = vpop.f32.mrb[0].mxu0
  %v1259 = vpop.f32.mrb[0].mxu0
  %v1260 = vpop.f32.mrb[0].mxu0
  %1261 = vdwg.mxu0
  %v1263 = vsel %vm370, %v1106, 0
  %1265 = vmatprep.subr.bf16.mxu0 0
  %1266 = vmatpush1.bf16.msra.mxu0 %v641
  %1267 = vmatprep.subr.bf16.mxu0 0
  %1268 = vmatpush1.bf16.msra.mxu0 0
  %1269 = vmatprep.subr.bf16.mxu0 0
  %1270 = vmatpush1.bf16.msra.mxu0 0
  %1271 = vmatprep.subr.bf16.mxu0 0
  %1272 = vmatpush1.bf16.msra.mxu0 0
  %1273 = vmatprep.subr.bf16.mxu0 0
  %1274 = vmatpush1.bf16.msra.mxu0 0
  %1275 = vmatprep.subr.bf16.mxu0 0
  %1276 = vmatpush1.bf16.msra.mxu0 0
  %1277 = vmatprep.subr.bf16.mxu0 0
  %1278 = vmatpush1.bf16.msra.mxu0 0
  %1279 = vmatprep.subr.bf16.mxu0 0
  %1280 = vmatpush1.bf16.msra.mxu0 0
  %1281 = vmatprep.subr.bf16.mxu0 0
  %1282 = vmatpush1.bf16.msra.mxu0 0
  %1283 = vmatprep.subr.bf16.mxu0 0
  %1284 = vmatpush1.bf16.msra.mxu0 0
  %1285 = vmatprep.subr.bf16.mxu0 0
  %1286 = vmatpush1.bf16.msra.mxu0 0
  %1287 = vmatprep.subr.bf16.mxu0 0
  %1288 = vmatpush1.bf16.msra.mxu0 0
  %1289 = vmatprep.subr.bf16.mxu0 0
  %1290 = vmatpush1.bf16.msra.mxu0 0
  %1291 = vmatprep.subr.bf16.mxu0 0
  %1292 = vmatpush1.bf16.msra.mxu0 0
  %1293 = vmatprep.subr.bf16.mxu0 0
  %1294 = vmatpush1.bf16.msra.mxu0 0
  %1295 = vmatprep.subr.bf16.mxu0 0
  %1296 = vmatpush1.bf16.msra.mxu0 0
  %1297 = vmatprep.mubr.bf16.mxu0 0
  %1298 = vmatmul.mubr.bf16.gmra.mrb[0].mxu0 %v1263
  %v1299 = vpop.f32.mrb[0].mxu0
  %v1300 = vadd.f32 %v1257, %v1299
  %v1301 = vpop.f32.mrb[0].mxu0
  %v1302 = vpop.f32.mrb[0].mxu0
  %v1303 = vpop.f32.mrb[0].mxu0
  %1304 = vdwg.mxu0
  %1305 = vrot.lane.b32.xlu0 %v999, 112
  %v1306 = vpop.permute.xlu0 %1305
  %1307 = vrot.lane.b32.xlu0 %v1000, 112
  %v1308 = vpop.permute.xlu0 %1307
  %v1310 = vsel %vm370, %v1306, 0
  %v1313 = vsel %vm370, %v1308, 0
  %1315 = vmatprep.subr.bf16.mxu0 0
  %1316 = vmatpush1.bf16.xpose.msra.mxu0 %v1313
  %1317 = vmatprep.subr.bf16.mxu0 0
  %1318 = vmatpush1.bf16.xpose.msra.mxu0 0
  %1319 = vmatprep.subr.bf16.mxu0 0
  %1320 = vmatpush1.bf16.xpose.msra.mxu0 0
  %1321 = vmatprep.subr.bf16.mxu0 0
  %1322 = vmatpush1.bf16.xpose.msra.mxu0 0
  %1323 = vmatprep.subr.bf16.mxu0 0
  %1324 = vmatpush1.bf16.xpose.msra.mxu0 0
  %1325 = vmatprep.subr.bf16.mxu0 0
  %1326 = vmatpush1.bf16.xpose.msra.mxu0 0
  %1327 = vmatprep.subr.bf16.mxu0 0
  %1328 = vmatpush1.bf16.xpose.msra.mxu0 0
  %1329 = vmatprep.subr.bf16.mxu0 0
  %1330 = vmatpush1.bf16.xpose.msra.mxu0 0
  %1331 = vmatprep.subr.bf16.mxu0 0
  %1332 = vmatpush1.bf16.xpose.msra.mxu0 0
  %1333 = vmatprep.subr.bf16.mxu0 0
  %1334 = vmatpush1.bf16.xpose.msra.mxu0 0
  %1335 = vmatprep.subr.bf16.mxu0 0
  %1336 = vmatpush1.bf16.xpose.msra.mxu0 0
  %1337 = vmatprep.subr.bf16.mxu0 0
  %1338 = vmatpush1.bf16.xpose.msra.mxu0 0
  %1339 = vmatprep.subr.bf16.mxu0 0
  %1340 = vmatpush1.bf16.xpose.msra.mxu0 0
  %1341 = vmatprep.subr.bf16.mxu0 0
  %1342 = vmatpush1.bf16.xpose.msra.mxu0 0
  %1343 = vmatprep.subr.bf16.mxu0 0
  %1344 = vmatpush1.bf16.xpose.msra.mxu0 0
  %1345 = vmatprep.subr.bf16.mxu0 0
  %1346 = vmatpush1.bf16.xpose.msra.mxu0 0
  %1347 = vmatprep.mubr.bf16.mxu0 0
  %1348 = vmatmul.mubr.bf16.gmra.mrb[0].mxu0 %v1310
  %v1349 = vpop.f32.mrb[0].mxu0
  %v1350 = vadd.f32 %v53, %v1349
  %v1351 = vpop.f32.mrb[0].mxu0
  %v1352 = vpop.f32.mrb[0].mxu0
  %v1353 = vpop.f32.mrb[0].mxu0
  %1354 = vdwg.mxu0
  %v1355 = vsel %vm370, %v1350, -inf
  %1356 = vmax.xlane.f32.xlu0 %v1355
  %v1357 = vpop.xlane.xlu0 %1356
  %v1358 = vsub.f32 %v1350, %v1357
  %v1359 = vmul.f32 %v1358, 1.442695
  %v1360 = vpow.pop %v1359
  %v1361 = vsel %vm370, %v1360, 0.0
  %1362 = vadd.xlane.f32.xlu0 %v1361
  %v1363 = vpop.xlane.xlu0 %1362
  %v1364 = vrcp.pop %v1363
  %v1365 = vmul.f32 %v1360, %v1364
  %v1366 = vpack.c.bf16 %v1365, %v1365
  %1367 = vrot.lane.b32.xlu0 %v1059, 112
  %v1368 = vpop.permute.xlu0 %1367
  %v1370 = vsel %vm370, %v1366, 0
  %v1373 = vsel %vm432, %v1368, 0
  %1375 = vmatprep.subr.bf16.mxu0 0
  %1376 = vmatpush1.bf16.msra.mxu0 %v1373
  %1377 = vmatprep.subr.bf16.mxu0 0
  %1378 = vmatpush1.bf16.msra.mxu0 0
  %1379 = vmatprep.subr.bf16.mxu0 0
  %1380 = vmatpush1.bf16.msra.mxu0 0
  %1381 = vmatprep.subr.bf16.mxu0 0
  %1382 = vmatpush1.bf16.msra.mxu0 0
  %1383 = vmatprep.subr.bf16.mxu0 0
  %1384 = vmatpush1.bf16.msra.mxu0 0
  %1385 = vmatprep.subr.bf16.mxu0 0
  %1386 = vmatpush1.bf16.msra.mxu0 0
  %1387 = vmatprep.subr.bf16.mxu0 0
  %1388 = vmatpush1.bf16.msra.mxu0 0
  %1389 = vmatprep.subr.bf16.mxu0 0
  %1390 = vmatpush1.bf16.msra.mxu0 0
  %1391 = vmatprep.subr.bf16.mxu0 0
  %1392 = vmatpush1.bf16.msra.mxu0 0
  %1393 = vmatprep.subr.bf16.mxu0 0
  %1394 = vmatpush1.bf16.msra.mxu0 0
  %1395 = vmatprep.subr.bf16.mxu0 0
  %1396 = vmatpush1.bf16.msra.mxu0 0
  %1397 = vmatprep.subr.bf16.mxu0 0
  %1398 = vmatpush1.bf16.msra.mxu0 0
  %1399 = vmatprep.subr.bf16.mxu0 0
  %1400 = vmatpush1.bf16.msra.mxu0 0
  %1401 = vmatprep.subr.bf16.mxu0 0
  %1402 = vmatpush1.bf16.msra.mxu0 0
  %1403 = vmatprep.subr.bf16.mxu0 0
  %1404 = vmatpush1.bf16.msra.mxu0 0
  %1405 = vmatprep.subr.bf16.mxu0 0
  %1406 = vmatpush1.bf16.msra.mxu0 0
  %1407 = vmatprep.mubr.bf16.mxu0 0
  %1408 = vmatmul.mubr.bf16.gmra.mrb[0].mxu0 %v1370
  %v1409 = vpop.f32.mrb[0].mxu0
  %v1410 = vadd.f32 0.0, %v1409
  %v1411 = vpop.f32.mrb[0].mxu0
  %v1412 = vpop.f32.mrb[0].mxu0
  %v1413 = vpop.f32.mrb[0].mxu0
  %1414 = vdwg.mxu0
  %v1415 = vpack.c.bf16 %v1410, %v1410
  %v1417 = vsel %vm370, %v1415, 0
  %1419 = vmatprep.subr.bf16.mxu0 0
  %1420 = vmatpush1.bf16.msra.mxu0 %v798
  %1421 = vmatprep.subr.bf16.mxu0 0
  %1422 = vmatpush1.bf16.msra.mxu0 0
  %1423 = vmatprep.subr.bf16.mxu0 0
  %1424 = vmatpush1.bf16.msra.mxu0 0
  %1425 = vmatprep.subr.bf16.mxu0 0
  %1426 = vmatpush1.bf16.msra.mxu0 0
  %1427 = vmatprep.subr.bf16.mxu0 0
  %1428 = vmatpush1.bf16.msra.mxu0 0
  %1429 = vmatprep.subr.bf16.mxu0 0
  %1430 = vmatpush1.bf16.msra.mxu0 0
  %1431 = vmatprep.subr.bf16.mxu0 0
  %1432 = vmatpush1.bf16.msra.mxu0 0
  %1433 = vmatprep.subr.bf16.mxu0 0
  %1434 = vmatpush1.bf16.msra.mxu0 0
  %1435 = vmatprep.subr.bf16.mxu0 0
  %1436 = vmatpush1.bf16.msra.mxu0 0
  %1437 = vmatprep.subr.bf16.mxu0 0
  %1438 = vmatpush1.bf16.msra.mxu0 0
  %1439 = vmatprep.subr.bf16.mxu0 0
  %1440 = vmatpush1.bf16.msra.mxu0 0
  %1441 = vmatprep.subr.bf16.mxu0 0
  %1442 = vmatpush1.bf16.msra.mxu0 0
  %1443 = vmatprep.subr.bf16.mxu0 0
  %1444 = vmatpush1.bf16.msra.mxu0 0
  %1445 = vmatprep.subr.bf16.mxu0 0
  %1446 = vmatpush1.bf16.msra.mxu0 0
  %1447 = vmatprep.subr.bf16.mxu0 0
  %1448 = vmatpush1.bf16.msra.mxu0 0
  %1449 = vmatprep.subr.bf16.mxu0 0
  %1450 = vmatpush1.bf16.msra.mxu0 0
  %1451 = vmatprep.mubr.bf16.mxu0 0
  %1452 = vmatmul.mubr.bf16.gmra.mrb[0].mxu0 %v1417
  %v1453 = vpop.f32.mrb[0].mxu0
  %v1454 = vadd.f32 0.0, %v1453
  %v1455 = vpop.f32.mrb[0].mxu0
  %v1456 = vpop.f32.mrb[0].mxu0
  %v1457 = vpop.f32.mrb[0].mxu0
  %1458 = vdwg.mxu0
  %v1459 = vadd.f32 %v1300, %v1454
  %1460 = vrot.lane.b32.xlu0 %v999, 104
  %v1461 = vpop.permute.xlu0 %1460
  %1462 = vrot.lane.b32.xlu0 %v1000, 104
  %v1463 = vpop.permute.xlu0 %1462
  %v1465 = vsel %vm370, %v1461, 0
  %v1468 = vsel %vm370, %v1463, 0
  %1470 = vmatprep.subr.bf16.mxu0 0
  %1471 = vmatpush1.bf16.xpose.msra.mxu0 %v1468
  %1472 = vmatprep.subr.bf16.mxu0 0
  %1473 = vmatpush1.bf16.xpose.msra.mxu0 0
  %1474 = vmatprep.subr.bf16.mxu0 0
  %1475 = vmatpush1.bf16.xpose.msra.mxu0 0
  %1476 = vmatprep.subr.bf16.mxu0 0
  %1477 = vmatpush1.bf16.xpose.msra.mxu0 0
  %1478 = vmatprep.subr.bf16.mxu0 0
  %1479 = vmatpush1.bf16.xpose.msra.mxu0 0
  %1480 = vmatprep.subr.bf16.mxu0 0
  %1481 = vmatpush1.bf16.xpose.msra.mxu0 0
  %1482 = vmatprep.subr.bf16.mxu0 0
  %1483 = vmatpush1.bf16.xpose.msra.mxu0 0
  %1484 = vmatprep.subr.bf16.mxu0 0
  %1485 = vmatpush1.bf16.xpose.msra.mxu0 0
  %1486 = vmatprep.subr.bf16.mxu0 0
  %1487 = vmatpush1.bf16.xpose.msra.mxu0 0
  %1488 = vmatprep.subr.bf16.mxu0 0
  %1489 = vmatpush1.bf16.xpose.msra.mxu0 0
  %1490 = vmatprep.subr.bf16.mxu0 0
  %1491 = vmatpush1.bf16.xpose.msra.mxu0 0
  %1492 = vmatprep.subr.bf16.mxu0 0
  %1493 = vmatpush1.bf16.xpose.msra.mxu0 0
  %1494 = vmatprep.subr.bf16.mxu0 0
  %1495 = vmatpush1.bf16.xpose.msra.mxu0 0
  %1496 = vmatprep.subr.bf16.mxu0 0
  %1497 = vmatpush1.bf16.xpose.msra.mxu0 0
  %1498 = vmatprep.subr.bf16.mxu0 0
  %1499 = vmatpush1.bf16.xpose.msra.mxu0 0
  %1500 = vmatprep.subr.bf16.mxu0 0
  %1501 = vmatpush1.bf16.xpose.msra.mxu0 0
  %1502 = vmatprep.mubr.bf16.mxu0 0
  %1503 = vmatmul.mubr.bf16.gmra.mrb[0].mxu0 %v1465
  %v1504 = vpop.f32.mrb[0].mxu0
  %v1505 = vadd.f32 %v53, %v1504
  %v1506 = vpop.f32.mrb[0].mxu0
  %v1507 = vpop.f32.mrb[0].mxu0
  %v1508 = vpop.f32.mrb[0].mxu0
  %1509 = vdwg.mxu0
  %v1510 = vsel %vm370, %v1505, -inf
  %1511 = vmax.xlane.f32.xlu0 %v1510
  %v1512 = vpop.xlane.xlu0 %1511
  %v1513 = vsub.f32 %v1505, %v1512
  %v1514 = vmul.f32 %v1513, 1.442695
  %v1515 = vpow.pop %v1514
  %v1516 = vsel %vm370, %v1515, 0.0
  %1517 = vadd.xlane.f32.xlu0 %v1516
  %v1518 = vpop.xlane.xlu0 %1517
  %v1519 = vrcp.pop %v1518
  %v1520 = vmul.f32 %v1515, %v1519
  %v1521 = vpack.c.bf16 %v1520, %v1520
  %1522 = vrot.lane.b32.xlu0 %v1059, 104
  %v1523 = vpop.permute.xlu0 %1522
  %v1525 = vsel %vm370, %v1521, 0
  %v1528 = vsel %vm432, %v1523, 0
  %1530 = vmatprep.subr.bf16.mxu0 0
  %1531 = vmatpush1.bf16.msra.mxu0 %v1528
  %1532 = vmatprep.subr.bf16.mxu0 0
  %1533 = vmatpush1.bf16.msra.mxu0 0
  %1534 = vmatprep.subr.bf16.mxu0 0
  %1535 = vmatpush1.bf16.msra.mxu0 0
  %1536 = vmatprep.subr.bf16.mxu0 0
  %1537 = vmatpush1.bf16.msra.mxu0 0
  %1538 = vmatprep.subr.bf16.mxu0 0
  %1539 = vmatpush1.bf16.msra.mxu0 0
  %1540 = vmatprep.subr.bf16.mxu0 0
  %1541 = vmatpush1.bf16.msra.mxu0 0
  %1542 = vmatprep.subr.bf16.mxu0 0
  %1543 = vmatpush1.bf16.msra.mxu0 0
  %1544 = vmatprep.subr.bf16.mxu0 0
  %1545 = vmatpush1.bf16.msra.mxu0 0
  %1546 = vmatprep.subr.bf16.mxu0 0
  %1547 = vmatpush1.bf16.msra.mxu0 0
  %1548 = vmatprep.subr.bf16.mxu0 0
  %1549 = vmatpush1.bf16.msra.mxu0 0
  %1550 = vmatprep.subr.bf16.mxu0 0
  %1551 = vmatpush1.bf16.msra.mxu0 0
  %1552 = vmatprep.subr.bf16.mxu0 0
  %1553 = vmatpush1.bf16.msra.mxu0 0
  %1554 = vmatprep.subr.bf16.mxu0 0
  %1555 = vmatpush1.bf16.msra.mxu0 0
  %1556 = vmatprep.subr.bf16.mxu0 0
  %1557 = vmatpush1.bf16.msra.mxu0 0
  %1558 = vmatprep.subr.bf16.mxu0 0
  %1559 = vmatpush1.bf16.msra.mxu0 0
  %1560 = vmatprep.subr.bf16.mxu0 0
  %1561 = vmatpush1.bf16.msra.mxu0 0
  %1562 = vmatprep.mubr.bf16.mxu0 0
  %1563 = vmatmul.mubr.bf16.gmra.mrb[0].mxu0 %v1525
  %v1564 = vpop.f32.mrb[0].mxu0
  %v1565 = vadd.f32 0.0, %v1564
  %v1566 = vpop.f32.mrb[0].mxu0
  %v1567 = vpop.f32.mrb[0].mxu0
  %v1568 = vpop.f32.mrb[0].mxu0
  %1569 = vdwg.mxu0
  %v1570 = vpack.c.bf16 %v1565, %v1565
  %v1572 = vsel %vm370, %v1570, 0
  %1574 = vmatprep.subr.bf16.mxu0 0
  %1575 = vmatpush1.bf16.msra.mxu0 %v956
  %1576 = vmatprep.subr.bf16.mxu0 0
  %1577 = vmatpush1.bf16.msra.mxu0 0
  %1578 = vmatprep.subr.bf16.mxu0 0
  %1579 = vmatpush1.bf16.msra.mxu0 0
  %1580 = vmatprep.subr.bf16.mxu0 0
  %1581 = vmatpush1.bf16.msra.mxu0 0
  %1582 = vmatprep.subr.bf16.mxu0 0
  %1583 = vmatpush1.bf16.msra.mxu0 0
  %1584 = vmatprep.subr.bf16.mxu0 0
  %1585 = vmatpush1.bf16.msra.mxu0 0
  %1586 = vmatprep.subr.bf16.mxu0 0
  %1587 = vmatpush1.bf16.msra.mxu0 0
  %1588 = vmatprep.subr.bf16.mxu0 0
  %1589 = vmatpush1.bf16.msra.mxu0 0
  %1590 = vmatprep.subr.bf16.mxu0 0
  %1591 = vmatpush1.bf16.msra.mxu0 0
  %1592 = vmatprep.subr.bf16.mxu0 0
  %1593 = vmatpush1.bf16.msra.mxu0 0
  %1594 = vmatprep.subr.bf16.mxu0 0
  %1595 = vmatpush1.bf16.msra.mxu0 0
  %1596 = vmatprep.subr.bf16.mxu0 0
  %1597 = vmatpush1.bf16.msra.mxu0 0
  %1598 = vmatprep.subr.bf16.mxu0 0
  %1599 = vmatpush1.bf16.msra.mxu0 0
  %1600 = vmatprep.subr.bf16.mxu0 0
  %1601 = vmatpush1.bf16.msra.mxu0 0
  %1602 = vmatprep.subr.bf16.mxu0 0
  %1603 = vmatpush1.bf16.msra.mxu0 0
  %1604 = vmatprep.subr.bf16.mxu0 0
  %1605 = vmatpush1.bf16.msra.mxu0 0
  %1606 = vmatprep.mubr.bf16.mxu0 0
  %1607 = vmatmul.mubr.bf16.gmra.mrb[0].mxu0 %v1572
  %v1608 = vpop.f32.mrb[0].mxu0
  %v1609 = vadd.f32 0.0, %v1608
  %v1610 = vpop.f32.mrb[0].mxu0
  %v1611 = vpop.f32.mrb[0].mxu0
  %v1612 = vpop.f32.mrb[0].mxu0
  %1613 = vdwg.mxu0
  %v1614 = vadd.f32 %v1459, %v1609
  %1615 = vst.msk [vmem:[#allocation4] sm:$0xff] %vm244, %v998
  %1616 = vst.msk [vmem:[#allocation4 + $0x8] sm:$0xff] %vm244, %v1614
  %v1617 = vld [vmem:[#allocation4] sm:$0xff]
  %v1618 = vld [vmem:[#allocation4 + $0x8] sm:$0xff]
  %v1619 = vadd.f32 %v242, %v1617
  %v1620 = vadd.f32 %v243, %v1618
  %v1621 = vld [vmem:[%s7] sm:$0x1]
  %v1623 = vlaneseq
  %v1624 = vshrl.u32 %v1623, 7
  %v1625 = vsub.s32 0, %v1624
  %v1626 = vrot.slane %v1621, %v1625
  %v1628 = vadd.f32 %v1619, %v1626
  %v1629 = vadd.f32 %v1620, %v1626
  %v1630 = vld [vmem:[%s8] sm:$0x1]
  %v1631 = vld [vmem:[%s9] sm:$0x1]
  %v1632 = vsel %vm244, %v1628, 0.0
  %1633 = vadd.xlane.f32.xlu0 %v1632
  %v1634 = vpop.xlane.xlu0 %1633
  %v1635 = vsel %vm244, %v1629, 0.0
  %1636 = vadd.xlane.f32.xlu0 %v1635
  %v1637 = vpop.xlane.xlu0 %1636
  %v1638 = vmul.f32 %v1634, %v251
  %v1639 = vmul.f32 %v1637, %v251
  %v1640 = vsub.f32 %v1628, %v1638
  %v1641 = vsub.f32 %v1629, %v1639
  %v1642 = vmul.f32 %v1640, %v1640
  %v1643 = vmul.f32 %v1641, %v1641
  %v1644 = vsel %vm244, %v1642, 0.0
  %1645 = vadd.xlane.f32.xlu0 %v1644
  %v1646 = vpop.xlane.xlu0 %1645
  %v1647 = vsel %vm244, %v1643, 0.0
  %1648 = vadd.xlane.f32.xlu0 %v1647
  %v1649 = vpop.xlane.xlu0 %1648
  %v1650 = vmul.f32 %v1646, %v251
  %v1651 = vmul.f32 %v1649, %v251
  %v1652 = vadd.f32 %v1650, 1e-05
  %v1653 = vadd.f32 %v1651, 1e-05
  %v1654 = vrsqrt.pop %v1652
  %v1655 = vmul.f32 %v1652, %v1654
  %vm1656 = vcmp.eq.f32.partialorder %v1652, inf
  %v1657 = vsel %vm1656, %v1652, %v1655
  %vm1658 = vcmp.eq.f32.partialorder %v1652, 0.0
  %v1659 = vand.u32 %v1652, 2147483648
  %v1660 = vsel %vm1658, %v1659, %v1657
  %v1661 = vrsqrt.pop %v1653
  %v1662 = vmul.f32 %v1653, %v1661
  %vm1663 = vcmp.eq.f32.partialorder %v1653, inf
  %v1664 = vsel %vm1663, %v1653, %v1662
  %vm1665 = vcmp.eq.f32.partialorder %v1653, 0.0
  %v1666 = vand.u32 %v1653, 2147483648
  %v1667 = vsel %vm1665, %v1666, %v1664
  %v1668 = vrcp.pop %v1660
  %v1669 = vmul.f32 %v1640, %v1668
  %v1670 = vrcp.pop %v1667
  %v1671 = vmul.f32 %v1641, %v1670
  %v1673 = vlaneseq
  %v1674 = vshrl.u32 %v1673, 7
  %v1675 = vsub.s32 0, %v1674
  %v1676 = vrot.slane %v1630, %v1675
  %v1678 = vmul.f32 %v1669, %v1676
  %v1679 = vmul.f32 %v1671, %v1676
  %v1681 = vlaneseq
  %v1682 = vshrl.u32 %v1681, 7
  %v1683 = vsub.s32 0, %v1682
  %v1684 = vrot.slane %v1631, %v1683
  %v1686 = vadd.f32 %v1678, %v1684
  %v1687 = vadd.f32 %v1679, %v1684
  %v1688 = vpack.c.bf16 %v1687, %v1686
  %v1689 = vld [vmem:[%s10] sm:$0xf]
  %v1690 = vld [vmem:[%s10 + $0x4] sm:$0xf]
  %v1691 = vld [vmem:[%s10 + $0x8] sm:$0xf]
  %v1692 = vld [vmem:[%s10 + $0xc] sm:$0xf]
  %v1693 = vld [vmem:[%s11] sm:$0x1]
  %v1695 = vlaneseq
  %v1696 = vshrl.u32 %v1695, 7
  %v1697 = vsub.s32 0, %v1696
  %v1698 = vrot.slane %v1693, %v1697
  %v1704 = vunpack.c.l.b16 %v1689
  %v1705 = vunpack.c.l.b16 %v1690
  %v1706 = vunpack.c.l.b16 %v1691
  %v1707 = vunpack.c.l.b16 %v1692
  %v1708 = vpack.c.b16 %v1705, %v1704
  %v1709 = vpack.c.b16 %v1707, %v1706
  %v1713 = vsel %vm244, %v1688, 0
  %1715 = vmatprep.subr.bf16.mxu0 0
  %1716 = vmatpush1.bf16.msra.mxu0 %v1708
  %1717 = vmatprep.subr.bf16.mxu0 0
  %1718 = vmatpush1.bf16.msra.mxu0 %v1709
  %1719 = vmatprep.subr.bf16.mxu0 0
  %1720 = vmatpush1.bf16.msra.mxu0 0
  %1721 = vmatprep.subr.bf16.mxu0 0
  %1722 = vmatpush1.bf16.msra.mxu0 0
  %1723 = vmatprep.subr.bf16.mxu0 0
  %1724 = vmatpush1.bf16.msra.mxu0 0
  %1725 = vmatprep.subr.bf16.mxu0 0
  %1726 = vmatpush1.bf16.msra.mxu0 0
  %1727 = vmatprep.subr.bf16.mxu0 0
  %1728 = vmatpush1.bf16.msra.mxu0 0
  %1729 = vmatprep.subr.bf16.mxu0 0
  %1730 = vmatpush1.bf16.msra.mxu0 0
  %1731 = vmatprep.subr.bf16.mxu0 0
  %1732 = vmatpush1.bf16.msra.mxu0 0
  %1733 = vmatprep.subr.bf16.mxu0 0
  %1734 = vmatpush1.bf16.msra.mxu0 0
  %1735 = vmatprep.subr.bf16.mxu0 0
  %1736 = vmatpush1.bf16.msra.mxu0 0
  %1737 = vmatprep.subr.bf16.mxu0 0
  %1738 = vmatpush1.bf16.msra.mxu0 0
  %1739 = vmatprep.subr.bf16.mxu0 0
  %1740 = vmatpush1.bf16.msra.mxu0 0
  %1741 = vmatprep.subr.bf16.mxu0 0
  %1742 = vmatpush1.bf16.msra.mxu0 0
  %1743 = vmatprep.subr.bf16.mxu0 0
  %1744 = vmatpush1.bf16.msra.mxu0 0
  %1745 = vmatprep.subr.bf16.mxu0 0
  %1746 = vmatpush1.bf16.msra.mxu0 0
  %1747 = vmatprep.mubr.bf16.mxu0 0
  %1748 = vmatmul.mubr.bf16.gmra.mrb[0].mxu0 %v1713
  %v1749 = vpop.f32.mrb[0].mxu0
  %v1750 = vadd.f32 %v1698, %v1749
  %v1751 = vpop.f32.mrb[0].mxu0
  %v1752 = vpop.f32.mrb[0].mxu0
  %v1753 = vadd.f32 %v1698, %v1752
  %v1754 = vpop.f32.mrb[0].mxu0
  %1755 = vdwg.mxu0
  %v1756 = vmul.f32 %v1750, 0.5
  %v1757 = vmul.f32 %v1753, 0.5
  %v1758 = vmul.f32 %v1750, 0.70710677
  %v1759 = vmul.f32 %v1753, 0.70710677
  %vm1760 = vcmp.ge.f32.partialorder %v1758, 0.0
  %vm1761 = vcmp.ge.f32.partialorder %v1759, 0.0
  %v1762 = vsel %vm1760, 1.0, -1.0
  %v1763 = vsel %vm1761, 1.0, -1.0
  %v1764 = vand.u32 2147483647, %v1758
  %v1765 = vand.u32 2147483647, %v1759
  %v1766 = vmul.f32 %v1764, 0.3275911
  %v1767 = vmul.f32 %v1765, 0.3275911
  %v1768 = vadd.f32 %v1766, 1.0
  %v1769 = vadd.f32 %v1767, 1.0
  %v1770 = vrcp.pop %v1768
  %v1771 = vrcp.pop %v1769
  %v1772 = vmul.f32 %v1770, 1.0614054
  %v1773 = vmul.f32 %v1771, 1.0614054
  %v1774 = vadd.f32 %v1772, -1.4531521
  %v1775 = vadd.f32 %v1773, -1.4531521
  %v1776 = vmul.f32 %v1774, %v1770
  %v1777 = vmul.f32 %v1775, %v1771
  %v1778 = vadd.f32 %v1776, 1.4214138
  %v1779 = vadd.f32 %v1777, 1.4214138
  %v1780 = vmul.f32 %v1778, %v1770
  %v1781 = vmul.f32 %v1779, %v1771
  %v1782 = vadd.f32 %v1780, -0.28449672
  %v1783 = vadd.f32 %v1781, -0.28449672
  %v1784 = vmul.f32 %v1782, %v1770
  %v1785 = vmul.f32 %v1783, %v1771
  %v1786 = vadd.f32 %v1784, 0.2548296
  %v1787 = vadd.f32 %v1785, 0.2548296
  %v1788 = vmul.f32 %v1786, %v1770
  %v1789 = vmul.f32 %v1787, %v1771
  %v1790 = vsub.f32 0.0, %v1764
  %v1791 = vsub.f32 0.0, %v1765
  %v1792 = vmul.f32 %v1790, %v1764
  %v1793 = vmul.f32 %v1791, %v1765
  %v1794 = vmul.f32 %v1792, 1.442695
  %v1795 = vpow.pop %v1794
  %v1796 = vmul.f32 %v1793, 1.442695
  %v1797 = vpow.pop %v1796
  %v1798 = vmul.f32 %v1788, %v1795
  %v1799 = vmul.f32 %v1789, %v1797
  %v1800 = vsub.f32 1.0, %v1798
  %v1801 = vsub.f32 1.0, %v1799
  %v1802 = vmul.f32 %v1762, %v1800
  %v1803 = vmul.f32 %v1763, %v1801
  %v1804 = vadd.f32 %v1802, 1.0
  %v1805 = vadd.f32 %v1803, 1.0
  %v1806 = vmul.f32 %v1756, %v1804
  %v1807 = vmul.f32 %v1757, %v1805
  %v1808 = vpack.c.bf16 %v1807, %v1806
  %v1809 = vld [vmem:[%s12] sm:$0xf]
  %v1810 = vld [vmem:[%s12 + $0x4] sm:$0xf]
  %v1811 = vld [vmem:[%s12 + $0x8] sm:$0xf]
  %v1812 = vld [vmem:[%s12 + $0xc] sm:$0xf]
  %v1813 = vld [vmem:[%s12 + $0x10] sm:$0xf]
  %v1814 = vld [vmem:[%s12 + $0x14] sm:$0xf]
  %v1815 = vld [vmem:[%s12 + $0x18] sm:$0xf]
  %v1816 = vld [vmem:[%s12 + $0x1c] sm:$0xf]
  %v1817 = vld [vmem:[%s12 + $0x20] sm:$0xf]
  %v1818 = vld [vmem:[%s12 + $0x24] sm:$0xf]
  %v1819 = vld [vmem:[%s12 + $0x28] sm:$0xf]
  %v1820 = vld [vmem:[%s12 + $0x2c] sm:$0xf]
  %v1821 = vld [vmem:[%s12 + $0x30] sm:$0xf]
  %v1822 = vld [vmem:[%s12 + $0x34] sm:$0xf]
  %v1823 = vld [vmem:[%s12 + $0x38] sm:$0xf]
  %v1824 = vld [vmem:[%s12 + $0x3c] sm:$0xf]
  %v1825 = vld [vmem:[%s13] sm:$0x1]
  %v1827 = vlaneseq
  %v1828 = vshrl.u32 %v1827, 7
  %v1829 = vsub.s32 0, %v1828
  %v1830 = vrot.slane %v1825, %v1829
  %v1848 = vunpack.c.l.b16 %v1809
  %v1849 = vunpack.c.l.b16 %v1810
  %v1850 = vunpack.c.l.b16 %v1811
  %v1851 = vunpack.c.l.b16 %v1812
  %v1852 = vunpack.c.l.b16 %v1813
  %v1853 = vunpack.c.l.b16 %v1814
  %v1854 = vunpack.c.l.b16 %v1815
  %v1855 = vunpack.c.l.b16 %v1816
  %v1856 = vunpack.c.l.b16 %v1817
  %v1857 = vunpack.c.l.b16 %v1818
  %v1858 = vunpack.c.l.b16 %v1819
  %v1859 = vunpack.c.l.b16 %v1820
  %v1860 = vunpack.c.l.b16 %v1821
  %v1861 = vunpack.c.l.b16 %v1822
  %v1862 = vunpack.c.l.b16 %v1823
  %v1863 = vunpack.c.l.b16 %v1824
  %v1864 = vpack.c.b16 %v1849, %v1848
  %v1865 = vpack.c.b16 %v1851, %v1850
  %v1866 = vpack.c.b16 %v1853, %v1852
  %v1867 = vpack.c.b16 %v1855, %v1854
  %v1868 = vpack.c.b16 %v1857, %v1856
  %v1869 = vpack.c.b16 %v1859, %v1858
  %v1870 = vpack.c.b16 %v1861, %v1860
  %v1871 = vpack.c.b16 %v1863, %v1862
  %1880 = vmatprep.subr.bf16.mxu0 0
  %1881 = vmatpush1.bf16.msra.mxu0 %v1864
  %1882 = vmatprep.subr.bf16.mxu0 0
  %1883 = vmatpush1.bf16.msra.mxu0 %v1865
  %1884 = vmatprep.subr.bf16.mxu0 0
  %1885 = vmatpush1.bf16.msra.mxu0 %v1866
  %1886 = vmatprep.subr.bf16.mxu0 0
  %1887 = vmatpush1.bf16.msra.mxu0 %v1867
  %1888 = vmatprep.subr.bf16.mxu0 0
  %1889 = vmatpush1.bf16.msra.mxu0 %v1868
  %1890 = vmatprep.subr.bf16.mxu0 0
  %1891 = vmatpush1.bf16.msra.mxu0 %v1869
  %1892 = vmatprep.subr.bf16.mxu0 0
  %1893 = vmatpush1.bf16.msra.mxu0 %v1870
  %1894 = vmatprep.subr.bf16.mxu0 0
  %1895 = vmatpush1.bf16.msra.mxu0 %v1871
  %1896 = vmatprep.subr.bf16.mxu0 0
  %1897 = vmatpush1.bf16.msra.mxu0 0
  %1898 = vmatprep.subr.bf16.mxu0 0
  %1899 = vmatpush1.bf16.msra.mxu0 0
  %1900 = vmatprep.subr.bf16.mxu0 0
  %1901 = vmatpush1.bf16.msra.mxu0 0
  %1902 = vmatprep.subr.bf16.mxu0 0
  %1903 = vmatpush1.bf16.msra.mxu0 0
  %1904 = vmatprep.subr.bf16.mxu0 0
  %1905 = vmatpush1.bf16.msra.mxu0 0
  %1906 = vmatprep.subr.bf16.mxu0 0
  %1907 = vmatpush1.bf16.msra.mxu0 0
  %1908 = vmatprep.subr.bf16.mxu0 0
  %1909 = vmatpush1.bf16.msra.mxu0 0
  %1910 = vmatprep.subr.bf16.mxu0 0
  %1911 = vmatpush1.bf16.msra.mxu0 0
  %1912 = vmatprep.mubr.bf16.mxu0 0
  %1913 = vmatmul.mubr.bf16.gmra.mrb[0].mxu0 %v1808
  %v1914 = vpop.f32.mrb[0].mxu0
  %v1915 = vadd.f32 %v1830, %v1914
  %v1916 = vpop.f32.mrb[0].mxu0
  %v1917 = vpop.f32.mrb[0].mxu0
  %v1918 = vadd.f32 %v1830, %v1917
  %v1919 = vpop.f32.mrb[0].mxu0
  %1920 = vdwg.mxu0
  %v1921 = vmul.f32 %v1915, 0.5
  %v1922 = vmul.f32 %v1918, 0.5
  %v1923 = vmul.f32 %v1915, 0.70710677
  %v1924 = vmul.f32 %v1918, 0.70710677
  %vm1925 = vcmp.ge.f32.partialorder %v1923, 0.0
  %vm1926 = vcmp.ge.f32.partialorder %v1924, 0.0
  %v1927 = vsel %vm1925, 1.0, -1.0
  %v1928 = vsel %vm1926, 1.0, -1.0
  %v1929 = vand.u32 2147483647, %v1923
  %v1930 = vand.u32 2147483647, %v1924
  %v1931 = vmul.f32 %v1929, 0.3275911
  %v1932 = vmul.f32 %v1930, 0.3275911
  %v1933 = vadd.f32 %v1931, 1.0
  %v1934 = vadd.f32 %v1932, 1.0
  %v1935 = vrcp.pop %v1933
  %v1936 = vrcp.pop %v1934
  %v1937 = vmul.f32 %v1935, 1.0614054
  %v1938 = vmul.f32 %v1936, 1.0614054
  %v1939 = vadd.f32 %v1937, -1.4531521
  %v1940 = vadd.f32 %v1938, -1.4531521
  %v1941 = vmul.f32 %v1939, %v1935
  %v1942 = vmul.f32 %v1940, %v1936
  %v1943 = vadd.f32 %v1941, 1.4214138
  %v1944 = vadd.f32 %v1942, 1.4214138
  %v1945 = vmul.f32 %v1943, %v1935
  %v1946 = vmul.f32 %v1944, %v1936
  %v1947 = vadd.f32 %v1945, -0.28449672
  %v1948 = vadd.f32 %v1946, -0.28449672
  %v1949 = vmul.f32 %v1947, %v1935
  %v1950 = vmul.f32 %v1948, %v1936
  %v1951 = vadd.f32 %v1949, 0.2548296
  %v1952 = vadd.f32 %v1950, 0.2548296
  %v1953 = vmul.f32 %v1951, %v1935
  %v1954 = vmul.f32 %v1952, %v1936
  %v1955 = vsub.f32 0.0, %v1929
  %v1956 = vsub.f32 0.0, %v1930
  %v1957 = vmul.f32 %v1955, %v1929
  %v1958 = vmul.f32 %v1956, %v1930
  %v1959 = vmul.f32 %v1957, 1.442695
  %v1960 = vpow.pop %v1959
  %v1961 = vmul.f32 %v1958, 1.442695
  %v1962 = vpow.pop %v1961
  %v1963 = vmul.f32 %v1953, %v1960
  %v1964 = vmul.f32 %v1954, %v1962
  %v1965 = vsub.f32 1.0, %v1963
  %v1966 = vsub.f32 1.0, %v1964
  %v1967 = vmul.f32 %v1927, %v1965
  %v1968 = vmul.f32 %v1928, %v1966
  %v1969 = vadd.f32 %v1967, 1.0
  %v1970 = vadd.f32 %v1968, 1.0
  %v1971 = vmul.f32 %v1921, %v1969
  %v1972 = vmul.f32 %v1922, %v1970
  %v1973 = vadd.f32 %v1628, %v1971
  %v1974 = vadd.f32 %v1629, %v1972
  %1975 = vst.msk [vmem:[%s14] sm:$0xff] %vm244, %v1973
  %1976 = vst.msk [vmem:[%s14 + $0x8] sm:$0xff] %vm244, %v1974
  // Predicated region
  $region62: #{_lambda_.4} parent=0 // pred_check
    _
  $region63: #{_lambda_.4} parent=0 // pred_check_branch
    %1978 = sbr.rel (0) target = $region65
  $region64: #{_lambda_.4} parent=0 // pred_region
    _
  $region65: #{_lambda_.4} parent=0 // pred_fallthru
    _
  // Predicated region
  $region66: #{_lambda_.4} parent=0 // pred_check
    _
  $region67: #{_lambda_.4} parent=0 // pred_check_branch
    %1980 = sbr.rel (0) target = $region69
  $region68: #{_lambda_.4} parent=0 // pred_region
    _
  $region69: #{_lambda_.4} parent=0 // pred_fallthru
    _

</llo_original>
